<compile_context>
chip_gen: v7x
topology: tpu7x:2x2x1
jax: 0.10.0
libtpu: 0.0.40
codegen_flags: <defaults>
</compile_context>

<pallas_src>
import functools

import jax
import jax.numpy as jnp
from jax.experimental import pallas as pl
from jax.experimental.pallas import tpu as pltpu

LANES = 128                         # vreg lane width; last dim of every tile
SUB = 8                             # f32 vreg sublane count; accumulator rows
CHUNK_ROWS = 512                    # in-kernel row slice (keeps temporaries ~256 KiB)
MAX_BLOCK_ROWS = 8192               # 8192*128*4B = 4 MiB per f32 input tile per step
VMEM_LIMIT_BYTES = 40 * 1024 * 1024  # above scoped defaults, below v7x 64 MiB physical
SMALL_TOTAL = 1 << 18               # below ~1 MiB f32 -> plain jnp is faster


def _cdiv(a, b):
    return -(-a // b)


def _round_up(x, m):
    return ((x + m - 1) // m) * m


def _num_tensorcore_shards():
    """2 on chips that expose two TensorCores per device (v4/v5p/v7x), else 1."""
    try:
        kind = jax.devices()[0].device_kind.lower().replace(" ", "")
    except Exception:
        return 1
    if any(s in kind for s in ("v5lite", "v5e", "v6", "v2", "v3")):
        return 1
    if any(s in kind for s in ("v4", "v5p", "v7", "7x", "v5")):
        # TODO(synk): on v7x, verify with a profile that the leading "parallel"
        # axis really lands on both TensorCores (else switch to CORE_PARALLEL).
        return 2
    return 1


def _dice_partial_kernel(p_ref, t_ref, acc_ref, *,
                         steps, block_rows, valid_rows, needs_mask):
    """Accumulate lane-dense partial sums into a resident output block.

    p_ref, t_ref : (block_rows, 128) VMEM tiles in the inputs' native dtype.
    acc_ref      : (2, 8, 128) f32 output block, resident across the inner
                   ("arbitrary") grid axis:
                     acc_ref[0] += partial sums of p*t
                     acc_ref[1] += partial sums of p+t
    """
    c = pl.program_id(0)   # shard ("parallel") axis
    i = pl.program_id(1)   # step ("arbitrary") axis

    @pl.when(i == 0)
    def _():
        acc_ref[...] = jnp.zeros_like(acc_ref)

    if needs_mask:
        # Rows at/after `valid_rows` are out-of-bounds tail garbage; zero them
        # before accumulating. Iota is hoisted out of the chunk loop.
        row_ids = jax.lax.broadcasted_iota(jnp.int32, (CHUNK_ROWS, LANES), 0)
        rows_left = valid_rows - (c * steps + i) * block_rows  # traced scalar

    n_chunks = block_rows // CHUNK_ROWS

    def chunk_body(k, carry):
        off = pl.multiple_of(k * CHUNK_ROWS, CHUNK_ROWS)
        p = p_ref[pl.ds(off, CHUNK_ROWS), :].astype(jnp.float32)
        t = t_ref[pl.ds(off, CHUNK_ROWS), :].astype(jnp.float32)
        if needs_mask:
            m = row_ids < (rows_left - off)
            p = jnp.where(m, p, 0.0)
            t = jnp.where(m, t, 0.0)
        # Collapse (CHUNK_ROWS, 128) -> (8, 128) with vreg-wise VPU adds only;
        # the single expensive cross-lane reduce happens outside the kernel.
        acc_ref[0] += jnp.sum((p * t).reshape(-1, SUB, LANES), axis=0)
        acc_ref[1] += jnp.sum((p + t).reshape(-1, SUB, LANES), axis=0)
        return carry

    jax.lax.fori_loop(0, n_chunks, chunk_body, 0, unroll=True)


def dice_coefficient(preds, targets, smooth=1.0):
    """Compute the Dice coefficient between preds and targets (matching shapes)."""
    assert preds.shape == targets.shape, (preds.shape, targets.shape)

    total = 1
    for d in preds.shape:
        total *= int(d)
    smooth = jnp.float32(smooth)

    # Small-input fallback: kernel launch / grid overhead dominates for tiny masks.
    if total < SMALL_TOTAL:
        p32 = preds.astype(jnp.float32)
        t32 = targets.astype(jnp.float32)
        intersection = jnp.sum(p32 * t32)
        denom = jnp.sum(p32) + jnp.sum(t32) + smooth
        return (2.0 * intersection + smooth) / denom

    p = preds.reshape(-1)
    t = targets.reshape(-1)

    # Only pad (<128 elements) when the flat length isn't lane aligned; for
    # 128-aligned inputs the reshape below is free and NO input copy is made.
    # Block-multiple padding is handled by the in-kernel row mask instead.
    rem = total % LANES
    if rem:
        p = jnp.pad(p, (0, LANES - rem))
        t = jnp.pad(t, (0, LANES - rem))
    rows = _cdiv(total, LANES)

    p2 = p.reshape(rows, LANES)
    t2 = t.reshape(rows, LANES)

    num_shards = _num_tensorcore_shards()
    rows_per_shard = _cdiv(rows, num_shards)
    block_rows = min(MAX_BLOCK_ROWS, _round_up(rows_per_shard, CHUNK_ROWS))
    steps = _cdiv(rows_per_shard, block_rows)
    last_block = _cdiv(rows, block_rows) - 1          # last in-bounds block index
    needs_mask = (num_shards * steps * block_rows) != rows

    # Clamp the block index so a fully out-of-bounds block never generates a DMA
    # past the array; the kernel's row mask zeroes its contribution regardless.
    in_map = lambda c, i: (jnp.minimum(c * steps + i, last_block), 0)
    out_map = lambda c, i: (c, 0, 0)

    kernel = functools.partial(
        _dice_partial_kernel,
        steps=steps, block_rows=block_rows, valid_rows=rows, needs_mask=needs_mask)

    acc = pl.pallas_call(
        kernel,
        out_shape=jax.ShapeDtypeStruct((num_shards * 2, SUB, LANES), jnp.float32),
        grid_spec=pltpu.PrefetchScalarGridSpec(
            num_scalar_prefetch=0,
            grid=(num_shards, steps),
            in_specs=[
                pl.BlockSpec((block_rows, LANES), in_map),
                pl.BlockSpec((block_rows, LANES), in_map),
            ],
            out_specs=pl.BlockSpec((2, SUB, LANES), out_map),
        ),
        compiler_params=pltpu.CompilerParams(
            dimension_semantics=("parallel", "arbitrary"),
            vmem_limit_bytes=VMEM_LIMIT_BYTES,
        ),
    )(p2, t2)

    # Tiny (shards*2, 8, 128) final reduction + smooth/divide outside the kernel.
    parts = acc.reshape(num_shards, 2, SUB, LANES)
    intersection = jnp.sum(parts[:, 0])
    denom = jnp.sum(parts[:, 1]) + smooth
    return (2.0 * intersection + smooth) / denom


if __name__ == "__main__":
    def reference(preds, targets, smooth=1.0):
        p = preds.astype(jnp.float32)
        t = targets.astype(jnp.float32)
        inter = jnp.sum(p * t)
        return (2.0 * inter + smooth) / (jnp.sum(p) + jnp.sum(t) + smooth)

    key = jax.random.PRNGKey(0)

    # 1) Canonical small mask shape (2, 4, 16, 16): small-input fast path.
    k1, k2, key = jax.random.split(key, 3)
    preds_s = jax.nn.sigmoid(jax.random.normal(k1, (2, 4, 16, 16), dtype=jnp.float32))
    targs_s = (jax.random.uniform(k2, (2, 4, 16, 16)) > 0.5).astype(jnp.float32)
    d_s = jax.block_until_ready(dice_coefficient(preds_s, targs_s, smooth=1.0))
    r_s = reference(preds_s, targs_s)
    assert jnp.allclose(d_s, r_s, rtol=1e-5, atol=1e-6), (d_s, r_s)

    # 2) Lane-aligned f32 masks: exercises the Pallas kernel (no tail masking).
    k1, k2, key = jax.random.split(key, 3)
    preds_a = jax.nn.sigmoid(jax.random.normal(k1, (2, 4, 256, 256), dtype=jnp.float32))
    targs_a = (jax.random.uniform(k2, (2, 4, 256, 256)) > 0.5).astype(jnp.float32)
    d_a = jax.block_until_ready(dice_coefficient(preds_a, targs_a, smooth=1.0))
    r_a = reference(preds_a, targs_a)
    assert jnp.allclose(d_a, r_a, rtol=1e-4, atol=1e-6), (d_a, r_a)

    # 3) Non-128-aligned bf16 masks: exercises narrow-dtype DMA + in-kernel tail mask.
    k1, k2, key = jax.random.split(key, 3)
    preds_u = jax.nn.sigmoid(jax.random.normal(k1, (2, 4, 183, 187))).astype(jnp.bfloat16)
    targs_u = (jax.random.uniform(k2, (2, 4, 183, 187)) > 0.5).astype(jnp.bfloat16)
    d_u = jax.block_until_ready(dice_coefficient(preds_u, targs_u, smooth=1.0))
    r_u = reference(preds_u, targs_u)
    assert jnp.allclose(d_u, r_u, rtol=1e-4, atol=1e-6), (d_u, r_u)

    print("KERNEL_OK")
</pallas_src>

<mosaic_0001>
module attributes {stable_mosaic.version = 11 : i64} {
  func.func @_dice_partial_kernel(%arg0: i32, %arg1: i32, %arg2: memref<4096x128xf32, #tpu.memory_space<vmem>>, %arg3: memref<4096x128xf32, #tpu.memory_space<vmem>>, %arg4: memref<2x8x128xf32, #tpu.memory_space<vmem>>) attributes {dimension_semantics = [#tpu.dimension_semantics<parallel>, #tpu.dimension_semantics<arbitrary>], iteration_bounds = array<i64: 1, 1>, scalar_prefetch = 0 : i64, scratch_operands = 0 : i64, tpu.core_type = #tpu.core_type<tc>, window_params = [{transform_indices = @transform_0, window_bounds = array<i64: 4096, 128>}, {transform_indices = @transform_1, window_bounds = array<i64: 4096, 128>}, {transform_indices = @transform_2, window_bounds = array<i64: 2, 8, 128>}]} {
    %c0_i32 = arith.constant 0 : i32
    %0 = arith.cmpi eq, %arg1, %c0_i32 : i32
    %1 = arith.extui %0 : i1 to i32
    %c0_i32_0 = arith.constant 0 : i32
    %2 = arith.cmpi ne, %1, %c0_i32_0 : i32
    scf.if %2 {
      %cst_134 = arith.constant 0.000000e+00 : f32
      %195 = vector.broadcast %cst_134 : f32 to vector<2x8x128xf32>
      %c0_135 = arith.constant 0 : index
      %c0_136 = arith.constant 0 : index
      %c0_137 = arith.constant 0 : index
      %196 = vector.load %arg4[%c0_135, %c0_136, %c0_137] : memref<2x8x128xf32, #tpu.memory_space<vmem>>, vector<2x8x128xf32>
      tpu.vector_store %arg4[%c0_135, %c0_136, %c0_137], %195 {strides = array<i32>} : memref<2x8x128xf32, #tpu.memory_space<vmem>>, vector<2x8x128xf32>,
    } else {
    }
    %c0_i32_1 = arith.constant 0 : i32
    %c512_i32 = arith.constant 512 : i32
    %3 = arith.muli %c0_i32_1, %c512_i32 : i32
    %4 = tpu.assume_multiple %3, 512 : i32
    %5 = arith.index_cast %4 : i32 to index
    %c0 = arith.constant 0 : index
    %6 = vector.load %arg2[%5, %c0] : memref<4096x128xf32, #tpu.memory_space<vmem>>, vector<512x128xf32>
    %7 = arith.index_cast %4 : i32 to index
    %c0_2 = arith.constant 0 : index
    %8 = vector.load %arg3[%7, %c0_2] : memref<4096x128xf32, #tpu.memory_space<vmem>>, vector<512x128xf32>
    %c0_3 = arith.constant 0 : index
    %c0_4 = arith.constant 0 : index
    %c0_5 = arith.constant 0 : index
    %9 = vector.load %arg4[%c0_3, %c0_4, %c0_5] : memref<2x8x128xf32, #tpu.memory_space<vmem>>, vector<1x8x128xf32>
    %10 = vector.shape_cast %9 : vector<1x8x128xf32> to vector<8x128xf32>
    %11 = arith.mulf %6, %8 : vector<512x128xf32>
    %12 = vector.shape_cast %11 : vector<512x128xf32> to vector<64x8x128xf32>
    %cst = arith.constant dense<0.000000e+00> : vector<8x128xf32>
    %13 = vector.multi_reduction <add>, %12, %cst [0] : vector<64x8x128xf32> to vector<8x128xf32>
    %14 = arith.addf %10, %13 : vector<8x128xf32>
    %c0_6 = arith.constant 0 : index
    %c0_7 = arith.constant 0 : index
    %c0_8 = arith.constant 0 : index
    %15 = vector.load %arg4[%c0_6, %c0_7, %c0_8] : memref<2x8x128xf32, #tpu.memory_space<vmem>>, vector<1x8x128xf32>
    %16 = vector.shape_cast %15 : vector<1x8x128xf32> to vector<8x128xf32>
    %17 = vector.shape_cast %14 : vector<8x128xf32> to vector<1x8x128xf32>
    tpu.vector_store %arg4[%c0_6, %c0_7, %c0_8], %17 {strides = array<i32>} : memref<2x8x128xf32, #tpu.memory_space<vmem>>, vector<1x8x128xf32>,
    %c1 = arith.constant 1 : index
    %c0_9 = arith.constant 0 : index
    %c0_10 = arith.constant 0 : index
    %18 = vector.load %arg4[%c1, %c0_9, %c0_10] : memref<2x8x128xf32, #tpu.memory_space<vmem>>, vector<1x8x128xf32>
    %19 = vector.shape_cast %18 : vector<1x8x128xf32> to vector<8x128xf32>
    %20 = arith.addf %6, %8 : vector<512x128xf32>
    %21 = vector.shape_cast %20 : vector<512x128xf32> to vector<64x8x128xf32>
    %cst_11 = arith.constant dense<0.000000e+00> : vector<8x128xf32>
    %22 = vector.multi_reduction <add>, %21, %cst_11 [0] : vector<64x8x128xf32> to vector<8x128xf32>
    %23 = arith.addf %19, %22 : vector<8x128xf32>
    %c1_12 = arith.constant 1 : index
    %c0_13 = arith.constant 0 : index
    %c0_14 = arith.constant 0 : index
    %24 = vector.load %arg4[%c1_12, %c0_13, %c0_14] : memref<2x8x128xf32, #tpu.memory_space<vmem>>, vector<1x8x128xf32>
    %25 = vector.shape_cast %24 : vector<1x8x128xf32> to vector<8x128xf32>
    %26 = vector.shape_cast %23 : vector<8x128xf32> to vector<1x8x128xf32>
    tpu.vector_store %arg4[%c1_12, %c0_13, %c0_14], %26 {strides = array<i32>} : memref<2x8x128xf32, #tpu.memory_space<vmem>>, vector<1x8x128xf32>,
    %c1_i32 = arith.constant 1 : i32
    %c512_i32_15 = arith.constant 512 : i32
    %27 = arith.muli %c1_i32, %c512_i32_15 : i32
    %28 = tpu.assume_multiple %27, 512 : i32
    %29 = arith.index_cast %28 : i32 to index
    %c0_16 = arith.constant 0 : index
    %30 = vector.load %arg2[%29, %c0_16] : memref<4096x128xf32, #tpu.memory_space<vmem>>, vector<512x128xf32>
    %31 = arith.index_cast %28 : i32 to index
    %c0_17 = arith.constant 0 : index
    %32 = vector.load %arg3[%31, %c0_17] : memref<4096x128xf32, #tpu.memory_space<vmem>>, vector<512x128xf32>
    %c0_18 = arith.constant 0 : index
    %c0_19 = arith.constant 0 : index
    %c0_20 = arith.constant 0 : index
    %33 = vector.load %arg4[%c0_18, %c0_19, %c0_20] : memref<2x8x128xf32, #tpu.memory_space<vmem>>, vector<1x8x128xf32>
    %34 = vector.shape_cast %33 : vector<1x8x128xf32> to vector<8x128xf32>
    %35 = arith.mulf %30, %32 : vector<512x128xf32>
    %36 = vector.shape_cast %35 : vector<512x128xf32> to vector<64x8x128xf32>
    %cst_21 = arith.constant dense<0.000000e+00> : vector<8x128xf32>
    %37 = vector.multi_reduction <add>, %36, %cst_21 [0] : vector<64x8x128xf32> to vector<8x128xf32>
    %38 = arith.addf %34, %37 : vector<8x128xf32>
    %c0_22 = arith.constant 0 : index
    %c0_23 = arith.constant 0 : index
    %c0_24 = arith.constant 0 : index
    %39 = vector.load %arg4[%c0_22, %c0_23, %c0_24] : memref<2x8x128xf32, #tpu.memory_space<vmem>>, vector<1x8x128xf32>
    %40 = vector.shape_cast %39 : vector<1x8x128xf32> to vector<8x128xf32>
    %41 = vector.shape_cast %38 : vector<8x128xf32> to vector<1x8x128xf32>
    tpu.vector_store %arg4[%c0_22, %c0_23, %c0_24], %41 {strides = array<i32>} : memref<2x8x128xf32, #tpu.memory_space<vmem>>, vector<1x8x128xf32>,
    %c1_25 = arith.constant 1 : index
    %c0_26 = arith.constant 0 : index
    %c0_27 = arith.constant 0 : index
    %42 = vector.load %arg4[%c1_25, %c0_26, %c0_27] : memref<2x8x128xf32, #tpu.memory_space<vmem>>, vector<1x8x128xf32>
    %43 = vector.shape_cast %42 : vector<1x8x128xf32> to vector<8x128xf32>
    %44 = arith.addf %30, %32 : vector<512x128xf32>
    %45 = vector.shape_cast %44 : vector<512x128xf32> to vector<64x8x128xf32>
    %cst_28 = arith.constant dense<0.000000e+00> : vector<8x128xf32>
    %46 = vector.multi_reduction <add>, %45, %cst_28 [0] : vector<64x8x128xf32> to vector<8x128xf32>
    %47 = arith.addf %43, %46 : vector<8x128xf32>
    %c1_29 = arith.constant 1 : index
    %c0_30 = arith.constant 0 : index
    %c0_31 = arith.constant 0 : index
    %48 = vector.load %arg4[%c1_29, %c0_30, %c0_31] : memref<2x8x128xf32, #tpu.memory_space<vmem>>, vector<1x8x128xf32>
    %49 = vector.shape_cast %48 : vector<1x8x128xf32> to vector<8x128xf32>
    %50 = vector.shape_cast %47 : vector<8x128xf32> to vector<1x8x128xf32>
    tpu.vector_store %arg4[%c1_29, %c0_30, %c0_31], %50 {strides = array<i32>} : memref<2x8x128xf32, #tpu.memory_space<vmem>>, vector<1x8x128xf32>,
    %c2_i32 = arith.constant 2 : i32
    %c512_i32_32 = arith.constant 512 : i32
    %51 = arith.muli %c2_i32, %c512_i32_32 : i32
    %52 = tpu.assume_multiple %51, 512 : i32
    %53 = arith.index_cast %52 : i32 to index
    %c0_33 = arith.constant 0 : index
    %54 = vector.load %arg2[%53, %c0_33] : memref<4096x128xf32, #tpu.memory_space<vmem>>, vector<512x128xf32>
    %55 = arith.index_cast %52 : i32 to index
    %c0_34 = arith.constant 0 : index
    %56 = vector.load %arg3[%55, %c0_34] : memref<4096x128xf32, #tpu.memory_space<vmem>>, vector<512x128xf32>
    %c0_35 = arith.constant 0 : index
    %c0_36 = arith.constant 0 : index
    %c0_37 = arith.constant 0 : index
    %57 = vector.load %arg4[%c0_35, %c0_36, %c0_37] : memref<2x8x128xf32, #tpu.memory_space<vmem>>, vector<1x8x128xf32>
    %58 = vector.shape_cast %57 : vector<1x8x128xf32> to vector<8x128xf32>
    %59 = arith.mulf %54, %56 : vector<512x128xf32>
    %60 = vector.shape_cast %59 : vector<512x128xf32> to vector<64x8x128xf32>
    %cst_38 = arith.constant dense<0.000000e+00> : vector<8x128xf32>
    %61 = vector.multi_reduction <add>, %60, %cst_38 [0] : vector<64x8x128xf32> to vector<8x128xf32>
    %62 = arith.addf %58, %61 : vector<8x128xf32>
    %c0_39 = arith.constant 0 : index
    %c0_40 = arith.constant 0 : index
    %c0_41 = arith.constant 0 : index
    %63 = vector.load %arg4[%c0_39, %c0_40, %c0_41] : memref<2x8x128xf32, #tpu.memory_space<vmem>>, vector<1x8x128xf32>
    %64 = vector.shape_cast %63 : vector<1x8x128xf32> to vector<8x128xf32>
    %65 = vector.shape_cast %62 : vector<8x128xf32> to vector<1x8x128xf32>
    tpu.vector_store %arg4[%c0_39, %c0_40, %c0_41], %65 {strides = array<i32>} : memref<2x8x128xf32, #tpu.memory_space<vmem>>, vector<1x8x128xf32>,
    %c1_42 = arith.constant 1 : index
    %c0_43 = arith.constant 0 : index
    %c0_44 = arith.constant 0 : index
    %66 = vector.load %arg4[%c1_42, %c0_43, %c0_44] : memref<2x8x128xf32, #tpu.memory_space<vmem>>, vector<1x8x128xf32>
    %67 = vector.shape_cast %66 : vector<1x8x128xf32> to vector<8x128xf32>
    %68 = arith.addf %54, %56 : vector<512x128xf32>
    %69 = vector.shape_cast %68 : vector<512x128xf32> to vector<64x8x128xf32>
    %cst_45 = arith.constant dense<0.000000e+00> : vector<8x128xf32>
    %70 = vector.multi_reduction <add>, %69, %cst_45 [0] : vector<64x8x128xf32> to vector<8x128xf32>
    %71 = arith.addf %67, %70 : vector<8x128xf32>
    %c1_46 = arith.constant 1 : index
    %c0_47 = arith.constant 0 : index
    %c0_48 = arith.constant 0 : index
    %72 = vector.load %arg4[%c1_46, %c0_47, %c0_48] : memref<2x8x128xf32, #tpu.memory_space<vmem>>, vector<1x8x128xf32>
    %73 = vector.shape_cast %72 : vector<1x8x128xf32> to vector<8x128xf32>
    %74 = vector.shape_cast %71 : vector<8x128xf32> to vector<1x8x128xf32>
    tpu.vector_store %arg4[%c1_46, %c0_47, %c0_48], %74 {strides = array<i32>} : memref<2x8x128xf32, #tpu.memory_space<vmem>>, vector<1x8x128xf32>,
    %c3_i32 = arith.constant 3 : i32
    %c512_i32_49 = arith.constant 512 : i32
    %75 = arith.muli %c3_i32, %c512_i32_49 : i32
    %76 = tpu.assume_multiple %75, 512 : i32
    %77 = arith.index_cast %76 : i32 to index
    %c0_50 = arith.constant 0 : index
    %78 = vector.load %arg2[%77, %c0_50] : memref<4096x128xf32, #tpu.memory_space<vmem>>, vector<512x128xf32>
    %79 = arith.index_cast %76 : i32 to index
    %c0_51 = arith.constant 0 : index
    %80 = vector.load %arg3[%79, %c0_51] : memref<4096x128xf32, #tpu.memory_space<vmem>>, vector<512x128xf32>
    %c0_52 = arith.constant 0 : index
    %c0_53 = arith.constant 0 : index
    %c0_54 = arith.constant 0 : index
    %81 = vector.load %arg4[%c0_52, %c0_53, %c0_54] : memref<2x8x128xf32, #tpu.memory_space<vmem>>, vector<1x8x128xf32>
    %82 = vector.shape_cast %81 : vector<1x8x128xf32> to vector<8x128xf32>
    %83 = arith.mulf %78, %80 : vector<512x128xf32>
    %84 = vector.shape_cast %83 : vector<512x128xf32> to vector<64x8x128xf32>
    %cst_55 = arith.constant dense<0.000000e+00> : vector<8x128xf32>
    %85 = vector.multi_reduction <add>, %84, %cst_55 [0] : vector<64x8x128xf32> to vector<8x128xf32>
    %86 = arith.addf %82, %85 : vector<8x128xf32>
    %c0_56 = arith.constant 0 : index
    %c0_57 = arith.constant 0 : index
    %c0_58 = arith.constant 0 : index
    %87 = vector.load %arg4[%c0_56, %c0_57, %c0_58] : memref<2x8x128xf32, #tpu.memory_space<vmem>>, vector<1x8x128xf32>
    %88 = vector.shape_cast %87 : vector<1x8x128xf32> to vector<8x128xf32>
    %89 = vector.shape_cast %86 : vector<8x128xf32> to vector<1x8x128xf32>
    tpu.vector_store %arg4[%c0_56, %c0_57, %c0_58], %89 {strides = array<i32>} : memref<2x8x128xf32, #tpu.memory_space<vmem>>, vector<1x8x128xf32>,
    %c1_59 = arith.constant 1 : index
    %c0_60 = arith.constant 0 : index
    %c0_61 = arith.constant 0 : index
    %90 = vector.load %arg4[%c1_59, %c0_60, %c0_61] : memref<2x8x128xf32, #tpu.memory_space<vmem>>, vector<1x8x128xf32>
    %91 = vector.shape_cast %90 : vector<1x8x128xf32> to vector<8x128xf32>
    %92 = arith.addf %78, %80 : vector<512x128xf32>
    %93 = vector.shape_cast %92 : vector<512x128xf32> to vector<64x8x128xf32>
    %cst_62 = arith.constant dense<0.000000e+00> : vector<8x128xf32>
    %94 = vector.multi_reduction <add>, %93, %cst_62 [0] : vector<64x8x128xf32> to vector<8x128xf32>
    %95 = arith.addf %91, %94 : vector<8x128xf32>
    %c1_63 = arith.constant 1 : index
    %c0_64 = arith.constant 0 : index
    %c0_65 = arith.constant 0 : index
    %96 = vector.load %arg4[%c1_63, %c0_64, %c0_65] : memref<2x8x128xf32, #tpu.memory_space<vmem>>, vector<1x8x128xf32>
    %97 = vector.shape_cast %96 : vector<1x8x128xf32> to vector<8x128xf32>
    %98 = vector.shape_cast %95 : vector<8x128xf32> to vector<1x8x128xf32>
    tpu.vector_store %arg4[%c1_63, %c0_64, %c0_65], %98 {strides = array<i32>} : memref<2x8x128xf32, #tpu.memory_space<vmem>>, vector<1x8x128xf32>,
    %c4_i32 = arith.constant 4 : i32
    %c512_i32_66 = arith.constant 512 : i32
    %99 = arith.muli %c4_i32, %c512_i32_66 : i32
    %100 = tpu.assume_multiple %99, 512 : i32
    %101 = arith.index_cast %100 : i32 to index
    %c0_67 = arith.constant 0 : index
    %102 = vector.load %arg2[%101, %c0_67] : memref<4096x128xf32, #tpu.memory_space<vmem>>, vector<512x128xf32>
    %103 = arith.index_cast %100 : i32 to index
    %c0_68 = arith.constant 0 : index
    %104 = vector.load %arg3[%103, %c0_68] : memref<4096x128xf32, #tpu.memory_space<vmem>>, vector<512x128xf32>
    %c0_69 = arith.constant 0 : index
    %c0_70 = arith.constant 0 : index
    %c0_71 = arith.constant 0 : index
    %105 = vector.load %arg4[%c0_69, %c0_70, %c0_71] : memref<2x8x128xf32, #tpu.memory_space<vmem>>, vector<1x8x128xf32>
    %106 = vector.shape_cast %105 : vector<1x8x128xf32> to vector<8x128xf32>
    %107 = arith.mulf %102, %104 : vector<512x128xf32>
    %108 = vector.shape_cast %107 : vector<512x128xf32> to vector<64x8x128xf32>
    %cst_72 = arith.constant dense<0.000000e+00> : vector<8x128xf32>
    %109 = vector.multi_reduction <add>, %108, %cst_72 [0] : vector<64x8x128xf32> to vector<8x128xf32>
    %110 = arith.addf %106, %109 : vector<8x128xf32>
    %c0_73 = arith.constant 0 : index
    %c0_74 = arith.constant 0 : index
    %c0_75 = arith.constant 0 : index
    %111 = vector.load %arg4[%c0_73, %c0_74, %c0_75] : memref<2x8x128xf32, #tpu.memory_space<vmem>>, vector<1x8x128xf32>
    %112 = vector.shape_cast %111 : vector<1x8x128xf32> to vector<8x128xf32>
    %113 = vector.shape_cast %110 : vector<8x128xf32> to vector<1x8x128xf32>
    tpu.vector_store %arg4[%c0_73, %c0_74, %c0_75], %113 {strides = array<i32>} : memref<2x8x128xf32, #tpu.memory_space<vmem>>, vector<1x8x128xf32>,
    %c1_76 = arith.constant 1 : index
    %c0_77 = arith.constant 0 : index
    %c0_78 = arith.constant 0 : index
    %114 = vector.load %arg4[%c1_76, %c0_77, %c0_78] : memref<2x8x128xf32, #tpu.memory_space<vmem>>, vector<1x8x128xf32>
    %115 = vector.shape_cast %114 : vector<1x8x128xf32> to vector<8x128xf32>
    %116 = arith.addf %102, %104 : vector<512x128xf32>
    %117 = vector.shape_cast %116 : vector<512x128xf32> to vector<64x8x128xf32>
    %cst_79 = arith.constant dense<0.000000e+00> : vector<8x128xf32>
    %118 = vector.multi_reduction <add>, %117, %cst_79 [0] : vector<64x8x128xf32> to vector<8x128xf32>
    %119 = arith.addf %115, %118 : vector<8x128xf32>
    %c1_80 = arith.constant 1 : index
    %c0_81 = arith.constant 0 : index
    %c0_82 = arith.constant 0 : index
    %120 = vector.load %arg4[%c1_80, %c0_81, %c0_82] : memref<2x8x128xf32, #tpu.memory_space<vmem>>, vector<1x8x128xf32>
    %121 = vector.shape_cast %120 : vector<1x8x128xf32> to vector<8x128xf32>
    %122 = vector.shape_cast %119 : vector<8x128xf32> to vector<1x8x128xf32>
    tpu.vector_store %arg4[%c1_80, %c0_81, %c0_82], %122 {strides = array<i32>} : memref<2x8x128xf32, #tpu.memory_space<vmem>>, vector<1x8x128xf32>,
    %c5_i32 = arith.constant 5 : i32
    %c512_i32_83 = arith.constant 512 : i32
    %123 = arith.muli %c5_i32, %c512_i32_83 : i32
    %124 = tpu.assume_multiple %123, 512 : i32
    %125 = arith.index_cast %124 : i32 to index
    %c0_84 = arith.constant 0 : index
    %126 = vector.load %arg2[%125, %c0_84] : memref<4096x128xf32, #tpu.memory_space<vmem>>, vector<512x128xf32>
    %127 = arith.index_cast %124 : i32 to index
    %c0_85 = arith.constant 0 : index
    %128 = vector.load %arg3[%127, %c0_85] : memref<4096x128xf32, #tpu.memory_space<vmem>>, vector<512x128xf32>
    %c0_86 = arith.constant 0 : index
    %c0_87 = arith.constant 0 : index
    %c0_88 = arith.constant 0 : index
    %129 = vector.load %arg4[%c0_86, %c0_87, %c0_88] : memref<2x8x128xf32, #tpu.memory_space<vmem>>, vector<1x8x128xf32>
    %130 = vector.shape_cast %129 : vector<1x8x128xf32> to vector<8x128xf32>
    %131 = arith.mulf %126, %128 : vector<512x128xf32>
    %132 = vector.shape_cast %131 : vector<512x128xf32> to vector<64x8x128xf32>
    %cst_89 = arith.constant dense<0.000000e+00> : vector<8x128xf32>
    %133 = vector.multi_reduction <add>, %132, %cst_89 [0] : vector<64x8x128xf32> to vector<8x128xf32>
    %134 = arith.addf %130, %133 : vector<8x128xf32>
    %c0_90 = arith.constant 0 : index
    %c0_91 = arith.constant 0 : index
    %c0_92 = arith.constant 0 : index
    %135 = vector.load %arg4[%c0_90, %c0_91, %c0_92] : memref<2x8x128xf32, #tpu.memory_space<vmem>>, vector<1x8x128xf32>
    %136 = vector.shape_cast %135 : vector<1x8x128xf32> to vector<8x128xf32>
    %137 = vector.shape_cast %134 : vector<8x128xf32> to vector<1x8x128xf32>
    tpu.vector_store %arg4[%c0_90, %c0_91, %c0_92], %137 {strides = array<i32>} : memref<2x8x128xf32, #tpu.memory_space<vmem>>, vector<1x8x128xf32>,
    %c1_93 = arith.constant 1 : index
    %c0_94 = arith.constant 0 : index
    %c0_95 = arith.constant 0 : index
    %138 = vector.load %arg4[%c1_93, %c0_94, %c0_95] : memref<2x8x128xf32, #tpu.memory_space<vmem>>, vector<1x8x128xf32>
    %139 = vector.shape_cast %138 : vector<1x8x128xf32> to vector<8x128xf32>
    %140 = arith.addf %126, %128 : vector<512x128xf32>
    %141 = vector.shape_cast %140 : vector<512x128xf32> to vector<64x8x128xf32>
    %cst_96 = arith.constant dense<0.000000e+00> : vector<8x128xf32>
    %142 = vector.multi_reduction <add>, %141, %cst_96 [0] : vector<64x8x128xf32> to vector<8x128xf32>
    %143 = arith.addf %139, %142 : vector<8x128xf32>
    %c1_97 = arith.constant 1 : index
    %c0_98 = arith.constant 0 : index
    %c0_99 = arith.constant 0 : index
    %144 = vector.load %arg4[%c1_97, %c0_98, %c0_99] : memref<2x8x128xf32, #tpu.memory_space<vmem>>, vector<1x8x128xf32>
    %145 = vector.shape_cast %144 : vector<1x8x128xf32> to vector<8x128xf32>
    %146 = vector.shape_cast %143 : vector<8x128xf32> to vector<1x8x128xf32>
    tpu.vector_store %arg4[%c1_97, %c0_98, %c0_99], %146 {strides = array<i32>} : memref<2x8x128xf32, #tpu.memory_space<vmem>>, vector<1x8x128xf32>,
    %c6_i32 = arith.constant 6 : i32
    %c512_i32_100 = arith.constant 512 : i32
    %147 = arith.muli %c6_i32, %c512_i32_100 : i32
    %148 = tpu.assume_multiple %147, 512 : i32
    %149 = arith.index_cast %148 : i32 to index
    %c0_101 = arith.constant 0 : index
    %150 = vector.load %arg2[%149, %c0_101] : memref<4096x128xf32, #tpu.memory_space<vmem>>, vector<512x128xf32>
    %151 = arith.index_cast %148 : i32 to index
    %c0_102 = arith.constant 0 : index
    %152 = vector.load %arg3[%151, %c0_102] : memref<4096x128xf32, #tpu.memory_space<vmem>>, vector<512x128xf32>
    %c0_103 = arith.constant 0 : index
    %c0_104 = arith.constant 0 : index
    %c0_105 = arith.constant 0 : index
    %153 = vector.load %arg4[%c0_103, %c0_104, %c0_105] : memref<2x8x128xf32, #tpu.memory_space<vmem>>, vector<1x8x128xf32>
    %154 = vector.shape_cast %153 : vector<1x8x128xf32> to vector<8x128xf32>
    %155 = arith.mulf %150, %152 : vector<512x128xf32>
    %156 = vector.shape_cast %155 : vector<512x128xf32> to vector<64x8x128xf32>
    %cst_106 = arith.constant dense<0.000000e+00> : vector<8x128xf32>
    %157 = vector.multi_reduction <add>, %156, %cst_106 [0] : vector<64x8x128xf32> to vector<8x128xf32>
    %158 = arith.addf %154, %157 : vector<8x128xf32>
    %c0_107 = arith.constant 0 : index
    %c0_108 = arith.constant 0 : index
    %c0_109 = arith.constant 0 : index
    %159 = vector.load %arg4[%c0_107, %c0_108, %c0_109] : memref<2x8x128xf32, #tpu.memory_space<vmem>>, vector<1x8x128xf32>
    %160 = vector.shape_cast %159 : vector<1x8x128xf32> to vector<8x128xf32>
    %161 = vector.shape_cast %158 : vector<8x128xf32> to vector<1x8x128xf32>
    tpu.vector_store %arg4[%c0_107, %c0_108, %c0_109], %161 {strides = array<i32>} : memref<2x8x128xf32, #tpu.memory_space<vmem>>, vector<1x8x128xf32>,
    %c1_110 = arith.constant 1 : index
    %c0_111 = arith.constant 0 : index
    %c0_112 = arith.constant 0 : index
    %162 = vector.load %arg4[%c1_110, %c0_111, %c0_112] : memref<2x8x128xf32, #tpu.memory_space<vmem>>, vector<1x8x128xf32>
    %163 = vector.shape_cast %162 : vector<1x8x128xf32> to vector<8x128xf32>
    %164 = arith.addf %150, %152 : vector<512x128xf32>
    %165 = vector.shape_cast %164 : vector<512x128xf32> to vector<64x8x128xf32>
    %cst_113 = arith.constant dense<0.000000e+00> : vector<8x128xf32>
    %166 = vector.multi_reduction <add>, %165, %cst_113 [0] : vector<64x8x128xf32> to vector<8x128xf32>
    %167 = arith.addf %163, %166 : vector<8x128xf32>
    %c1_114 = arith.constant 1 : index
    %c0_115 = arith.constant 0 : index
    %c0_116 = arith.constant 0 : index
    %168 = vector.load %arg4[%c1_114, %c0_115, %c0_116] : memref<2x8x128xf32, #tpu.memory_space<vmem>>, vector<1x8x128xf32>
    %169 = vector.shape_cast %168 : vector<1x8x128xf32> to vector<8x128xf32>
    %170 = vector.shape_cast %167 : vector<8x128xf32> to vector<1x8x128xf32>
    tpu.vector_store %arg4[%c1_114, %c0_115, %c0_116], %170 {strides = array<i32>} : memref<2x8x128xf32, #tpu.memory_space<vmem>>, vector<1x8x128xf32>,
    %c7_i32 = arith.constant 7 : i32
    %c512_i32_117 = arith.constant 512 : i32
    %171 = arith.muli %c7_i32, %c512_i32_117 : i32
    %172 = tpu.assume_multiple %171, 512 : i32
    %173 = arith.index_cast %172 : i32 to index
    %c0_118 = arith.constant 0 : index
    %174 = vector.load %arg2[%173, %c0_118] : memref<4096x128xf32, #tpu.memory_space<vmem>>, vector<512x128xf32>
    %175 = arith.index_cast %172 : i32 to index
    %c0_119 = arith.constant 0 : index
    %176 = vector.load %arg3[%175, %c0_119] : memref<4096x128xf32, #tpu.memory_space<vmem>>, vector<512x128xf32>
    %c0_120 = arith.constant 0 : index
    %c0_121 = arith.constant 0 : index
    %c0_122 = arith.constant 0 : index
    %177 = vector.load %arg4[%c0_120, %c0_121, %c0_122] : memref<2x8x128xf32, #tpu.memory_space<vmem>>, vector<1x8x128xf32>
    %178 = vector.shape_cast %177 : vector<1x8x128xf32> to vector<8x128xf32>
    %179 = arith.mulf %174, %176 : vector<512x128xf32>
    %180 = vector.shape_cast %179 : vector<512x128xf32> to vector<64x8x128xf32>
    %cst_123 = arith.constant dense<0.000000e+00> : vector<8x128xf32>
    %181 = vector.multi_reduction <add>, %180, %cst_123 [0] : vector<64x8x128xf32> to vector<8x128xf32>
    %182 = arith.addf %178, %181 : vector<8x128xf32>
    %c0_124 = arith.constant 0 : index
    %c0_125 = arith.constant 0 : index
    %c0_126 = arith.constant 0 : index
    %183 = vector.load %arg4[%c0_124, %c0_125, %c0_126] : memref<2x8x128xf32, #tpu.memory_space<vmem>>, vector<1x8x128xf32>
    %184 = vector.shape_cast %183 : vector<1x8x128xf32> to vector<8x128xf32>
    %185 = vector.shape_cast %182 : vector<8x128xf32> to vector<1x8x128xf32>
    tpu.vector_store %arg4[%c0_124, %c0_125, %c0_126], %185 {strides = array<i32>} : memref<2x8x128xf32, #tpu.memory_space<vmem>>, vector<1x8x128xf32>,
    %c1_127 = arith.constant 1 : index
    %c0_128 = arith.constant 0 : index
    %c0_129 = arith.constant 0 : index
    %186 = vector.load %arg4[%c1_127, %c0_128, %c0_129] : memref<2x8x128xf32, #tpu.memory_space<vmem>>, vector<1x8x128xf32>
    %187 = vector.shape_cast %186 : vector<1x8x128xf32> to vector<8x128xf32>
    %188 = arith.addf %174, %176 : vector<512x128xf32>
    %189 = vector.shape_cast %188 : vector<512x128xf32> to vector<64x8x128xf32>
    %cst_130 = arith.constant dense<0.000000e+00> : vector<8x128xf32>
    %190 = vector.multi_reduction <add>, %189, %cst_130 [0] : vector<64x8x128xf32> to vector<8x128xf32>
    %191 = arith.addf %187, %190 : vector<8x128xf32>
    %c1_131 = arith.constant 1 : index
    %c0_132 = arith.constant 0 : index
    %c0_133 = arith.constant 0 : index
    %192 = vector.load %arg4[%c1_131, %c0_132, %c0_133] : memref<2x8x128xf32, #tpu.memory_space<vmem>>, vector<1x8x128xf32>
    %193 = vector.shape_cast %192 : vector<1x8x128xf32> to vector<8x128xf32>
    %194 = vector.shape_cast %191 : vector<8x128xf32> to vector<1x8x128xf32>
    tpu.vector_store %arg4[%c1_131, %c0_132, %c0_133], %194 {strides = array<i32>} : memref<2x8x128xf32, #tpu.memory_space<vmem>>, vector<1x8x128xf32>,
    %c8_i32 = arith.constant 8 : i32
    return
  }
  func.func @transform_0(%arg0: i32, %arg1: i32) -> (i32, i32) {
    %c1_i32 = arith.constant 1 : i32
    %0 = arith.muli %arg0, %c1_i32 : i32
    %1 = arith.addi %0, %arg1 : i32
    %c0_i32 = arith.constant 0 : i32
    %2 = arith.minsi %1, %c0_i32 : i32
    %c0_i32_0 = arith.constant 0 : i32
    %c0_i32_1 = arith.constant 0 : i32
    return %2, %c0_i32_0 : i32, i32
  }
  func.func @transform_1(%arg0: i32, %arg1: i32) -> (i32, i32) {
    %c1_i32 = arith.constant 1 : i32
    %0 = arith.muli %arg0, %c1_i32 : i32
    %1 = arith.addi %0, %arg1 : i32
    %c0_i32 = arith.constant 0 : i32
    %2 = arith.minsi %1, %c0_i32 : i32
    %c0_i32_0 = arith.constant 0 : i32
    %c0_i32_1 = arith.constant 0 : i32
    return %2, %c0_i32_0 : i32, i32
  }
  func.func @transform_2(%arg0: i32, %arg1: i32) -> (i32, i32, i32) {
    %c0_i32 = arith.constant 0 : i32
    %c0_i32_0 = arith.constant 0 : i32
    %c0_i32_1 = arith.constant 0 : i32
    return %arg0, %c0_i32, %c0_i32_0 : i32, i32, i32
  }
}

</mosaic_0001>

<llo_original>
// kernel: tpu_custom_call.1
$region0: #{tpu_custom_call.1}
  #allocation0 [shape = 'u32[]', space=smem, size = 0x4, offset = 0x4, fixed_abs, tag = 'smem constant byte address 0x4 - core index']
  #allocation1 [shape = 'u32[144,128]{1,0:T(1,128)}', space=vmem, size = 0x12000, scoped, tag = 'internal scratch']
  %s0 = inlined_call_operand.hbm [shape: f32[4096,128], index: 0, kind: input, shape index: {}]
  %s1 = inlined_call_operand.hbm [shape: f32[4096,128], index: 1, kind: input, shape index: {}]
  %s2 = inlined_call_operand.hbm [shape: f32[2,8,128], index: 2, kind: output, shape index: {}]
  %s3 = sld [smem:[#allocation0]]
  $region30: #{tpu_custom_call.1} parent=0
    _
  %s5 = ssub.s32 1, %s3
  %s6 = scalar_select 0, %s5, %s3
  $region1: #{tpu_custom_call.1} parent=0
    #allocation2 [shape = 'u8[2097152]{0}', space=vmem, size = 0x200000, scoped, tag = 'input window, operand 0, single buffered']
    #allocation3 [shape = 's32[1]{0}', space=sflag, size = 0x4, scoped, tag = 'scoped memory for tpu_custom_call.1']
    #allocation4 [shape = 's32[1]{0}', space=sflag, size = 0x4, scoped, tag = 'scoped memory for tpu_custom_call.1']
    #allocation5 [shape = 'u8[2097152]{0}', space=vmem, size = 0x200000, scoped, tag = 'input window, operand 1, single buffered']
    #allocation6 [shape = 's32[1]{0}', space=sflag, size = 0x4, scoped, tag = 'scoped memory for tpu_custom_call.1']
    #allocation7 [shape = 'u8[8192]{0}', space=vmem, size = 0x2000, scoped, tag = 'output window, operand 0, single buffered']
    %7 = vsyncpa [#allocation3], 0
    %8 = vsyncpa [#allocation6], 0
    %9 = vsyncpa [#allocation4], 0
    // Predicated region
    $region2: #{tpu_custom_call.1} parent=1 // pred_check
      _
    $region3: #{tpu_custom_call.1} parent=1 // pred_check_branch
      %11 = sbr.rel (0) target = $region5
    $region4: #{tpu_custom_call.1} parent=1 // pred_region
      %s12 = sadd.s32 0, 0
      %p13 = scmp.lt.s32.totalorder %s12, 0
      %s14 = scalar_select %p13, %s12, 0
      %s15 = smul.u32 512, %s14
      %s17 = ssub.s32 65536, 65536
      %18 = vsyncadd [#allocation3], %s17
      %s19 = smul.addr %s15, 128
      %s20 = scalar_lea.hbm %s0, %s19
      %s21 = sshll.u32 [#allocation2], 4
      %s22 = int_to_ptr.vmem [resolvable:$true] %s21
      %27 = dma.hbm_to_vmem [thread:$0]  %s20, 65536, %s22, [#allocation3], 128, 128, 8
    $region5: #{tpu_custom_call.1} parent=1 // pred_fallthru
      _
    // Predicated region
    $region6: #{tpu_custom_call.1} parent=1 // pred_check
      _
    $region7: #{tpu_custom_call.1} parent=1 // pred_check_branch
      %29 = sbr.rel (0) target = $region9
    $region8: #{tpu_custom_call.1} parent=1 // pred_region
      %s30 = sadd.s32 0, 0
      %p31 = scmp.lt.s32.totalorder %s30, 0
      %s32 = scalar_select %p31, %s30, 0
      %s33 = smul.u32 512, %s32
      %s35 = ssub.s32 65536, 65536
      %36 = vsyncadd [#allocation6], %s35
      %s37 = smul.addr %s33, 128
      %s38 = scalar_lea.hbm %s1, %s37
      %s39 = sshll.u32 [#allocation5], 4
      %s40 = int_to_ptr.vmem [resolvable:$true] %s39
      %45 = dma.hbm_to_vmem [thread:$0]  %s38, 65536, %s40, [#allocation6], 128, 128, 8
    $region9: #{tpu_custom_call.1} parent=1 // pred_fallthru
      _
    // Predicated region
    $region10: #{tpu_custom_call.1} parent=1 // pred_check
      _
    $region11: #{tpu_custom_call.1} parent=1 // pred_check_branch
      %47 = sbr.rel (0) target = $region13
    $region12: #{tpu_custom_call.1} parent=1 // pred_region
      %48 = dma.done [#allocation3], 65536
    $region13: #{tpu_custom_call.1} parent=1 // pred_fallthru
      _
    // Predicated region
    $region14: #{tpu_custom_call.1} parent=1 // pred_check
      _
    $region15: #{tpu_custom_call.1} parent=1 // pred_check_branch
      %50 = sbr.rel (0) target = $region17
    $region16: #{tpu_custom_call.1} parent=1 // pred_region
      %51 = dma.done [#allocation6], 65536
    $region17: #{tpu_custom_call.1} parent=1 // pred_fallthru
      _
    %s52 = sadd.s32 0, 0
    %p53 = scmp.lt.s32.totalorder %s52, 0
    %s54 = scalar_select %p53, %s52, 0
    %s55 = smul.u32 512, %s54
    %s56 = sadd.s32 0, 0
    %p57 = scmp.lt.s32.totalorder %s56, 0
    %s58 = scalar_select %p57, %s56, 0
    %s59 = smul.u32 512, %s58
    %p60 = scmp.eq.s32.totalorder 0, 0
    // Predicated region
    $region18: #{tpu_custom_call.1} parent=1 // pred_check
      %p61 = pneg %p60
    $region19: #{tpu_custom_call.1} parent=1 // pred_check_branch
      %63 = sbr.rel (%p61) target = $region21
    $region20: #{tpu_custom_call.1} parent=1 // pred_region
      %64 = vst [vmem:[#allocation7] sm:$0xff] 0.0
      %65 = vst [vmem:[#allocation7 + $0x8] sm:$0xff] 0.0
    $region21: #{tpu_custom_call.1} parent=1 // pred_fallthru
      _
    %v66 = vld [vmem:[#allocation2] sm:$0xff]
    %v67 = vld [vmem:[#allocation2 + $0x8] sm:$0xff]
    %v68 = vld [vmem:[#allocation2 + $0x10] sm:$0xff]
    %v69 = vld [vmem:[#allocation2 + $0x18] sm:$0xff]
    %v70 = vld [vmem:[#allocation2 + $0x20] sm:$0xff]
    %v71 = vld [vmem:[#allocation2 + $0x28] sm:$0xff]
    %v72 = vld [vmem:[#allocation2 + $0x30] sm:$0xff]
    %v73 = vld [vmem:[#allocation2 + $0x38] sm:$0xff]
    %v74 = vld [vmem:[#allocation2 + $0x40] sm:$0xff]
    %v75 = vld [vmem:[#allocation2 + $0x48] sm:$0xff]
    %v76 = vld [vmem:[#allocation2 + $0x50] sm:$0xff]
    %v77 = vld [vmem:[#allocation2 + $0x58] sm:$0xff]
    %v78 = vld [vmem:[#allocation2 + $0x60] sm:$0xff]
    %v79 = vld [vmem:[#allocation2 + $0x68] sm:$0xff]
    %v80 = vld [vmem:[#allocation2 + $0x70] sm:$0xff]
    %v81 = vld [vmem:[#allocation2 + $0x78] sm:$0xff]
    %v82 = vld [vmem:[#allocation2 + $0x80] sm:$0xff]
    %v83 = vld [vmem:[#allocation2 + $0x88] sm:$0xff]
    %v84 = vld [vmem:[#allocation2 + $0x90] sm:$0xff]
    %v85 = vld [vmem:[#allocation2 + $0x98] sm:$0xff]
    %v86 = vld [vmem:[#allocation2 + $0xa0] sm:$0xff]
    %v87 = vld [vmem:[#allocation2 + $0xa8] sm:$0xff]
    %v88 = vld [vmem:[#allocation2 + $0xb0] sm:$0xff]
    %v89 = vld [vmem:[#allocation2 + $0xb8] sm:$0xff]
    %v90 = vld [vmem:[#allocation2 + $0xc0] sm:$0xff]
    %v91 = vld [vmem:[#allocation2 + $0xc8] sm:$0xff]
    %v92 = vld [vmem:[#allocation2 + $0xd0] sm:$0xff]
    %v93 = vld [vmem:[#allocation2 + $0xd8] sm:$0xff]
    %v94 = vld [vmem:[#allocation2 + $0xe0] sm:$0xff]
    %v95 = vld [vmem:[#allocation2 + $0xe8] sm:$0xff]
    %v96 = vld [vmem:[#allocation2 + $0xf0] sm:$0xff]
    %v97 = vld [vmem:[#allocation2 + $0xf8] sm:$0xff]
    %v98 = vld [vmem:[#allocation2 + $0x100] sm:$0xff]
    %v99 = vld [vmem:[#allocation2 + $0x108] sm:$0xff]
    %v100 = vld [vmem:[#allocation2 + $0x110] sm:$0xff]
    %v101 = vld [vmem:[#allocation2 + $0x118] sm:$0xff]
    %v102 = vld [vmem:[#allocation2 + $0x120] sm:$0xff]
    %v103 = vld [vmem:[#allocation2 + $0x128] sm:$0xff]
    %v104 = vld [vmem:[#allocation2 + $0x130] sm:$0xff]
    %v105 = vld [vmem:[#allocation2 + $0x138] sm:$0xff]
    %v106 = vld [vmem:[#allocation2 + $0x140] sm:$0xff]
    %v107 = vld [vmem:[#allocation2 + $0x148] sm:$0xff]
    %v108 = vld [vmem:[#allocation2 + $0x150] sm:$0xff]
    %v109 = vld [vmem:[#allocation2 + $0x158] sm:$0xff]
    %v110 = vld [vmem:[#allocation2 + $0x160] sm:$0xff]
    %v111 = vld [vmem:[#allocation2 + $0x168] sm:$0xff]
    %v112 = vld [vmem:[#allocation2 + $0x170] sm:$0xff]
    %v113 = vld [vmem:[#allocation2 + $0x178] sm:$0xff]
    %v114 = vld [vmem:[#allocation2 + $0x180] sm:$0xff]
    %v115 = vld [vmem:[#allocation2 + $0x188] sm:$0xff]
    %v116 = vld [vmem:[#allocation2 + $0x190] sm:$0xff]
    %v117 = vld [vmem:[#allocation2 + $0x198] sm:$0xff]
    %v118 = vld [vmem:[#allocation2 + $0x1a0] sm:$0xff]
    %v119 = vld [vmem:[#allocation2 + $0x1a8] sm:$0xff]
    %v120 = vld [vmem:[#allocation2 + $0x1b0] sm:$0xff]
    %v121 = vld [vmem:[#allocation2 + $0x1b8] sm:$0xff]
    %v122 = vld [vmem:[#allocation2 + $0x1c0] sm:$0xff]
    %v123 = vld [vmem:[#allocation2 + $0x1c8] sm:$0xff]
    %v124 = vld [vmem:[#allocation2 + $0x1d0] sm:$0xff]
    %v125 = vld [vmem:[#allocation2 + $0x1d8] sm:$0xff]
    %v126 = vld [vmem:[#allocation2 + $0x1e0] sm:$0xff]
    %v127 = vld [vmem:[#allocation2 + $0x1e8] sm:$0xff]
    %v128 = vld [vmem:[#allocation2 + $0x1f0] sm:$0xff]
    %v129 = vld [vmem:[#allocation2 + $0x1f8] sm:$0xff]
    %v130 = vld [vmem:[#allocation5] sm:$0xff]
    %v131 = vld [vmem:[#allocation5 + $0x8] sm:$0xff]
    %v132 = vld [vmem:[#allocation5 + $0x10] sm:$0xff]
    %v133 = vld [vmem:[#allocation5 + $0x18] sm:$0xff]
    %v134 = vld [vmem:[#allocation5 + $0x20] sm:$0xff]
    %v135 = vld [vmem:[#allocation5 + $0x28] sm:$0xff]
    %v136 = vld [vmem:[#allocation5 + $0x30] sm:$0xff]
    %v137 = vld [vmem:[#allocation5 + $0x38] sm:$0xff]
    %v138 = vld [vmem:[#allocation5 + $0x40] sm:$0xff]
    %v139 = vld [vmem:[#allocation5 + $0x48] sm:$0xff]
    %v140 = vld [vmem:[#allocation5 + $0x50] sm:$0xff]
    %v141 = vld [vmem:[#allocation5 + $0x58] sm:$0xff]
    %v142 = vld [vmem:[#allocation5 + $0x60] sm:$0xff]
    %v143 = vld [vmem:[#allocation5 + $0x68] sm:$0xff]
    %v144 = vld [vmem:[#allocation5 + $0x70] sm:$0xff]
    %v145 = vld [vmem:[#allocation5 + $0x78] sm:$0xff]
    %v146 = vld [vmem:[#allocation5 + $0x80] sm:$0xff]
    %v147 = vld [vmem:[#allocation5 + $0x88] sm:$0xff]
    %v148 = vld [vmem:[#allocation5 + $0x90] sm:$0xff]
    %v149 = vld [vmem:[#allocation5 + $0x98] sm:$0xff]
    %v150 = vld [vmem:[#allocation5 + $0xa0] sm:$0xff]
    %v151 = vld [vmem:[#allocation5 + $0xa8] sm:$0xff]
    %v152 = vld [vmem:[#allocation5 + $0xb0] sm:$0xff]
    %v153 = vld [vmem:[#allocation5 + $0xb8] sm:$0xff]
    %v154 = vld [vmem:[#allocation5 + $0xc0] sm:$0xff]
    %v155 = vld [vmem:[#allocation5 + $0xc8] sm:$0xff]
    %v156 = vld [vmem:[#allocation5 + $0xd0] sm:$0xff]
    %v157 = vld [vmem:[#allocation5 + $0xd8] sm:$0xff]
    %v158 = vld [vmem:[#allocation5 + $0xe0] sm:$0xff]
    %v159 = vld [vmem:[#allocation5 + $0xe8] sm:$0xff]
    %v160 = vld [vmem:[#allocation5 + $0xf0] sm:$0xff]
    %v161 = vld [vmem:[#allocation5 + $0xf8] sm:$0xff]
    %v162 = vld [vmem:[#allocation5 + $0x100] sm:$0xff]
    %v163 = vld [vmem:[#allocation5 + $0x108] sm:$0xff]
    %v164 = vld [vmem:[#allocation5 + $0x110] sm:$0xff]
    %v165 = vld [vmem:[#allocation5 + $0x118] sm:$0xff]
    %v166 = vld [vmem:[#allocation5 + $0x120] sm:$0xff]
    %v167 = vld [vmem:[#allocation5 + $0x128] sm:$0xff]
    %v168 = vld [vmem:[#allocation5 + $0x130] sm:$0xff]
    %v169 = vld [vmem:[#allocation5 + $0x138] sm:$0xff]
    %v170 = vld [vmem:[#allocation5 + $0x140] sm:$0xff]
    %v171 = vld [vmem:[#allocation5 + $0x148] sm:$0xff]
    %v172 = vld [vmem:[#allocation5 + $0x150] sm:$0xff]
    %v173 = vld [vmem:[#allocation5 + $0x158] sm:$0xff]
    %v174 = vld [vmem:[#allocation5 + $0x160] sm:$0xff]
    %v175 = vld [vmem:[#allocation5 + $0x168] sm:$0xff]
    %v176 = vld [vmem:[#allocation5 + $0x170] sm:$0xff]
    %v177 = vld [vmem:[#allocation5 + $0x178] sm:$0xff]
    %v178 = vld [vmem:[#allocation5 + $0x180] sm:$0xff]
    %v179 = vld [vmem:[#allocation5 + $0x188] sm:$0xff]
    %v180 = vld [vmem:[#allocation5 + $0x190] sm:$0xff]
    %v181 = vld [vmem:[#allocation5 + $0x198] sm:$0xff]
    %v182 = vld [vmem:[#allocation5 + $0x1a0] sm:$0xff]
    %v183 = vld [vmem:[#allocation5 + $0x1a8] sm:$0xff]
    %v184 = vld [vmem:[#allocation5 + $0x1b0] sm:$0xff]
    %v185 = vld [vmem:[#allocation5 + $0x1b8] sm:$0xff]
    %v186 = vld [vmem:[#allocation5 + $0x1c0] sm:$0xff]
    %v187 = vld [vmem:[#allocation5 + $0x1c8] sm:$0xff]
    %v188 = vld [vmem:[#allocation5 + $0x1d0] sm:$0xff]
    %v189 = vld [vmem:[#allocation5 + $0x1d8] sm:$0xff]
    %v190 = vld [vmem:[#allocation5 + $0x1e0] sm:$0xff]
    %v191 = vld [vmem:[#allocation5 + $0x1e8] sm:$0xff]
    %v192 = vld [vmem:[#allocation5 + $0x1f0] sm:$0xff]
    %v193 = vld [vmem:[#allocation5 + $0x1f8] sm:$0xff]
    %v194 = vld [vmem:[#allocation7] sm:$0xff]
    %v195 = vmul.f32 %v66, %v130
    %v196 = vmul.f32 %v67, %v131
    %v197 = vmul.f32 %v68, %v132
    %v198 = vmul.f32 %v69, %v133
    %v199 = vmul.f32 %v70, %v134
    %v200 = vmul.f32 %v71, %v135
    %v201 = vmul.f32 %v72, %v136
    %v202 = vmul.f32 %v73, %v137
    %v203 = vmul.f32 %v74, %v138
    %v204 = vmul.f32 %v75, %v139
    %v205 = vmul.f32 %v76, %v140
    %v206 = vmul.f32 %v77, %v141
    %v207 = vmul.f32 %v78, %v142
    %v208 = vmul.f32 %v79, %v143
    %v209 = vmul.f32 %v80, %v144
    %v210 = vmul.f32 %v81, %v145
    %v211 = vmul.f32 %v82, %v146
    %v212 = vmul.f32 %v83, %v147
    %v213 = vmul.f32 %v84, %v148
    %v214 = vmul.f32 %v85, %v149
    %v215 = vmul.f32 %v86, %v150
    %v216 = vmul.f32 %v87, %v151
    %v217 = vmul.f32 %v88, %v152
    %v218 = vmul.f32 %v89, %v153
    %v219 = vmul.f32 %v90, %v154
    %v220 = vmul.f32 %v91, %v155
    %v221 = vmul.f32 %v92, %v156
    %v222 = vmul.f32 %v93, %v157
    %v223 = vmul.f32 %v94, %v158
    %v224 = vmul.f32 %v95, %v159
    %v225 = vmul.f32 %v96, %v160
    %v226 = vmul.f32 %v97, %v161
    %v227 = vmul.f32 %v98, %v162
    %v228 = vmul.f32 %v99, %v163
    %v229 = vmul.f32 %v100, %v164
    %v230 = vmul.f32 %v101, %v165
    %v231 = vmul.f32 %v102, %v166
    %v232 = vmul.f32 %v103, %v167
    %v233 = vmul.f32 %v104, %v168
    %v234 = vmul.f32 %v105, %v169
    %v235 = vmul.f32 %v106, %v170
    %v236 = vmul.f32 %v107, %v171
    %v237 = vmul.f32 %v108, %v172
    %v238 = vmul.f32 %v109, %v173
    %v239 = vmul.f32 %v110, %v174
    %v240 = vmul.f32 %v111, %v175
    %v241 = vmul.f32 %v112, %v176
    %v242 = vmul.f32 %v113, %v177
    %v243 = vmul.f32 %v114, %v178
    %v244 = vmul.f32 %v115, %v179
    %v245 = vmul.f32 %v116, %v180
    %v246 = vmul.f32 %v117, %v181
    %v247 = vmul.f32 %v118, %v182
    %v248 = vmul.f32 %v119, %v183
    %v249 = vmul.f32 %v120, %v184
    %v250 = vmul.f32 %v121, %v185
    %v251 = vmul.f32 %v122, %v186
    %v252 = vmul.f32 %v123, %v187
    %v253 = vmul.f32 %v124, %v188
    %v254 = vmul.f32 %v125, %v189
    %v255 = vmul.f32 %v126, %v190
    %v256 = vmul.f32 %v127, %v191
    %v257 = vmul.f32 %v128, %v192
    %v258 = vmul.f32 %v129, %v193
    %v259 = vadd.f32 %v195, %v196
    %v260 = vadd.f32 %v259, %v197
    %v261 = vadd.f32 %v260, %v198
    %v262 = vadd.f32 %v261, %v199
    %v263 = vadd.f32 %v262, %v200
    %v264 = vadd.f32 %v263, %v201
    %v265 = vadd.f32 %v264, %v202
    %v266 = vadd.f32 %v265, %v203
    %v267 = vadd.f32 %v266, %v204
    %v268 = vadd.f32 %v267, %v205
    %v269 = vadd.f32 %v268, %v206
    %v270 = vadd.f32 %v269, %v207
    %v271 = vadd.f32 %v270, %v208
    %v272 = vadd.f32 %v271, %v209
    %v273 = vadd.f32 %v272, %v210
    %v274 = vadd.f32 %v273, %v211
    %v275 = vadd.f32 %v274, %v212
    %v276 = vadd.f32 %v275, %v213
    %v277 = vadd.f32 %v276, %v214
    %v278 = vadd.f32 %v277, %v215
    %v279 = vadd.f32 %v278, %v216
    %v280 = vadd.f32 %v279, %v217
    %v281 = vadd.f32 %v280, %v218
    %v282 = vadd.f32 %v281, %v219
    %v283 = vadd.f32 %v282, %v220
    %v284 = vadd.f32 %v283, %v221
    %v285 = vadd.f32 %v284, %v222
    %v286 = vadd.f32 %v285, %v223
    %v287 = vadd.f32 %v286, %v224
    %v288 = vadd.f32 %v287, %v225
    %v289 = vadd.f32 %v288, %v226
    %v290 = vadd.f32 %v289, %v227
    %v291 = vadd.f32 %v290, %v228
    %v292 = vadd.f32 %v291, %v229
    %v293 = vadd.f32 %v292, %v230
    %v294 = vadd.f32 %v293, %v231
    %v295 = vadd.f32 %v294, %v232
    %v296 = vadd.f32 %v295, %v233
    %v297 = vadd.f32 %v296, %v234
    %v298 = vadd.f32 %v297, %v235
    %v299 = vadd.f32 %v298, %v236
    %v300 = vadd.f32 %v299, %v237
    %v301 = vadd.f32 %v300, %v238
    %v302 = vadd.f32 %v301, %v239
    %v303 = vadd.f32 %v302, %v240
    %v304 = vadd.f32 %v303, %v241
    %v305 = vadd.f32 %v304, %v242
    %v306 = vadd.f32 %v305, %v243
    %v307 = vadd.f32 %v306, %v244
    %v308 = vadd.f32 %v307, %v245
    %v309 = vadd.f32 %v308, %v246
    %v310 = vadd.f32 %v309, %v247
    %v311 = vadd.f32 %v310, %v248
    %v312 = vadd.f32 %v311, %v249
    %v313 = vadd.f32 %v312, %v250
    %v314 = vadd.f32 %v313, %v251
    %v315 = vadd.f32 %v314, %v252
    %v316 = vadd.f32 %v315, %v253
    %v317 = vadd.f32 %v316, %v254
    %v318 = vadd.f32 %v317, %v255
    %v319 = vadd.f32 %v318, %v256
    %v320 = vadd.f32 %v319, %v257
    %v321 = vadd.f32 %v320, %v258
    %v322 = vadd.f32 %v194, %v321
    %323 = vst [vmem:[#allocation7] sm:$0xff] %v322
    %s324 = scalar_lea.vmem [#allocation7], 8
    %v325 = vld [vmem:[%s324] sm:$0xff]
    %v326 = vadd.f32 %v66, %v130
    %v327 = vadd.f32 %v67, %v131
    %v328 = vadd.f32 %v68, %v132
    %v329 = vadd.f32 %v69, %v133
    %v330 = vadd.f32 %v70, %v134
    %v331 = vadd.f32 %v71, %v135
    %v332 = vadd.f32 %v72, %v136
    %v333 = vadd.f32 %v73, %v137
    %v334 = vadd.f32 %v74, %v138
    %v335 = vadd.f32 %v75, %v139
    %v336 = vadd.f32 %v76, %v140
    %v337 = vadd.f32 %v77, %v141
    %v338 = vadd.f32 %v78, %v142
    %v339 = vadd.f32 %v79, %v143
    %v340 = vadd.f32 %v80, %v144
    %v341 = vadd.f32 %v81, %v145
    %v342 = vadd.f32 %v82, %v146
    %v343 = vadd.f32 %v83, %v147
    %v344 = vadd.f32 %v84, %v148
    %v345 = vadd.f32 %v85, %v149
    %v346 = vadd.f32 %v86, %v150
    %v347 = vadd.f32 %v87, %v151
    %v348 = vadd.f32 %v88, %v152
    %v349 = vadd.f32 %v89, %v153
    %v350 = vadd.f32 %v90, %v154
    %v351 = vadd.f32 %v91, %v155
    %v352 = vadd.f32 %v92, %v156
    %v353 = vadd.f32 %v93, %v157
    %v354 = vadd.f32 %v94, %v158
    %v355 = vadd.f32 %v95, %v159
    %v356 = vadd.f32 %v96, %v160
    %v357 = vadd.f32 %v97, %v161
    %v358 = vadd.f32 %v98, %v162
    %v359 = vadd.f32 %v99, %v163
    %v360 = vadd.f32 %v100, %v164
    %v361 = vadd.f32 %v101, %v165
    %v362 = vadd.f32 %v102, %v166
    %v363 = vadd.f32 %v103, %v167
    %v364 = vadd.f32 %v104, %v168
    %v365 = vadd.f32 %v105, %v169
    %v366 = vadd.f32 %v106, %v170
    %v367 = vadd.f32 %v107, %v171
    %v368 = vadd.f32 %v108, %v172
    %v369 = vadd.f32 %v109, %v173
    %v370 = vadd.f32 %v110, %v174
    %v371 = vadd.f32 %v111, %v175
    %v372 = vadd.f32 %v112, %v176
    %v373 = vadd.f32 %v113, %v177
    %v374 = vadd.f32 %v114, %v178
    %v375 = vadd.f32 %v115, %v179
    %v376 = vadd.f32 %v116, %v180
    %v377 = vadd.f32 %v117, %v181
    %v378 = vadd.f32 %v118, %v182
    %v379 = vadd.f32 %v119, %v183
    %v380 = vadd.f32 %v120, %v184
    %v381 = vadd.f32 %v121, %v185
    %v382 = vadd.f32 %v122, %v186
    %v383 = vadd.f32 %v123, %v187
    %v384 = vadd.f32 %v124, %v188
    %v385 = vadd.f32 %v125, %v189
    %v386 = vadd.f32 %v126, %v190
    %v387 = vadd.f32 %v127, %v191
    %v388 = vadd.f32 %v128, %v192
    %v389 = vadd.f32 %v129, %v193
    %v390 = vadd.f32 %v326, %v327
    %v391 = vadd.f32 %v390, %v328
    %v392 = vadd.f32 %v391, %v329
    %v393 = vadd.f32 %v392, %v330
    %v394 = vadd.f32 %v393, %v331
    %v395 = vadd.f32 %v394, %v332
    %v396 = vadd.f32 %v395, %v333
    %v397 = vadd.f32 %v396, %v334
    %v398 = vadd.f32 %v397, %v335
    %v399 = vadd.f32 %v398, %v336
    %v400 = vadd.f32 %v399, %v337
    %v401 = vadd.f32 %v400, %v338
    %v402 = vadd.f32 %v401, %v339
    %v403 = vadd.f32 %v402, %v340
    %v404 = vadd.f32 %v403, %v341
    %v405 = vadd.f32 %v404, %v342
    %v406 = vadd.f32 %v405, %v343
    %v407 = vadd.f32 %v406, %v344
    %v408 = vadd.f32 %v407, %v345
    %v409 = vadd.f32 %v408, %v346
    %v410 = vadd.f32 %v409, %v347
    %v411 = vadd.f32 %v410, %v348
    %v412 = vadd.f32 %v411, %v349
    %v413 = vadd.f32 %v412, %v350
    %v414 = vadd.f32 %v413, %v351
    %v415 = vadd.f32 %v414, %v352
    %v416 = vadd.f32 %v415, %v353
    %v417 = vadd.f32 %v416, %v354
    %v418 = vadd.f32 %v417, %v355
    %v419 = vadd.f32 %v418, %v356
    %v420 = vadd.f32 %v419, %v357
    %v421 = vadd.f32 %v420, %v358
    %v422 = vadd.f32 %v421, %v359
    %v423 = vadd.f32 %v422, %v360
    %v424 = vadd.f32 %v423, %v361
    %v425 = vadd.f32 %v424, %v362
    %v426 = vadd.f32 %v425, %v363
    %v427 = vadd.f32 %v426, %v364
    %v428 = vadd.f32 %v427, %v365
    %v429 = vadd.f32 %v428, %v366
    %v430 = vadd.f32 %v429, %v367
    %v431 = vadd.f32 %v430, %v368
    %v432 = vadd.f32 %v431, %v369
    %v433 = vadd.f32 %v432, %v370
    %v434 = vadd.f32 %v433, %v371
    %v435 = vadd.f32 %v434, %v372
    %v436 = vadd.f32 %v435, %v373
    %v437 = vadd.f32 %v436, %v374
    %v438 = vadd.f32 %v437, %v375
    %v439 = vadd.f32 %v438, %v376
    %v440 = vadd.f32 %v439, %v377
    %v441 = vadd.f32 %v440, %v378
    %v442 = vadd.f32 %v441, %v379
    %v443 = vadd.f32 %v442, %v380
    %v444 = vadd.f32 %v443, %v381
    %v445 = vadd.f32 %v444, %v382
    %v446 = vadd.f32 %v445, %v383
    %v447 = vadd.f32 %v446, %v384
    %v448 = vadd.f32 %v447, %v385
    %v449 = vadd.f32 %v448, %v386
    %v450 = vadd.f32 %v449, %v387
    %v451 = vadd.f32 %v450, %v388
    %v452 = vadd.f32 %v451, %v389
    %v453 = vadd.f32 %v325, %v452
    %454 = vst [vmem:[%s324] sm:$0xff] %v453
    %s455 = scalar_lea.vmem [#allocation2], 512
    %v456 = vld [vmem:[%s455] sm:$0xff]
    %v457 = vld [vmem:[%s455 + $0x8] sm:$0xff]
    %v458 = vld [vmem:[%s455 + $0x10] sm:$0xff]
    %v459 = vld [vmem:[%s455 + $0x18] sm:$0xff]
    %v460 = vld [vmem:[%s455 + $0x20] sm:$0xff]
    %v461 = vld [vmem:[%s455 + $0x28] sm:$0xff]
    %v462 = vld [vmem:[%s455 + $0x30] sm:$0xff]
    %v463 = vld [vmem:[%s455 + $0x38] sm:$0xff]
    %v464 = vld [vmem:[%s455 + $0x40] sm:$0xff]
    %v465 = vld [vmem:[%s455 + $0x48] sm:$0xff]
    %v466 = vld [vmem:[%s455 + $0x50] sm:$0xff]
    %v467 = vld [vmem:[%s455 + $0x58] sm:$0xff]
    %v468 = vld [vmem:[%s455 + $0x60] sm:$0xff]
    %v469 = vld [vmem:[%s455 + $0x68] sm:$0xff]
    %v470 = vld [vmem:[%s455 + $0x70] sm:$0xff]
    %v471 = vld [vmem:[%s455 + $0x78] sm:$0xff]
    %v472 = vld [vmem:[%s455 + $0x80] sm:$0xff]
    %v473 = vld [vmem:[%s455 + $0x88] sm:$0xff]
    %v474 = vld [vmem:[%s455 + $0x90] sm:$0xff]
    %v475 = vld [vmem:[%s455 + $0x98] sm:$0xff]
    %v476 = vld [vmem:[%s455 + $0xa0] sm:$0xff]
    %v477 = vld [vmem:[%s455 + $0xa8] sm:$0xff]
    %v478 = vld [vmem:[%s455 + $0xb0] sm:$0xff]
    %v479 = vld [vmem:[%s455 + $0xb8] sm:$0xff]
    %v480 = vld [vmem:[%s455 + $0xc0] sm:$0xff]
    %v481 = vld [vmem:[%s455 + $0xc8] sm:$0xff]
    %v482 = vld [vmem:[%s455 + $0xd0] sm:$0xff]
    %v483 = vld [vmem:[%s455 + $0xd8] sm:$0xff]
    %v484 = vld [vmem:[%s455 + $0xe0] sm:$0xff]
    %v485 = vld [vmem:[%s455 + $0xe8] sm:$0xff]
    %v486 = vld [vmem:[%s455 + $0xf0] sm:$0xff]
    %v487 = vld [vmem:[%s455 + $0xf8] sm:$0xff]
    %v488 = vld [vmem:[%s455 + $0x100] sm:$0xff]
    %v489 = vld [vmem:[%s455 + $0x108] sm:$0xff]
    %v490 = vld [vmem:[%s455 + $0x110] sm:$0xff]
    %v491 = vld [vmem:[%s455 + $0x118] sm:$0xff]
    %v492 = vld [vmem:[%s455 + $0x120] sm:$0xff]
    %v493 = vld [vmem:[%s455 + $0x128] sm:$0xff]
    %v494 = vld [vmem:[%s455 + $0x130] sm:$0xff]
    %v495 = vld [vmem:[%s455 + $0x138] sm:$0xff]
    %v496 = vld [vmem:[%s455 + $0x140] sm:$0xff]
    %v497 = vld [vmem:[%s455 + $0x148] sm:$0xff]
    %v498 = vld [vmem:[%s455 + $0x150] sm:$0xff]
    %v499 = vld [vmem:[%s455 + $0x158] sm:$0xff]
    %v500 = vld [vmem:[%s455 + $0x160] sm:$0xff]
    %v501 = vld [vmem:[%s455 + $0x168] sm:$0xff]
    %v502 = vld [vmem:[%s455 + $0x170] sm:$0xff]
    %v503 = vld [vmem:[%s455 + $0x178] sm:$0xff]
    %v504 = vld [vmem:[%s455 + $0x180] sm:$0xff]
    %v505 = vld [vmem:[%s455 + $0x188] sm:$0xff]
    %v506 = vld [vmem:[%s455 + $0x190] sm:$0xff]
    %v507 = vld [vmem:[%s455 + $0x198] sm:$0xff]
    %v508 = vld [vmem:[%s455 + $0x1a0] sm:$0xff]
    %v509 = vld [vmem:[%s455 + $0x1a8] sm:$0xff]
    %v510 = vld [vmem:[%s455 + $0x1b0] sm:$0xff]
    %v511 = vld [vmem:[%s455 + $0x1b8] sm:$0xff]
    %v512 = vld [vmem:[%s455 + $0x1c0] sm:$0xff]
    %v513 = vld [vmem:[%s455 + $0x1c8] sm:$0xff]
    %v514 = vld [vmem:[%s455 + $0x1d0] sm:$0xff]
    %v515 = vld [vmem:[%s455 + $0x1d8] sm:$0xff]
    %v516 = vld [vmem:[%s455 + $0x1e0] sm:$0xff]
    %v517 = vld [vmem:[%s455 + $0x1e8] sm:$0xff]
    %v518 = vld [vmem:[%s455 + $0x1f0] sm:$0xff]
    %v519 = vld [vmem:[%s455 + $0x1f8] sm:$0xff]
    %s520 = scalar_lea.vmem [#allocation5], 512
    %v521 = vld [vmem:[%s520] sm:$0xff]
    %v522 = vld [vmem:[%s520 + $0x8] sm:$0xff]
    %v523 = vld [vmem:[%s520 + $0x10] sm:$0xff]
    %v524 = vld [vmem:[%s520 + $0x18] sm:$0xff]
    %v525 = vld [vmem:[%s520 + $0x20] sm:$0xff]
    %v526 = vld [vmem:[%s520 + $0x28] sm:$0xff]
    %v527 = vld [vmem:[%s520 + $0x30] sm:$0xff]
    %v528 = vld [vmem:[%s520 + $0x38] sm:$0xff]
    %v529 = vld [vmem:[%s520 + $0x40] sm:$0xff]
    %v530 = vld [vmem:[%s520 + $0x48] sm:$0xff]
    %v531 = vld [vmem:[%s520 + $0x50] sm:$0xff]
    %v532 = vld [vmem:[%s520 + $0x58] sm:$0xff]
    %v533 = vld [vmem:[%s520 + $0x60] sm:$0xff]
    %v534 = vld [vmem:[%s520 + $0x68] sm:$0xff]
    %v535 = vld [vmem:[%s520 + $0x70] sm:$0xff]
    %v536 = vld [vmem:[%s520 + $0x78] sm:$0xff]
    %v537 = vld [vmem:[%s520 + $0x80] sm:$0xff]
    %v538 = vld [vmem:[%s520 + $0x88] sm:$0xff]
    %v539 = vld [vmem:[%s520 + $0x90] sm:$0xff]
    %v540 = vld [vmem:[%s520 + $0x98] sm:$0xff]
    %v541 = vld [vmem:[%s520 + $0xa0] sm:$0xff]
    %v542 = vld [vmem:[%s520 + $0xa8] sm:$0xff]
    %v543 = vld [vmem:[%s520 + $0xb0] sm:$0xff]
    %v544 = vld [vmem:[%s520 + $0xb8] sm:$0xff]
    %v545 = vld [vmem:[%s520 + $0xc0] sm:$0xff]
    %v546 = vld [vmem:[%s520 + $0xc8] sm:$0xff]
    %v547 = vld [vmem:[%s520 + $0xd0] sm:$0xff]
    %v548 = vld [vmem:[%s520 + $0xd8] sm:$0xff]
    %v549 = vld [vmem:[%s520 + $0xe0] sm:$0xff]
    %v550 = vld [vmem:[%s520 + $0xe8] sm:$0xff]
    %v551 = vld [vmem:[%s520 + $0xf0] sm:$0xff]
    %v552 = vld [vmem:[%s520 + $0xf8] sm:$0xff]
    %v553 = vld [vmem:[%s520 + $0x100] sm:$0xff]
    %v554 = vld [vmem:[%s520 + $0x108] sm:$0xff]
    %v555 = vld [vmem:[%s520 + $0x110] sm:$0xff]
    %v556 = vld [vmem:[%s520 + $0x118] sm:$0xff]
    %v557 = vld [vmem:[%s520 + $0x120] sm:$0xff]
    %v558 = vld [vmem:[%s520 + $0x128] sm:$0xff]
    %v559 = vld [vmem:[%s520 + $0x130] sm:$0xff]
    %v560 = vld [vmem:[%s520 + $0x138] sm:$0xff]
    %v561 = vld [vmem:[%s520 + $0x140] sm:$0xff]
    %v562 = vld [vmem:[%s520 + $0x148] sm:$0xff]
    %v563 = vld [vmem:[%s520 + $0x150] sm:$0xff]
    %v564 = vld [vmem:[%s520 + $0x158] sm:$0xff]
    %v565 = vld [vmem:[%s520 + $0x160] sm:$0xff]
    %v566 = vld [vmem:[%s520 + $0x168] sm:$0xff]
    %v567 = vld [vmem:[%s520 + $0x170] sm:$0xff]
    %v568 = vld [vmem:[%s520 + $0x178] sm:$0xff]
    %v569 = vld [vmem:[%s520 + $0x180] sm:$0xff]
    %v570 = vld [vmem:[%s520 + $0x188] sm:$0xff]
    %v571 = vld [vmem:[%s520 + $0x190] sm:$0xff]
    %v572 = vld [vmem:[%s520 + $0x198] sm:$0xff]
    %v573 = vld [vmem:[%s520 + $0x1a0] sm:$0xff]
    %v574 = vld [vmem:[%s520 + $0x1a8] sm:$0xff]
    %v575 = vld [vmem:[%s520 + $0x1b0] sm:$0xff]
    %v576 = vld [vmem:[%s520 + $0x1b8] sm:$0xff]
    %v577 = vld [vmem:[%s520 + $0x1c0] sm:$0xff]
    %v578 = vld [vmem:[%s520 + $0x1c8] sm:$0xff]
    %v579 = vld [vmem:[%s520 + $0x1d0] sm:$0xff]
    %v580 = vld [vmem:[%s520 + $0x1d8] sm:$0xff]
    %v581 = vld [vmem:[%s520 + $0x1e0] sm:$0xff]
    %v582 = vld [vmem:[%s520 + $0x1e8] sm:$0xff]
    %v583 = vld [vmem:[%s520 + $0x1f0] sm:$0xff]
    %v584 = vld [vmem:[%s520 + $0x1f8] sm:$0xff]
    %v585 = vld [vmem:[#allocation7] sm:$0xff]
    %v586 = vmul.f32 %v456, %v521
    %v587 = vmul.f32 %v457, %v522
    %v588 = vmul.f32 %v458, %v523
    %v589 = vmul.f32 %v459, %v524
    %v590 = vmul.f32 %v460, %v525
    %v591 = vmul.f32 %v461, %v526
    %v592 = vmul.f32 %v462, %v527
    %v593 = vmul.f32 %v463, %v528
    %v594 = vmul.f32 %v464, %v529
    %v595 = vmul.f32 %v465, %v530
    %v596 = vmul.f32 %v466, %v531
    %v597 = vmul.f32 %v467, %v532
    %v598 = vmul.f32 %v468, %v533
    %v599 = vmul.f32 %v469, %v534
    %v600 = vmul.f32 %v470, %v535
    %v601 = vmul.f32 %v471, %v536
    %v602 = vmul.f32 %v472, %v537
    %v603 = vmul.f32 %v473, %v538
    %v604 = vmul.f32 %v474, %v539
    %v605 = vmul.f32 %v475, %v540
    %v606 = vmul.f32 %v476, %v541
    %v607 = vmul.f32 %v477, %v542
    %v608 = vmul.f32 %v478, %v543
    %v609 = vmul.f32 %v479, %v544
    %v610 = vmul.f32 %v480, %v545
    %v611 = vmul.f32 %v481, %v546
    %v612 = vmul.f32 %v482, %v547
    %v613 = vmul.f32 %v483, %v548
    %v614 = vmul.f32 %v484, %v549
    %v615 = vmul.f32 %v485, %v550
    %v616 = vmul.f32 %v486, %v551
    %v617 = vmul.f32 %v487, %v552
    %v618 = vmul.f32 %v488, %v553
    %v619 = vmul.f32 %v489, %v554
    %v620 = vmul.f32 %v490, %v555
    %v621 = vmul.f32 %v491, %v556
    %v622 = vmul.f32 %v492, %v557
    %v623 = vmul.f32 %v493, %v558
    %v624 = vmul.f32 %v494, %v559
    %v625 = vmul.f32 %v495, %v560
    %v626 = vmul.f32 %v496, %v561
    %v627 = vmul.f32 %v497, %v562
    %v628 = vmul.f32 %v498, %v563
    %v629 = vmul.f32 %v499, %v564
    %v630 = vmul.f32 %v500, %v565
    %v631 = vmul.f32 %v501, %v566
    %v632 = vmul.f32 %v502, %v567
    %v633 = vmul.f32 %v503, %v568
    %v634 = vmul.f32 %v504, %v569
    %v635 = vmul.f32 %v505, %v570
    %v636 = vmul.f32 %v506, %v571
    %v637 = vmul.f32 %v507, %v572
    %v638 = vmul.f32 %v508, %v573
    %v639 = vmul.f32 %v509, %v574
    %v640 = vmul.f32 %v510, %v575
    %v641 = vmul.f32 %v511, %v576
    %v642 = vmul.f32 %v512, %v577
    %v643 = vmul.f32 %v513, %v578
    %v644 = vmul.f32 %v514, %v579
    %v645 = vmul.f32 %v515, %v580
    %v646 = vmul.f32 %v516, %v581
    %v647 = vmul.f32 %v517, %v582
    %v648 = vmul.f32 %v518, %v583
    %v649 = vmul.f32 %v519, %v584
    %v650 = vadd.f32 %v586, %v587
    %v651 = vadd.f32 %v650, %v588
    %v652 = vadd.f32 %v651, %v589
    %v653 = vadd.f32 %v652, %v590
    %v654 = vadd.f32 %v653, %v591
    %v655 = vadd.f32 %v654, %v592
    %v656 = vadd.f32 %v655, %v593
    %v657 = vadd.f32 %v656, %v594
    %v658 = vadd.f32 %v657, %v595
    %v659 = vadd.f32 %v658, %v596
    %v660 = vadd.f32 %v659, %v597
    %v661 = vadd.f32 %v660, %v598
    %v662 = vadd.f32 %v661, %v599
    %v663 = vadd.f32 %v662, %v600
    %v664 = vadd.f32 %v663, %v601
    %v665 = vadd.f32 %v664, %v602
    %v666 = vadd.f32 %v665, %v603
    %v667 = vadd.f32 %v666, %v604
    %v668 = vadd.f32 %v667, %v605
    %v669 = vadd.f32 %v668, %v606
    %v670 = vadd.f32 %v669, %v607
    %v671 = vadd.f32 %v670, %v608
    %v672 = vadd.f32 %v671, %v609
    %v673 = vadd.f32 %v672, %v610
    %v674 = vadd.f32 %v673, %v611
    %v675 = vadd.f32 %v674, %v612
    %v676 = vadd.f32 %v675, %v613
    %v677 = vadd.f32 %v676, %v614
    %v678 = vadd.f32 %v677, %v615
    %v679 = vadd.f32 %v678, %v616
    %v680 = vadd.f32 %v679, %v617
    %v681 = vadd.f32 %v680, %v618
    %v682 = vadd.f32 %v681, %v619
    %v683 = vadd.f32 %v682, %v620
    %v684 = vadd.f32 %v683, %v621
    %v685 = vadd.f32 %v684, %v622
    %v686 = vadd.f32 %v685, %v623
    %v687 = vadd.f32 %v686, %v624
    %v688 = vadd.f32 %v687, %v625
    %v689 = vadd.f32 %v688, %v626
    %v690 = vadd.f32 %v689, %v627
    %v691 = vadd.f32 %v690, %v628
    %v692 = vadd.f32 %v691, %v629
    %v693 = vadd.f32 %v692, %v630
    %v694 = vadd.f32 %v693, %v631
    %v695 = vadd.f32 %v694, %v632
    %v696 = vadd.f32 %v695, %v633
    %v697 = vadd.f32 %v696, %v634
    %v698 = vadd.f32 %v697, %v635
    %v699 = vadd.f32 %v698, %v636
    %v700 = vadd.f32 %v699, %v637
    %v701 = vadd.f32 %v700, %v638
    %v702 = vadd.f32 %v701, %v639
    %v703 = vadd.f32 %v702, %v640
    %v704 = vadd.f32 %v703, %v641
    %v705 = vadd.f32 %v704, %v642
    %v706 = vadd.f32 %v705, %v643
    %v707 = vadd.f32 %v706, %v644
    %v708 = vadd.f32 %v707, %v645
    %v709 = vadd.f32 %v708, %v646
    %v710 = vadd.f32 %v709, %v647
    %v711 = vadd.f32 %v710, %v648
    %v712 = vadd.f32 %v711, %v649
    %v713 = vadd.f32 %v585, %v712
    %714 = vst [vmem:[#allocation7] sm:$0xff] %v713
    %v715 = vld [vmem:[%s324] sm:$0xff]
    %v716 = vadd.f32 %v456, %v521
    %v717 = vadd.f32 %v457, %v522
    %v718 = vadd.f32 %v458, %v523
    %v719 = vadd.f32 %v459, %v524
    %v720 = vadd.f32 %v460, %v525
    %v721 = vadd.f32 %v461, %v526
    %v722 = vadd.f32 %v462, %v527
    %v723 = vadd.f32 %v463, %v528
    %v724 = vadd.f32 %v464, %v529
    %v725 = vadd.f32 %v465, %v530
    %v726 = vadd.f32 %v466, %v531
    %v727 = vadd.f32 %v467, %v532
    %v728 = vadd.f32 %v468, %v533
    %v729 = vadd.f32 %v469, %v534
    %v730 = vadd.f32 %v470, %v535
    %v731 = vadd.f32 %v471, %v536
    %v732 = vadd.f32 %v472, %v537
    %v733 = vadd.f32 %v473, %v538
    %v734 = vadd.f32 %v474, %v539
    %v735 = vadd.f32 %v475, %v540
    %v736 = vadd.f32 %v476, %v541
    %v737 = vadd.f32 %v477, %v542
    %v738 = vadd.f32 %v478, %v543
    %v739 = vadd.f32 %v479, %v544
    %v740 = vadd.f32 %v480, %v545
    %v741 = vadd.f32 %v481, %v546
    %v742 = vadd.f32 %v482, %v547
    %v743 = vadd.f32 %v483, %v548
    %v744 = vadd.f32 %v484, %v549
    %v745 = vadd.f32 %v485, %v550
    %v746 = vadd.f32 %v486, %v551
    %v747 = vadd.f32 %v487, %v552
    %v748 = vadd.f32 %v488, %v553
    %v749 = vadd.f32 %v489, %v554
    %v750 = vadd.f32 %v490, %v555
    %v751 = vadd.f32 %v491, %v556
    %v752 = vadd.f32 %v492, %v557
    %v753 = vadd.f32 %v493, %v558
    %v754 = vadd.f32 %v494, %v559
    %v755 = vadd.f32 %v495, %v560
    %v756 = vadd.f32 %v496, %v561
    %v757 = vadd.f32 %v497, %v562
    %v758 = vadd.f32 %v498, %v563
    %v759 = vadd.f32 %v499, %v564
    %v760 = vadd.f32 %v500, %v565
    %v761 = vadd.f32 %v501, %v566
    %v762 = vadd.f32 %v502, %v567
    %v763 = vadd.f32 %v503, %v568
    %v764 = vadd.f32 %v504, %v569
    %v765 = vadd.f32 %v505, %v570
    %v766 = vadd.f32 %v506, %v571
    %v767 = vadd.f32 %v507, %v572
    %v768 = vadd.f32 %v508, %v573
    %v769 = vadd.f32 %v509, %v574
    %v770 = vadd.f32 %v510, %v575
    %v771 = vadd.f32 %v511, %v576
    %v772 = vadd.f32 %v512, %v577
    %v773 = vadd.f32 %v513, %v578
    %v774 = vadd.f32 %v514, %v579
    %v775 = vadd.f32 %v515, %v580
    %v776 = vadd.f32 %v516, %v581
    %v777 = vadd.f32 %v517, %v582
    %v778 = vadd.f32 %v518, %v583
    %v779 = vadd.f32 %v519, %v584
    %v780 = vadd.f32 %v716, %v717
    %v781 = vadd.f32 %v780, %v718
    %v782 = vadd.f32 %v781, %v719
    %v783 = vadd.f32 %v782, %v720
    %v784 = vadd.f32 %v783, %v721
    %v785 = vadd.f32 %v784, %v722
    %v786 = vadd.f32 %v785, %v723
    %v787 = vadd.f32 %v786, %v724
    %v788 = vadd.f32 %v787, %v725
    %v789 = vadd.f32 %v788, %v726
    %v790 = vadd.f32 %v789, %v727
    %v791 = vadd.f32 %v790, %v728
    %v792 = vadd.f32 %v791, %v729
    %v793 = vadd.f32 %v792, %v730
    %v794 = vadd.f32 %v793, %v731
    %v795 = vadd.f32 %v794, %v732
    %v796 = vadd.f32 %v795, %v733
    %v797 = vadd.f32 %v796, %v734
    %v798 = vadd.f32 %v797, %v735
    %v799 = vadd.f32 %v798, %v736
    %v800 = vadd.f32 %v799, %v737
    %v801 = vadd.f32 %v800, %v738
    %v802 = vadd.f32 %v801, %v739
    %v803 = vadd.f32 %v802, %v740
    %v804 = vadd.f32 %v803, %v741
    %v805 = vadd.f32 %v804, %v742
    %v806 = vadd.f32 %v805, %v743
    %v807 = vadd.f32 %v806, %v744
    %v808 = vadd.f32 %v807, %v745
    %v809 = vadd.f32 %v808, %v746
    %v810 = vadd.f32 %v809, %v747
    %v811 = vadd.f32 %v810, %v748
    %v812 = vadd.f32 %v811, %v749
    %v813 = vadd.f32 %v812, %v750
    %v814 = vadd.f32 %v813, %v751
    %v815 = vadd.f32 %v814, %v752
    %v816 = vadd.f32 %v815, %v753
    %v817 = vadd.f32 %v816, %v754
    %v818 = vadd.f32 %v817, %v755
    %v819 = vadd.f32 %v818, %v756
    %v820 = vadd.f32 %v819, %v757
    %v821 = vadd.f32 %v820, %v758
    %v822 = vadd.f32 %v821, %v759
    %v823 = vadd.f32 %v822, %v760
    %v824 = vadd.f32 %v823, %v761
    %v825 = vadd.f32 %v824, %v762
    %v826 = vadd.f32 %v825, %v763
    %v827 = vadd.f32 %v826, %v764
    %v828 = vadd.f32 %v827, %v765
    %v829 = vadd.f32 %v828, %v766
    %v830 = vadd.f32 %v829, %v767
    %v831 = vadd.f32 %v830, %v768
    %v832 = vadd.f32 %v831, %v769
    %v833 = vadd.f32 %v832, %v770
    %v834 = vadd.f32 %v833, %v771
    %v835 = vadd.f32 %v834, %v772
    %v836 = vadd.f32 %v835, %v773
    %v837 = vadd.f32 %v836, %v774
    %v838 = vadd.f32 %v837, %v775
    %v839 = vadd.f32 %v838, %v776
    %v840 = vadd.f32 %v839, %v777
    %v841 = vadd.f32 %v840, %v778
    %v842 = vadd.f32 %v841, %v779
    %v843 = vadd.f32 %v715, %v842
    %844 = vst [vmem:[%s324] sm:$0xff] %v843
    %s845 = scalar_lea.vmem [#allocation2], 1024
    %v846 = vld [vmem:[%s845] sm:$0xff]
    %v847 = vld [vmem:[%s845 + $0x8] sm:$0xff]
    %v848 = vld [vmem:[%s845 + $0x10] sm:$0xff]
    %v849 = vld [vmem:[%s845 + $0x18] sm:$0xff]
    %v850 = vld [vmem:[%s845 + $0x20] sm:$0xff]
    %v851 = vld [vmem:[%s845 + $0x28] sm:$0xff]
    %v852 = vld [vmem:[%s845 + $0x30] sm:$0xff]
    %v853 = vld [vmem:[%s845 + $0x38] sm:$0xff]
    %v854 = vld [vmem:[%s845 + $0x40] sm:$0xff]
    %v855 = vld [vmem:[%s845 + $0x48] sm:$0xff]
    %v856 = vld [vmem:[%s845 + $0x50] sm:$0xff]
    %v857 = vld [vmem:[%s845 + $0x58] sm:$0xff]
    %v858 = vld [vmem:[%s845 + $0x60] sm:$0xff]
    %v859 = vld [vmem:[%s845 + $0x68] sm:$0xff]
    %v860 = vld [vmem:[%s845 + $0x70] sm:$0xff]
    %v861 = vld [vmem:[%s845 + $0x78] sm:$0xff]
    %v862 = vld [vmem:[%s845 + $0x80] sm:$0xff]
    %v863 = vld [vmem:[%s845 + $0x88] sm:$0xff]
    %v864 = vld [vmem:[%s845 + $0x90] sm:$0xff]
    %v865 = vld [vmem:[%s845 + $0x98] sm:$0xff]
    %v866 = vld [vmem:[%s845 + $0xa0] sm:$0xff]
    %v867 = vld [vmem:[%s845 + $0xa8] sm:$0xff]
    %v868 = vld [vmem:[%s845 + $0xb0] sm:$0xff]
    %v869 = vld [vmem:[%s845 + $0xb8] sm:$0xff]
    %v870 = vld [vmem:[%s845 + $0xc0] sm:$0xff]
    %v871 = vld [vmem:[%s845 + $0xc8] sm:$0xff]
    %v872 = vld [vmem:[%s845 + $0xd0] sm:$0xff]
    %v873 = vld [vmem:[%s845 + $0xd8] sm:$0xff]
    %v874 = vld [vmem:[%s845 + $0xe0] sm:$0xff]
    %v875 = vld [vmem:[%s845 + $0xe8] sm:$0xff]
    %v876 = vld [vmem:[%s845 + $0xf0] sm:$0xff]
    %v877 = vld [vmem:[%s845 + $0xf8] sm:$0xff]
    %v878 = vld [vmem:[%s845 + $0x100] sm:$0xff]
    %v879 = vld [vmem:[%s845 + $0x108] sm:$0xff]
    %v880 = vld [vmem:[%s845 + $0x110] sm:$0xff]
    %v881 = vld [vmem:[%s845 + $0x118] sm:$0xff]
    %v882 = vld [vmem:[%s845 + $0x120] sm:$0xff]
    %v883 = vld [vmem:[%s845 + $0x128] sm:$0xff]
    %v884 = vld [vmem:[%s845 + $0x130] sm:$0xff]
    %v885 = vld [vmem:[%s845 + $0x138] sm:$0xff]
    %v886 = vld [vmem:[%s845 + $0x140] sm:$0xff]
    %v887 = vld [vmem:[%s845 + $0x148] sm:$0xff]
    %v888 = vld [vmem:[%s845 + $0x150] sm:$0xff]
    %v889 = vld [vmem:[%s845 + $0x158] sm:$0xff]
    %v890 = vld [vmem:[%s845 + $0x160] sm:$0xff]
    %v891 = vld [vmem:[%s845 + $0x168] sm:$0xff]
    %v892 = vld [vmem:[%s845 + $0x170] sm:$0xff]
    %v893 = vld [vmem:[%s845 + $0x178] sm:$0xff]
    %v894 = vld [vmem:[%s845 + $0x180] sm:$0xff]
    %v895 = vld [vmem:[%s845 + $0x188] sm:$0xff]
    %v896 = vld [vmem:[%s845 + $0x190] sm:$0xff]
    %v897 = vld [vmem:[%s845 + $0x198] sm:$0xff]
    %v898 = vld [vmem:[%s845 + $0x1a0] sm:$0xff]
    %v899 = vld [vmem:[%s845 + $0x1a8] sm:$0xff]
    %v900 = vld [vmem:[%s845 + $0x1b0] sm:$0xff]
    %v901 = vld [vmem:[%s845 + $0x1b8] sm:$0xff]
    %v902 = vld [vmem:[%s845 + $0x1c0] sm:$0xff]
    %v903 = vld [vmem:[%s845 + $0x1c8] sm:$0xff]
    %v904 = vld [vmem:[%s845 + $0x1d0] sm:$0xff]
    %v905 = vld [vmem:[%s845 + $0x1d8] sm:$0xff]
    %v906 = vld [vmem:[%s845 + $0x1e0] sm:$0xff]
    %v907 = vld [vmem:[%s845 + $0x1e8] sm:$0xff]
    %v908 = vld [vmem:[%s845 + $0x1f0] sm:$0xff]
    %v909 = vld [vmem:[%s845 + $0x1f8] sm:$0xff]
    %s910 = scalar_lea.vmem [#allocation5], 1024
    %v911 = vld [vmem:[%s910] sm:$0xff]
    %v912 = vld [vmem:[%s910 + $0x8] sm:$0xff]
    %v913 = vld [vmem:[%s910 + $0x10] sm:$0xff]
    %v914 = vld [vmem:[%s910 + $0x18] sm:$0xff]
    %v915 = vld [vmem:[%s910 + $0x20] sm:$0xff]
    %v916 = vld [vmem:[%s910 + $0x28] sm:$0xff]
    %v917 = vld [vmem:[%s910 + $0x30] sm:$0xff]
    %v918 = vld [vmem:[%s910 + $0x38] sm:$0xff]
    %v919 = vld [vmem:[%s910 + $0x40] sm:$0xff]
    %v920 = vld [vmem:[%s910 + $0x48] sm:$0xff]
    %v921 = vld [vmem:[%s910 + $0x50] sm:$0xff]
    %v922 = vld [vmem:[%s910 + $0x58] sm:$0xff]
    %v923 = vld [vmem:[%s910 + $0x60] sm:$0xff]
    %v924 = vld [vmem:[%s910 + $0x68] sm:$0xff]
    %v925 = vld [vmem:[%s910 + $0x70] sm:$0xff]
    %v926 = vld [vmem:[%s910 + $0x78] sm:$0xff]
    %v927 = vld [vmem:[%s910 + $0x80] sm:$0xff]
    %v928 = vld [vmem:[%s910 + $0x88] sm:$0xff]
    %v929 = vld [vmem:[%s910 + $0x90] sm:$0xff]
    %v930 = vld [vmem:[%s910 + $0x98] sm:$0xff]
    %v931 = vld [vmem:[%s910 + $0xa0] sm:$0xff]
    %v932 = vld [vmem:[%s910 + $0xa8] sm:$0xff]
    %v933 = vld [vmem:[%s910 + $0xb0] sm:$0xff]
    %v934 = vld [vmem:[%s910 + $0xb8] sm:$0xff]
    %v935 = vld [vmem:[%s910 + $0xc0] sm:$0xff]
    %v936 = vld [vmem:[%s910 + $0xc8] sm:$0xff]
    %v937 = vld [vmem:[%s910 + $0xd0] sm:$0xff]
    %v938 = vld [vmem:[%s910 + $0xd8] sm:$0xff]
    %v939 = vld [vmem:[%s910 + $0xe0] sm:$0xff]
    %v940 = vld [vmem:[%s910 + $0xe8] sm:$0xff]
    %v941 = vld [vmem:[%s910 + $0xf0] sm:$0xff]
    %v942 = vld [vmem:[%s910 + $0xf8] sm:$0xff]
    %v943 = vld [vmem:[%s910 + $0x100] sm:$0xff]
    %v944 = vld [vmem:[%s910 + $0x108] sm:$0xff]
    %v945 = vld [vmem:[%s910 + $0x110] sm:$0xff]
    %v946 = vld [vmem:[%s910 + $0x118] sm:$0xff]
    %v947 = vld [vmem:[%s910 + $0x120] sm:$0xff]
    %v948 = vld [vmem:[%s910 + $0x128] sm:$0xff]
    %v949 = vld [vmem:[%s910 + $0x130] sm:$0xff]
    %v950 = vld [vmem:[%s910 + $0x138] sm:$0xff]
    %v951 = vld [vmem:[%s910 + $0x140] sm:$0xff]
    %v952 = vld [vmem:[%s910 + $0x148] sm:$0xff]
    %v953 = vld [vmem:[%s910 + $0x150] sm:$0xff]
    %v954 = vld [vmem:[%s910 + $0x158] sm:$0xff]
    %v955 = vld [vmem:[%s910 + $0x160] sm:$0xff]
    %v956 = vld [vmem:[%s910 + $0x168] sm:$0xff]
    %v957 = vld [vmem:[%s910 + $0x170] sm:$0xff]
    %v958 = vld [vmem:[%s910 + $0x178] sm:$0xff]
    %v959 = vld [vmem:[%s910 + $0x180] sm:$0xff]
    %v960 = vld [vmem:[%s910 + $0x188] sm:$0xff]
    %v961 = vld [vmem:[%s910 + $0x190] sm:$0xff]
    %v962 = vld [vmem:[%s910 + $0x198] sm:$0xff]
    %v963 = vld [vmem:[%s910 + $0x1a0] sm:$0xff]
    %v964 = vld [vmem:[%s910 + $0x1a8] sm:$0xff]
    %v965 = vld [vmem:[%s910 + $0x1b0] sm:$0xff]
    %v966 = vld [vmem:[%s910 + $0x1b8] sm:$0xff]
    %v967 = vld [vmem:[%s910 + $0x1c0] sm:$0xff]
    %v968 = vld [vmem:[%s910 + $0x1c8] sm:$0xff]
    %v969 = vld [vmem:[%s910 + $0x1d0] sm:$0xff]
    %v970 = vld [vmem:[%s910 + $0x1d8] sm:$0xff]
    %v971 = vld [vmem:[%s910 + $0x1e0] sm:$0xff]
    %v972 = vld [vmem:[%s910 + $0x1e8] sm:$0xff]
    %v973 = vld [vmem:[%s910 + $0x1f0] sm:$0xff]
    %v974 = vld [vmem:[%s910 + $0x1f8] sm:$0xff]
    %v975 = vld [vmem:[#allocation7] sm:$0xff]
    %v976 = vmul.f32 %v846, %v911
    %v977 = vmul.f32 %v847, %v912
    %v978 = vmul.f32 %v848, %v913
    %v979 = vmul.f32 %v849, %v914
    %v980 = vmul.f32 %v850, %v915
    %v981 = vmul.f32 %v851, %v916
    %v982 = vmul.f32 %v852, %v917
    %v983 = vmul.f32 %v853, %v918
    %v984 = vmul.f32 %v854, %v919
    %v985 = vmul.f32 %v855, %v920
    %v986 = vmul.f32 %v856, %v921
    %v987 = vmul.f32 %v857, %v922
    %v988 = vmul.f32 %v858, %v923
    %v989 = vmul.f32 %v859, %v924
    %v990 = vmul.f32 %v860, %v925
    %v991 = vmul.f32 %v861, %v926
    %v992 = vmul.f32 %v862, %v927
    %v993 = vmul.f32 %v863, %v928
    %v994 = vmul.f32 %v864, %v929
    %v995 = vmul.f32 %v865, %v930
    %v996 = vmul.f32 %v866, %v931
    %v997 = vmul.f32 %v867, %v932
    %v998 = vmul.f32 %v868, %v933
    %v999 = vmul.f32 %v869, %v934
    %v1000 = vmul.f32 %v870, %v935
    %v1001 = vmul.f32 %v871, %v936
    %v1002 = vmul.f32 %v872, %v937
    %v1003 = vmul.f32 %v873, %v938
    %v1004 = vmul.f32 %v874, %v939
    %v1005 = vmul.f32 %v875, %v940
    %v1006 = vmul.f32 %v876, %v941
    %v1007 = vmul.f32 %v877, %v942
    %v1008 = vmul.f32 %v878, %v943
    %v1009 = vmul.f32 %v879, %v944
    %v1010 = vmul.f32 %v880, %v945
    %v1011 = vmul.f32 %v881, %v946
    %v1012 = vmul.f32 %v882, %v947
    %v1013 = vmul.f32 %v883, %v948
    %v1014 = vmul.f32 %v884, %v949
    %v1015 = vmul.f32 %v885, %v950
    %v1016 = vmul.f32 %v886, %v951
    %v1017 = vmul.f32 %v887, %v952
    %v1018 = vmul.f32 %v888, %v953
    %v1019 = vmul.f32 %v889, %v954
    %v1020 = vmul.f32 %v890, %v955
    %v1021 = vmul.f32 %v891, %v956
    %v1022 = vmul.f32 %v892, %v957
    %v1023 = vmul.f32 %v893, %v958
    %v1024 = vmul.f32 %v894, %v959
    %v1025 = vmul.f32 %v895, %v960
    %v1026 = vmul.f32 %v896, %v961
    %v1027 = vmul.f32 %v897, %v962
    %v1028 = vmul.f32 %v898, %v963
    %v1029 = vmul.f32 %v899, %v964
    %v1030 = vmul.f32 %v900, %v965
    %v1031 = vmul.f32 %v901, %v966
    %v1032 = vmul.f32 %v902, %v967
    %v1033 = vmul.f32 %v903, %v968
    %v1034 = vmul.f32 %v904, %v969
    %v1035 = vmul.f32 %v905, %v970
    %v1036 = vmul.f32 %v906, %v971
    %v1037 = vmul.f32 %v907, %v972
    %v1038 = vmul.f32 %v908, %v973
    %v1039 = vmul.f32 %v909, %v974
    %v1040 = vadd.f32 %v976, %v977
    %v1041 = vadd.f32 %v1040, %v978
    %v1042 = vadd.f32 %v1041, %v979
    %v1043 = vadd.f32 %v1042, %v980
    %v1044 = vadd.f32 %v1043, %v981
    %v1045 = vadd.f32 %v1044, %v982
    %v1046 = vadd.f32 %v1045, %v983
    %v1047 = vadd.f32 %v1046, %v984
    %v1048 = vadd.f32 %v1047, %v985
    %v1049 = vadd.f32 %v1048, %v986
    %v1050 = vadd.f32 %v1049, %v987
    %v1051 = vadd.f32 %v1050, %v988
    %v1052 = vadd.f32 %v1051, %v989
    %v1053 = vadd.f32 %v1052, %v990
    %v1054 = vadd.f32 %v1053, %v991
    %v1055 = vadd.f32 %v1054, %v992
    %v1056 = vadd.f32 %v1055, %v993
    %v1057 = vadd.f32 %v1056, %v994
    %v1058 = vadd.f32 %v1057, %v995
    %v1059 = vadd.f32 %v1058, %v996
    %v1060 = vadd.f32 %v1059, %v997
    %v1061 = vadd.f32 %v1060, %v998
    %v1062 = vadd.f32 %v1061, %v999
    %v1063 = vadd.f32 %v1062, %v1000
    %v1064 = vadd.f32 %v1063, %v1001
    %v1065 = vadd.f32 %v1064, %v1002
    %v1066 = vadd.f32 %v1065, %v1003
    %v1067 = vadd.f32 %v1066, %v1004
    %v1068 = vadd.f32 %v1067, %v1005
    %v1069 = vadd.f32 %v1068, %v1006
    %v1070 = vadd.f32 %v1069, %v1007
    %v1071 = vadd.f32 %v1070, %v1008
    %v1072 = vadd.f32 %v1071, %v1009
    %v1073 = vadd.f32 %v1072, %v1010
    %v1074 = vadd.f32 %v1073, %v1011
    %v1075 = vadd.f32 %v1074, %v1012
    %v1076 = vadd.f32 %v1075, %v1013
    %v1077 = vadd.f32 %v1076, %v1014
    %v1078 = vadd.f32 %v1077, %v1015
    %v1079 = vadd.f32 %v1078, %v1016
    %v1080 = vadd.f32 %v1079, %v1017
    %v1081 = vadd.f32 %v1080, %v1018
    %v1082 = vadd.f32 %v1081, %v1019
    %v1083 = vadd.f32 %v1082, %v1020
    %v1084 = vadd.f32 %v1083, %v1021
    %v1085 = vadd.f32 %v1084, %v1022
    %v1086 = vadd.f32 %v1085, %v1023
    %v1087 = vadd.f32 %v1086, %v1024
    %v1088 = vadd.f32 %v1087, %v1025
    %v1089 = vadd.f32 %v1088, %v1026
    %v1090 = vadd.f32 %v1089, %v1027
    %v1091 = vadd.f32 %v1090, %v1028
    %v1092 = vadd.f32 %v1091, %v1029
    %v1093 = vadd.f32 %v1092, %v1030
    %v1094 = vadd.f32 %v1093, %v1031
    %v1095 = vadd.f32 %v1094, %v1032
    %v1096 = vadd.f32 %v1095, %v1033
    %v1097 = vadd.f32 %v1096, %v1034
    %v1098 = vadd.f32 %v1097, %v1035
    %v1099 = vadd.f32 %v1098, %v1036
    %v1100 = vadd.f32 %v1099, %v1037
    %v1101 = vadd.f32 %v1100, %v1038
    %v1102 = vadd.f32 %v1101, %v1039
    %v1103 = vadd.f32 %v975, %v1102
    %1104 = vst [vmem:[#allocation7] sm:$0xff] %v1103
    %v1105 = vld [vmem:[%s324] sm:$0xff]
    %v1106 = vadd.f32 %v846, %v911
    %v1107 = vadd.f32 %v847, %v912
    %v1108 = vadd.f32 %v848, %v913
    %v1109 = vadd.f32 %v849, %v914
    %v1110 = vadd.f32 %v850, %v915
    %v1111 = vadd.f32 %v851, %v916
    %v1112 = vadd.f32 %v852, %v917
    %v1113 = vadd.f32 %v853, %v918
    %v1114 = vadd.f32 %v854, %v919
    %v1115 = vadd.f32 %v855, %v920
    %v1116 = vadd.f32 %v856, %v921
    %v1117 = vadd.f32 %v857, %v922
    %v1118 = vadd.f32 %v858, %v923
    %v1119 = vadd.f32 %v859, %v924
    %v1120 = vadd.f32 %v860, %v925
    %v1121 = vadd.f32 %v861, %v926
    %v1122 = vadd.f32 %v862, %v927
    %v1123 = vadd.f32 %v863, %v928
    %v1124 = vadd.f32 %v864, %v929
    %v1125 = vadd.f32 %v865, %v930
    %v1126 = vadd.f32 %v866, %v931
    %v1127 = vadd.f32 %v867, %v932
    %v1128 = vadd.f32 %v868, %v933
    %v1129 = vadd.f32 %v869, %v934
    %v1130 = vadd.f32 %v870, %v935
    %v1131 = vadd.f32 %v871, %v936
    %v1132 = vadd.f32 %v872, %v937
    %v1133 = vadd.f32 %v873, %v938
    %v1134 = vadd.f32 %v874, %v939
    %v1135 = vadd.f32 %v875, %v940
    %v1136 = vadd.f32 %v876, %v941
    %v1137 = vadd.f32 %v877, %v942
    %v1138 = vadd.f32 %v878, %v943
    %v1139 = vadd.f32 %v879, %v944
    %v1140 = vadd.f32 %v880, %v945
    %v1141 = vadd.f32 %v881, %v946
    %v1142 = vadd.f32 %v882, %v947
    %v1143 = vadd.f32 %v883, %v948
    %v1144 = vadd.f32 %v884, %v949
    %v1145 = vadd.f32 %v885, %v950
    %v1146 = vadd.f32 %v886, %v951
    %v1147 = vadd.f32 %v887, %v952
    %v1148 = vadd.f32 %v888, %v953
    %v1149 = vadd.f32 %v889, %v954
    %v1150 = vadd.f32 %v890, %v955
    %v1151 = vadd.f32 %v891, %v956
    %v1152 = vadd.f32 %v892, %v957
    %v1153 = vadd.f32 %v893, %v958
    %v1154 = vadd.f32 %v894, %v959
    %v1155 = vadd.f32 %v895, %v960
    %v1156 = vadd.f32 %v896, %v961
    %v1157 = vadd.f32 %v897, %v962
    %v1158 = vadd.f32 %v898, %v963
    %v1159 = vadd.f32 %v899, %v964
    %v1160 = vadd.f32 %v900, %v965
    %v1161 = vadd.f32 %v901, %v966
    %v1162 = vadd.f32 %v902, %v967
    %v1163 = vadd.f32 %v903, %v968
    %v1164 = vadd.f32 %v904, %v969
    %v1165 = vadd.f32 %v905, %v970
    %v1166 = vadd.f32 %v906, %v971
    %v1167 = vadd.f32 %v907, %v972
    %v1168 = vadd.f32 %v908, %v973
    %v1169 = vadd.f32 %v909, %v974
    %v1170 = vadd.f32 %v1106, %v1107
    %v1171 = vadd.f32 %v1170, %v1108
    %v1172 = vadd.f32 %v1171, %v1109
    %v1173 = vadd.f32 %v1172, %v1110
    %v1174 = vadd.f32 %v1173, %v1111
    %v1175 = vadd.f32 %v1174, %v1112
    %v1176 = vadd.f32 %v1175, %v1113
    %v1177 = vadd.f32 %v1176, %v1114
    %v1178 = vadd.f32 %v1177, %v1115
    %v1179 = vadd.f32 %v1178, %v1116
    %v1180 = vadd.f32 %v1179, %v1117
    %v1181 = vadd.f32 %v1180, %v1118
    %v1182 = vadd.f32 %v1181, %v1119
    %v1183 = vadd.f32 %v1182, %v1120
    %v1184 = vadd.f32 %v1183, %v1121
    %v1185 = vadd.f32 %v1184, %v1122
    %v1186 = vadd.f32 %v1185, %v1123
    %v1187 = vadd.f32 %v1186, %v1124
    %v1188 = vadd.f32 %v1187, %v1125
    %v1189 = vadd.f32 %v1188, %v1126
    %v1190 = vadd.f32 %v1189, %v1127
    %v1191 = vadd.f32 %v1190, %v1128
    %v1192 = vadd.f32 %v1191, %v1129
    %v1193 = vadd.f32 %v1192, %v1130
    %v1194 = vadd.f32 %v1193, %v1131
    %v1195 = vadd.f32 %v1194, %v1132
    %v1196 = vadd.f32 %v1195, %v1133
    %v1197 = vadd.f32 %v1196, %v1134
    %v1198 = vadd.f32 %v1197, %v1135
    %v1199 = vadd.f32 %v1198, %v1136
    %v1200 = vadd.f32 %v1199, %v1137
    %v1201 = vadd.f32 %v1200, %v1138
    %v1202 = vadd.f32 %v1201, %v1139
    %v1203 = vadd.f32 %v1202, %v1140
    %v1204 = vadd.f32 %v1203, %v1141
    %v1205 = vadd.f32 %v1204, %v1142
    %v1206 = vadd.f32 %v1205, %v1143
    %v1207 = vadd.f32 %v1206, %v1144
    %v1208 = vadd.f32 %v1207, %v1145
    %v1209 = vadd.f32 %v1208, %v1146
    %v1210 = vadd.f32 %v1209, %v1147
    %v1211 = vadd.f32 %v1210, %v1148
    %v1212 = vadd.f32 %v1211, %v1149
    %v1213 = vadd.f32 %v1212, %v1150
    %v1214 = vadd.f32 %v1213, %v1151
    %v1215 = vadd.f32 %v1214, %v1152
    %v1216 = vadd.f32 %v1215, %v1153
    %v1217 = vadd.f32 %v1216, %v1154
    %v1218 = vadd.f32 %v1217, %v1155
    %v1219 = vadd.f32 %v1218, %v1156
    %v1220 = vadd.f32 %v1219, %v1157
    %v1221 = vadd.f32 %v1220, %v1158
    %v1222 = vadd.f32 %v1221, %v1159
    %v1223 = vadd.f32 %v1222, %v1160
    %v1224 = vadd.f32 %v1223, %v1161
    %v1225 = vadd.f32 %v1224, %v1162
    %v1226 = vadd.f32 %v1225, %v1163
    %v1227 = vadd.f32 %v1226, %v1164
    %v1228 = vadd.f32 %v1227, %v1165
    %v1229 = vadd.f32 %v1228, %v1166
    %v1230 = vadd.f32 %v1229, %v1167
    %v1231 = vadd.f32 %v1230, %v1168
    %v1232 = vadd.f32 %v1231, %v1169
    %v1233 = vadd.f32 %v1105, %v1232
    %1234 = vst [vmem:[%s324] sm:$0xff] %v1233
    %s1235 = scalar_lea.vmem [#allocation2], 1536
    %v1236 = vld [vmem:[%s1235] sm:$0xff]
    %v1237 = vld [vmem:[%s1235 + $0x8] sm:$0xff]
    %v1238 = vld [vmem:[%s1235 + $0x10] sm:$0xff]
    %v1239 = vld [vmem:[%s1235 + $0x18] sm:$0xff]
    %v1240 = vld [vmem:[%s1235 + $0x20] sm:$0xff]
    %v1241 = vld [vmem:[%s1235 + $0x28] sm:$0xff]
    %v1242 = vld [vmem:[%s1235 + $0x30] sm:$0xff]
    %v1243 = vld [vmem:[%s1235 + $0x38] sm:$0xff]
    %v1244 = vld [vmem:[%s1235 + $0x40] sm:$0xff]
    %v1245 = vld [vmem:[%s1235 + $0x48] sm:$0xff]
    %v1246 = vld [vmem:[%s1235 + $0x50] sm:$0xff]
    %v1247 = vld [vmem:[%s1235 + $0x58] sm:$0xff]
    %v1248 = vld [vmem:[%s1235 + $0x60] sm:$0xff]
    %v1249 = vld [vmem:[%s1235 + $0x68] sm:$0xff]
    %v1250 = vld [vmem:[%s1235 + $0x70] sm:$0xff]
    %v1251 = vld [vmem:[%s1235 + $0x78] sm:$0xff]
    %v1252 = vld [vmem:[%s1235 + $0x80] sm:$0xff]
    %v1253 = vld [vmem:[%s1235 + $0x88] sm:$0xff]
    %v1254 = vld [vmem:[%s1235 + $0x90] sm:$0xff]
    %v1255 = vld [vmem:[%s1235 + $0x98] sm:$0xff]
    %v1256 = vld [vmem:[%s1235 + $0xa0] sm:$0xff]
    %v1257 = vld [vmem:[%s1235 + $0xa8] sm:$0xff]
    %v1258 = vld [vmem:[%s1235 + $0xb0] sm:$0xff]
    %v1259 = vld [vmem:[%s1235 + $0xb8] sm:$0xff]
    %v1260 = vld [vmem:[%s1235 + $0xc0] sm:$0xff]
    %v1261 = vld [vmem:[%s1235 + $0xc8] sm:$0xff]
    %v1262 = vld [vmem:[%s1235 + $0xd0] sm:$0xff]
    %v1263 = vld [vmem:[%s1235 + $0xd8] sm:$0xff]
    %v1264 = vld [vmem:[%s1235 + $0xe0] sm:$0xff]
    %v1265 = vld [vmem:[%s1235 + $0xe8] sm:$0xff]
    %v1266 = vld [vmem:[%s1235 + $0xf0] sm:$0xff]
    %v1267 = vld [vmem:[%s1235 + $0xf8] sm:$0xff]
    %v1268 = vld [vmem:[%s1235 + $0x100] sm:$0xff]
    %v1269 = vld [vmem:[%s1235 + $0x108] sm:$0xff]
    %v1270 = vld [vmem:[%s1235 + $0x110] sm:$0xff]
    %v1271 = vld [vmem:[%s1235 + $0x118] sm:$0xff]
    %v1272 = vld [vmem:[%s1235 + $0x120] sm:$0xff]
    %v1273 = vld [vmem:[%s1235 + $0x128] sm:$0xff]
    %v1274 = vld [vmem:[%s1235 + $0x130] sm:$0xff]
    %v1275 = vld [vmem:[%s1235 + $0x138] sm:$0xff]
    %v1276 = vld [vmem:[%s1235 + $0x140] sm:$0xff]
    %v1277 = vld [vmem:[%s1235 + $0x148] sm:$0xff]
    %v1278 = vld [vmem:[%s1235 + $0x150] sm:$0xff]
    %v1279 = vld [vmem:[%s1235 + $0x158] sm:$0xff]
    %v1280 = vld [vmem:[%s1235 + $0x160] sm:$0xff]
    %v1281 = vld [vmem:[%s1235 + $0x168] sm:$0xff]
    %v1282 = vld [vmem:[%s1235 + $0x170] sm:$0xff]
    %v1283 = vld [vmem:[%s1235 + $0x178] sm:$0xff]
    %v1284 = vld [vmem:[%s1235 + $0x180] sm:$0xff]
    %v1285 = vld [vmem:[%s1235 + $0x188] sm:$0xff]
    %v1286 = vld [vmem:[%s1235 + $0x190] sm:$0xff]
    %v1287 = vld [vmem:[%s1235 + $0x198] sm:$0xff]
    %v1288 = vld [vmem:[%s1235 + $0x1a0] sm:$0xff]
    %v1289 = vld [vmem:[%s1235 + $0x1a8] sm:$0xff]
    %v1290 = vld [vmem:[%s1235 + $0x1b0] sm:$0xff]
    %v1291 = vld [vmem:[%s1235 + $0x1b8] sm:$0xff]
    %v1292 = vld [vmem:[%s1235 + $0x1c0] sm:$0xff]
    %v1293 = vld [vmem:[%s1235 + $0x1c8] sm:$0xff]
    %v1294 = vld [vmem:[%s1235 + $0x1d0] sm:$0xff]
    %v1295 = vld [vmem:[%s1235 + $0x1d8] sm:$0xff]
    %v1296 = vld [vmem:[%s1235 + $0x1e0] sm:$0xff]
    %v1297 = vld [vmem:[%s1235 + $0x1e8] sm:$0xff]
    %v1298 = vld [vmem:[%s1235 + $0x1f0] sm:$0xff]
    %v1299 = vld [vmem:[%s1235 + $0x1f8] sm:$0xff]
    %s1300 = scalar_lea.vmem [#allocation5], 1536
    %v1301 = vld [vmem:[%s1300] sm:$0xff]
    %v1302 = vld [vmem:[%s1300 + $0x8] sm:$0xff]
    %v1303 = vld [vmem:[%s1300 + $0x10] sm:$0xff]
    %v1304 = vld [vmem:[%s1300 + $0x18] sm:$0xff]
    %v1305 = vld [vmem:[%s1300 + $0x20] sm:$0xff]
    %v1306 = vld [vmem:[%s1300 + $0x28] sm:$0xff]
    %v1307 = vld [vmem:[%s1300 + $0x30] sm:$0xff]
    %v1308 = vld [vmem:[%s1300 + $0x38] sm:$0xff]
    %v1309 = vld [vmem:[%s1300 + $0x40] sm:$0xff]
    %v1310 = vld [vmem:[%s1300 + $0x48] sm:$0xff]
    %v1311 = vld [vmem:[%s1300 + $0x50] sm:$0xff]
    %v1312 = vld [vmem:[%s1300 + $0x58] sm:$0xff]
    %v1313 = vld [vmem:[%s1300 + $0x60] sm:$0xff]
    %v1314 = vld [vmem:[%s1300 + $0x68] sm:$0xff]
    %v1315 = vld [vmem:[%s1300 + $0x70] sm:$0xff]
    %v1316 = vld [vmem:[%s1300 + $0x78] sm:$0xff]
    %v1317 = vld [vmem:[%s1300 + $0x80] sm:$0xff]
    %v1318 = vld [vmem:[%s1300 + $0x88] sm:$0xff]
    %v1319 = vld [vmem:[%s1300 + $0x90] sm:$0xff]
    %v1320 = vld [vmem:[%s1300 + $0x98] sm:$0xff]
    %v1321 = vld [vmem:[%s1300 + $0xa0] sm:$0xff]
    %v1322 = vld [vmem:[%s1300 + $0xa8] sm:$0xff]
    %v1323 = vld [vmem:[%s1300 + $0xb0] sm:$0xff]
    %v1324 = vld [vmem:[%s1300 + $0xb8] sm:$0xff]
    %v1325 = vld [vmem:[%s1300 + $0xc0] sm:$0xff]
    %v1326 = vld [vmem:[%s1300 + $0xc8] sm:$0xff]
    %v1327 = vld [vmem:[%s1300 + $0xd0] sm:$0xff]
    %v1328 = vld [vmem:[%s1300 + $0xd8] sm:$0xff]
    %v1329 = vld [vmem:[%s1300 + $0xe0] sm:$0xff]
    %v1330 = vld [vmem:[%s1300 + $0xe8] sm:$0xff]
    %v1331 = vld [vmem:[%s1300 + $0xf0] sm:$0xff]
    %v1332 = vld [vmem:[%s1300 + $0xf8] sm:$0xff]
    %v1333 = vld [vmem:[%s1300 + $0x100] sm:$0xff]
    %v1334 = vld [vmem:[%s1300 + $0x108] sm:$0xff]
    %v1335 = vld [vmem:[%s1300 + $0x110] sm:$0xff]
    %v1336 = vld [vmem:[%s1300 + $0x118] sm:$0xff]
    %v1337 = vld [vmem:[%s1300 + $0x120] sm:$0xff]
    %v1338 = vld [vmem:[%s1300 + $0x128] sm:$0xff]
    %v1339 = vld [vmem:[%s1300 + $0x130] sm:$0xff]
    %v1340 = vld [vmem:[%s1300 + $0x138] sm:$0xff]
    %v1341 = vld [vmem:[%s1300 + $0x140] sm:$0xff]
    %v1342 = vld [vmem:[%s1300 + $0x148] sm:$0xff]
    %v1343 = vld [vmem:[%s1300 + $0x150] sm:$0xff]
    %v1344 = vld [vmem:[%s1300 + $0x158] sm:$0xff]
    %v1345 = vld [vmem:[%s1300 + $0x160] sm:$0xff]
    %v1346 = vld [vmem:[%s1300 + $0x168] sm:$0xff]
    %v1347 = vld [vmem:[%s1300 + $0x170] sm:$0xff]
    %v1348 = vld [vmem:[%s1300 + $0x178] sm:$0xff]
    %v1349 = vld [vmem:[%s1300 + $0x180] sm:$0xff]
    %v1350 = vld [vmem:[%s1300 + $0x188] sm:$0xff]
    %v1351 = vld [vmem:[%s1300 + $0x190] sm:$0xff]
    %v1352 = vld [vmem:[%s1300 + $0x198] sm:$0xff]
    %v1353 = vld [vmem:[%s1300 + $0x1a0] sm:$0xff]
    %v1354 = vld [vmem:[%s1300 + $0x1a8] sm:$0xff]
    %v1355 = vld [vmem:[%s1300 + $0x1b0] sm:$0xff]
    %v1356 = vld [vmem:[%s1300 + $0x1b8] sm:$0xff]
    %v1357 = vld [vmem:[%s1300 + $0x1c0] sm:$0xff]
    %v1358 = vld [vmem:[%s1300 + $0x1c8] sm:$0xff]
    %v1359 = vld [vmem:[%s1300 + $0x1d0] sm:$0xff]
    %v1360 = vld [vmem:[%s1300 + $0x1d8] sm:$0xff]
    %v1361 = vld [vmem:[%s1300 + $0x1e0] sm:$0xff]
    %v1362 = vld [vmem:[%s1300 + $0x1e8] sm:$0xff]
    %v1363 = vld [vmem:[%s1300 + $0x1f0] sm:$0xff]
    %v1364 = vld [vmem:[%s1300 + $0x1f8] sm:$0xff]
    %v1365 = vld [vmem:[#allocation7] sm:$0xff]
    %v1366 = vmul.f32 %v1236, %v1301
    %v1367 = vmul.f32 %v1237, %v1302
    %v1368 = vmul.f32 %v1238, %v1303
    %v1369 = vmul.f32 %v1239, %v1304
    %v1370 = vmul.f32 %v1240, %v1305
    %v1371 = vmul.f32 %v1241, %v1306
    %v1372 = vmul.f32 %v1242, %v1307
    %v1373 = vmul.f32 %v1243, %v1308
    %v1374 = vmul.f32 %v1244, %v1309
    %v1375 = vmul.f32 %v1245, %v1310
    %v1376 = vmul.f32 %v1246, %v1311
    %v1377 = vmul.f32 %v1247, %v1312
    %v1378 = vmul.f32 %v1248, %v1313
    %v1379 = vmul.f32 %v1249, %v1314
    %v1380 = vmul.f32 %v1250, %v1315
    %v1381 = vmul.f32 %v1251, %v1316
    %v1382 = vmul.f32 %v1252, %v1317
    %v1383 = vmul.f32 %v1253, %v1318
    %v1384 = vmul.f32 %v1254, %v1319
    %v1385 = vmul.f32 %v1255, %v1320
    %v1386 = vmul.f32 %v1256, %v1321
    %v1387 = vmul.f32 %v1257, %v1322
    %v1388 = vmul.f32 %v1258, %v1323
    %v1389 = vmul.f32 %v1259, %v1324
    %v1390 = vmul.f32 %v1260, %v1325
    %v1391 = vmul.f32 %v1261, %v1326
    %v1392 = vmul.f32 %v1262, %v1327
    %v1393 = vmul.f32 %v1263, %v1328
    %v1394 = vmul.f32 %v1264, %v1329
    %v1395 = vmul.f32 %v1265, %v1330
    %v1396 = vmul.f32 %v1266, %v1331
    %v1397 = vmul.f32 %v1267, %v1332
    %v1398 = vmul.f32 %v1268, %v1333
    %v1399 = vmul.f32 %v1269, %v1334
    %v1400 = vmul.f32 %v1270, %v1335
    %v1401 = vmul.f32 %v1271, %v1336
    %v1402 = vmul.f32 %v1272, %v1337
    %v1403 = vmul.f32 %v1273, %v1338
    %v1404 = vmul.f32 %v1274, %v1339
    %v1405 = vmul.f32 %v1275, %v1340
    %v1406 = vmul.f32 %v1276, %v1341
    %v1407 = vmul.f32 %v1277, %v1342
    %v1408 = vmul.f32 %v1278, %v1343
    %v1409 = vmul.f32 %v1279, %v1344
    %v1410 = vmul.f32 %v1280, %v1345
    %v1411 = vmul.f32 %v1281, %v1346
    %v1412 = vmul.f32 %v1282, %v1347
    %v1413 = vmul.f32 %v1283, %v1348
    %v1414 = vmul.f32 %v1284, %v1349
    %v1415 = vmul.f32 %v1285, %v1350
    %v1416 = vmul.f32 %v1286, %v1351
    %v1417 = vmul.f32 %v1287, %v1352
    %v1418 = vmul.f32 %v1288, %v1353
    %v1419 = vmul.f32 %v1289, %v1354
    %v1420 = vmul.f32 %v1290, %v1355
    %v1421 = vmul.f32 %v1291, %v1356
    %v1422 = vmul.f32 %v1292, %v1357
    %v1423 = vmul.f32 %v1293, %v1358
    %v1424 = vmul.f32 %v1294, %v1359
    %v1425 = vmul.f32 %v1295, %v1360
    %v1426 = vmul.f32 %v1296, %v1361
    %v1427 = vmul.f32 %v1297, %v1362
    %v1428 = vmul.f32 %v1298, %v1363
    %v1429 = vmul.f32 %v1299, %v1364
    %v1430 = vadd.f32 %v1366, %v1367
    %v1431 = vadd.f32 %v1430, %v1368
    %v1432 = vadd.f32 %v1431, %v1369
    %v1433 = vadd.f32 %v1432, %v1370
    %v1434 = vadd.f32 %v1433, %v1371
    %v1435 = vadd.f32 %v1434, %v1372
    %v1436 = vadd.f32 %v1435, %v1373
    %v1437 = vadd.f32 %v1436, %v1374
    %v1438 = vadd.f32 %v1437, %v1375
    %v1439 = vadd.f32 %v1438, %v1376
    %v1440 = vadd.f32 %v1439, %v1377
    %v1441 = vadd.f32 %v1440, %v1378
    %v1442 = vadd.f32 %v1441, %v1379
    %v1443 = vadd.f32 %v1442, %v1380
    %v1444 = vadd.f32 %v1443, %v1381
    %v1445 = vadd.f32 %v1444, %v1382
    %v1446 = vadd.f32 %v1445, %v1383
    %v1447 = vadd.f32 %v1446, %v1384
    %v1448 = vadd.f32 %v1447, %v1385
    %v1449 = vadd.f32 %v1448, %v1386
    %v1450 = vadd.f32 %v1449, %v1387
    %v1451 = vadd.f32 %v1450, %v1388
    %v1452 = vadd.f32 %v1451, %v1389
    %v1453 = vadd.f32 %v1452, %v1390
    %v1454 = vadd.f32 %v1453, %v1391
    %v1455 = vadd.f32 %v1454, %v1392
    %v1456 = vadd.f32 %v1455, %v1393
    %v1457 = vadd.f32 %v1456, %v1394
    %v1458 = vadd.f32 %v1457, %v1395
    %v1459 = vadd.f32 %v1458, %v1396
    %v1460 = vadd.f32 %v1459, %v1397
    %v1461 = vadd.f32 %v1460, %v1398
    %v1462 = vadd.f32 %v1461, %v1399
    %v1463 = vadd.f32 %v1462, %v1400
    %v1464 = vadd.f32 %v1463, %v1401
    %v1465 = vadd.f32 %v1464, %v1402
    %v1466 = vadd.f32 %v1465, %v1403
    %v1467 = vadd.f32 %v1466, %v1404
    %v1468 = vadd.f32 %v1467, %v1405
    %v1469 = vadd.f32 %v1468, %v1406
    %v1470 = vadd.f32 %v1469, %v1407
    %v1471 = vadd.f32 %v1470, %v1408
    %v1472 = vadd.f32 %v1471, %v1409
    %v1473 = vadd.f32 %v1472, %v1410
    %v1474 = vadd.f32 %v1473, %v1411
    %v1475 = vadd.f32 %v1474, %v1412
    %v1476 = vadd.f32 %v1475, %v1413
    %v1477 = vadd.f32 %v1476, %v1414
    %v1478 = vadd.f32 %v1477, %v1415
    %v1479 = vadd.f32 %v1478, %v1416
    %v1480 = vadd.f32 %v1479, %v1417
    %v1481 = vadd.f32 %v1480, %v1418
    %v1482 = vadd.f32 %v1481, %v1419
    %v1483 = vadd.f32 %v1482, %v1420
    %v1484 = vadd.f32 %v1483, %v1421
    %v1485 = vadd.f32 %v1484, %v1422
    %v1486 = vadd.f32 %v1485, %v1423
    %v1487 = vadd.f32 %v1486, %v1424
    %v1488 = vadd.f32 %v1487, %v1425
    %v1489 = vadd.f32 %v1488, %v1426
    %v1490 = vadd.f32 %v1489, %v1427
    %v1491 = vadd.f32 %v1490, %v1428
    %v1492 = vadd.f32 %v1491, %v1429
    %v1493 = vadd.f32 %v1365, %v1492
    %1494 = vst [vmem:[#allocation7] sm:$0xff] %v1493
    %v1495 = vld [vmem:[%s324] sm:$0xff]
    %v1496 = vadd.f32 %v1236, %v1301
    %v1497 = vadd.f32 %v1237, %v1302
    %v1498 = vadd.f32 %v1238, %v1303
    %v1499 = vadd.f32 %v1239, %v1304
    %v1500 = vadd.f32 %v1240, %v1305
    %v1501 = vadd.f32 %v1241, %v1306
    %v1502 = vadd.f32 %v1242, %v1307
    %v1503 = vadd.f32 %v1243, %v1308
    %v1504 = vadd.f32 %v1244, %v1309
    %v1505 = vadd.f32 %v1245, %v1310
    %v1506 = vadd.f32 %v1246, %v1311
    %v1507 = vadd.f32 %v1247, %v1312
    %v1508 = vadd.f32 %v1248, %v1313
    %v1509 = vadd.f32 %v1249, %v1314
    %v1510 = vadd.f32 %v1250, %v1315
    %v1511 = vadd.f32 %v1251, %v1316
    %v1512 = vadd.f32 %v1252, %v1317
    %v1513 = vadd.f32 %v1253, %v1318
    %v1514 = vadd.f32 %v1254, %v1319
    %v1515 = vadd.f32 %v1255, %v1320
    %v1516 = vadd.f32 %v1256, %v1321
    %v1517 = vadd.f32 %v1257, %v1322
    %v1518 = vadd.f32 %v1258, %v1323
    %v1519 = vadd.f32 %v1259, %v1324
    %v1520 = vadd.f32 %v1260, %v1325
    %v1521 = vadd.f32 %v1261, %v1326
    %v1522 = vadd.f32 %v1262, %v1327
    %v1523 = vadd.f32 %v1263, %v1328
    %v1524 = vadd.f32 %v1264, %v1329
    %v1525 = vadd.f32 %v1265, %v1330
    %v1526 = vadd.f32 %v1266, %v1331
    %v1527 = vadd.f32 %v1267, %v1332
    %v1528 = vadd.f32 %v1268, %v1333
    %v1529 = vadd.f32 %v1269, %v1334
    %v1530 = vadd.f32 %v1270, %v1335
    %v1531 = vadd.f32 %v1271, %v1336
    %v1532 = vadd.f32 %v1272, %v1337
    %v1533 = vadd.f32 %v1273, %v1338
    %v1534 = vadd.f32 %v1274, %v1339
    %v1535 = vadd.f32 %v1275, %v1340
    %v1536 = vadd.f32 %v1276, %v1341
    %v1537 = vadd.f32 %v1277, %v1342
    %v1538 = vadd.f32 %v1278, %v1343
    %v1539 = vadd.f32 %v1279, %v1344
    %v1540 = vadd.f32 %v1280, %v1345
    %v1541 = vadd.f32 %v1281, %v1346
    %v1542 = vadd.f32 %v1282, %v1347
    %v1543 = vadd.f32 %v1283, %v1348
    %v1544 = vadd.f32 %v1284, %v1349
    %v1545 = vadd.f32 %v1285, %v1350
    %v1546 = vadd.f32 %v1286, %v1351
    %v1547 = vadd.f32 %v1287, %v1352
    %v1548 = vadd.f32 %v1288, %v1353
    %v1549 = vadd.f32 %v1289, %v1354
    %v1550 = vadd.f32 %v1290, %v1355
    %v1551 = vadd.f32 %v1291, %v1356
    %v1552 = vadd.f32 %v1292, %v1357
    %v1553 = vadd.f32 %v1293, %v1358
    %v1554 = vadd.f32 %v1294, %v1359
    %v1555 = vadd.f32 %v1295, %v1360
    %v1556 = vadd.f32 %v1296, %v1361
    %v1557 = vadd.f32 %v1297, %v1362
    %v1558 = vadd.f32 %v1298, %v1363
    %v1559 = vadd.f32 %v1299, %v1364
    %v1560 = vadd.f32 %v1496, %v1497
    %v1561 = vadd.f32 %v1560, %v1498
    %v1562 = vadd.f32 %v1561, %v1499
    %v1563 = vadd.f32 %v1562, %v1500
    %v1564 = vadd.f32 %v1563, %v1501
    %v1565 = vadd.f32 %v1564, %v1502
    %v1566 = vadd.f32 %v1565, %v1503
    %v1567 = vadd.f32 %v1566, %v1504
    %v1568 = vadd.f32 %v1567, %v1505
    %v1569 = vadd.f32 %v1568, %v1506
    %v1570 = vadd.f32 %v1569, %v1507
    %v1571 = vadd.f32 %v1570, %v1508
    %v1572 = vadd.f32 %v1571, %v1509
    %v1573 = vadd.f32 %v1572, %v1510
    %v1574 = vadd.f32 %v1573, %v1511
    %v1575 = vadd.f32 %v1574, %v1512
    %v1576 = vadd.f32 %v1575, %v1513
    %v1577 = vadd.f32 %v1576, %v1514
    %v1578 = vadd.f32 %v1577, %v1515
    %v1579 = vadd.f32 %v1578, %v1516
    %v1580 = vadd.f32 %v1579, %v1517
    %v1581 = vadd.f32 %v1580, %v1518
    %v1582 = vadd.f32 %v1581, %v1519
    %v1583 = vadd.f32 %v1582, %v1520
    %v1584 = vadd.f32 %v1583, %v1521
    %v1585 = vadd.f32 %v1584, %v1522
    %v1586 = vadd.f32 %v1585, %v1523
    %v1587 = vadd.f32 %v1586, %v1524
    %v1588 = vadd.f32 %v1587, %v1525
    %v1589 = vadd.f32 %v1588, %v1526
    %v1590 = vadd.f32 %v1589, %v1527
    %v1591 = vadd.f32 %v1590, %v1528
    %v1592 = vadd.f32 %v1591, %v1529
    %v1593 = vadd.f32 %v1592, %v1530
    %v1594 = vadd.f32 %v1593, %v1531
    %v1595 = vadd.f32 %v1594, %v1532
    %v1596 = vadd.f32 %v1595, %v1533
    %v1597 = vadd.f32 %v1596, %v1534
    %v1598 = vadd.f32 %v1597, %v1535
    %v1599 = vadd.f32 %v1598, %v1536
    %v1600 = vadd.f32 %v1599, %v1537
    %v1601 = vadd.f32 %v1600, %v1538
    %v1602 = vadd.f32 %v1601, %v1539
    %v1603 = vadd.f32 %v1602, %v1540
    %v1604 = vadd.f32 %v1603, %v1541
    %v1605 = vadd.f32 %v1604, %v1542
    %v1606 = vadd.f32 %v1605, %v1543
    %v1607 = vadd.f32 %v1606, %v1544
    %v1608 = vadd.f32 %v1607, %v1545
    %v1609 = vadd.f32 %v1608, %v1546
    %v1610 = vadd.f32 %v1609, %v1547
    %v1611 = vadd.f32 %v1610, %v1548
    %v1612 = vadd.f32 %v1611, %v1549
    %v1613 = vadd.f32 %v1612, %v1550
    %v1614 = vadd.f32 %v1613, %v1551
    %v1615 = vadd.f32 %v1614, %v1552
    %v1616 = vadd.f32 %v1615, %v1553
    %v1617 = vadd.f32 %v1616, %v1554
    %v1618 = vadd.f32 %v1617, %v1555
    %v1619 = vadd.f32 %v1618, %v1556
    %v1620 = vadd.f32 %v1619, %v1557
    %v1621 = vadd.f32 %v1620, %v1558
    %v1622 = vadd.f32 %v1621, %v1559
    %v1623 = vadd.f32 %v1495, %v1622
    %1624 = vst [vmem:[%s324] sm:$0xff] %v1623
    %s1625 = scalar_lea.vmem [#allocation2], 2048
    %v1626 = vld [vmem:[%s1625] sm:$0xff]
    %v1627 = vld [vmem:[%s1625 + $0x8] sm:$0xff]
    %v1628 = vld [vmem:[%s1625 + $0x10] sm:$0xff]
    %v1629 = vld [vmem:[%s1625 + $0x18] sm:$0xff]
    %v1630 = vld [vmem:[%s1625 + $0x20] sm:$0xff]
    %v1631 = vld [vmem:[%s1625 + $0x28] sm:$0xff]
    %v1632 = vld [vmem:[%s1625 + $0x30] sm:$0xff]
    %v1633 = vld [vmem:[%s1625 + $0x38] sm:$0xff]
    %v1634 = vld [vmem:[%s1625 + $0x40] sm:$0xff]
    %v1635 = vld [vmem:[%s1625 + $0x48] sm:$0xff]
    %v1636 = vld [vmem:[%s1625 + $0x50] sm:$0xff]
    %v1637 = vld [vmem:[%s1625 + $0x58] sm:$0xff]
    %v1638 = vld [vmem:[%s1625 + $0x60] sm:$0xff]
    %v1639 = vld [vmem:[%s1625 + $0x68] sm:$0xff]
    %v1640 = vld [vmem:[%s1625 + $0x70] sm:$0xff]
    %v1641 = vld [vmem:[%s1625 + $0x78] sm:$0xff]
    %v1642 = vld [vmem:[%s1625 + $0x80] sm:$0xff]
    %v1643 = vld [vmem:[%s1625 + $0x88] sm:$0xff]
    %v1644 = vld [vmem:[%s1625 + $0x90] sm:$0xff]
    %v1645 = vld [vmem:[%s1625 + $0x98] sm:$0xff]
    %v1646 = vld [vmem:[%s1625 + $0xa0] sm:$0xff]
    %v1647 = vld [vmem:[%s1625 + $0xa8] sm:$0xff]
    %v1648 = vld [vmem:[%s1625 + $0xb0] sm:$0xff]
    %v1649 = vld [vmem:[%s1625 + $0xb8] sm:$0xff]
    %v1650 = vld [vmem:[%s1625 + $0xc0] sm:$0xff]
    %v1651 = vld [vmem:[%s1625 + $0xc8] sm:$0xff]
    %v1652 = vld [vmem:[%s1625 + $0xd0] sm:$0xff]
    %v1653 = vld [vmem:[%s1625 + $0xd8] sm:$0xff]
    %v1654 = vld [vmem:[%s1625 + $0xe0] sm:$0xff]
    %v1655 = vld [vmem:[%s1625 + $0xe8] sm:$0xff]
    %v1656 = vld [vmem:[%s1625 + $0xf0] sm:$0xff]
    %v1657 = vld [vmem:[%s1625 + $0xf8] sm:$0xff]
    %v1658 = vld [vmem:[%s1625 + $0x100] sm:$0xff]
    %v1659 = vld [vmem:[%s1625 + $0x108] sm:$0xff]
    %v1660 = vld [vmem:[%s1625 + $0x110] sm:$0xff]
    %v1661 = vld [vmem:[%s1625 + $0x118] sm:$0xff]
    %v1662 = vld [vmem:[%s1625 + $0x120] sm:$0xff]
    %v1663 = vld [vmem:[%s1625 + $0x128] sm:$0xff]
    %v1664 = vld [vmem:[%s1625 + $0x130] sm:$0xff]
    %v1665 = vld [vmem:[%s1625 + $0x138] sm:$0xff]
    %v1666 = vld [vmem:[%s1625 + $0x140] sm:$0xff]
    %v1667 = vld [vmem:[%s1625 + $0x148] sm:$0xff]
    %v1668 = vld [vmem:[%s1625 + $0x150] sm:$0xff]
    %v1669 = vld [vmem:[%s1625 + $0x158] sm:$0xff]
    %v1670 = vld [vmem:[%s1625 + $0x160] sm:$0xff]
    %v1671 = vld [vmem:[%s1625 + $0x168] sm:$0xff]
    %v1672 = vld [vmem:[%s1625 + $0x170] sm:$0xff]
    %v1673 = vld [vmem:[%s1625 + $0x178] sm:$0xff]
    %v1674 = vld [vmem:[%s1625 + $0x180] sm:$0xff]
    %v1675 = vld [vmem:[%s1625 + $0x188] sm:$0xff]
    %v1676 = vld [vmem:[%s1625 + $0x190] sm:$0xff]
    %v1677 = vld [vmem:[%s1625 + $0x198] sm:$0xff]
    %v1678 = vld [vmem:[%s1625 + $0x1a0] sm:$0xff]
    %v1679 = vld [vmem:[%s1625 + $0x1a8] sm:$0xff]
    %v1680 = vld [vmem:[%s1625 + $0x1b0] sm:$0xff]
    %v1681 = vld [vmem:[%s1625 + $0x1b8] sm:$0xff]
    %v1682 = vld [vmem:[%s1625 + $0x1c0] sm:$0xff]
    %v1683 = vld [vmem:[%s1625 + $0x1c8] sm:$0xff]
    %v1684 = vld [vmem:[%s1625 + $0x1d0] sm:$0xff]
    %v1685 = vld [vmem:[%s1625 + $0x1d8] sm:$0xff]
    %v1686 = vld [vmem:[%s1625 + $0x1e0] sm:$0xff]
    %v1687 = vld [vmem:[%s1625 + $0x1e8] sm:$0xff]
    %v1688 = vld [vmem:[%s1625 + $0x1f0] sm:$0xff]
    %v1689 = vld [vmem:[%s1625 + $0x1f8] sm:$0xff]
    %s1690 = scalar_lea.vmem [#allocation5], 2048
    %v1691 = vld [vmem:[%s1690] sm:$0xff]
    %v1692 = vld [vmem:[%s1690 + $0x8] sm:$0xff]
    %v1693 = vld [vmem:[%s1690 + $0x10] sm:$0xff]
    %v1694 = vld [vmem:[%s1690 + $0x18] sm:$0xff]
    %v1695 = vld [vmem:[%s1690 + $0x20] sm:$0xff]
    %v1696 = vld [vmem:[%s1690 + $0x28] sm:$0xff]
    %v1697 = vld [vmem:[%s1690 + $0x30] sm:$0xff]
    %v1698 = vld [vmem:[%s1690 + $0x38] sm:$0xff]
    %v1699 = vld [vmem:[%s1690 + $0x40] sm:$0xff]
    %v1700 = vld [vmem:[%s1690 + $0x48] sm:$0xff]
    %v1701 = vld [vmem:[%s1690 + $0x50] sm:$0xff]
    %v1702 = vld [vmem:[%s1690 + $0x58] sm:$0xff]
    %v1703 = vld [vmem:[%s1690 + $0x60] sm:$0xff]
    %v1704 = vld [vmem:[%s1690 + $0x68] sm:$0xff]
    %v1705 = vld [vmem:[%s1690 + $0x70] sm:$0xff]
    %v1706 = vld [vmem:[%s1690 + $0x78] sm:$0xff]
    %v1707 = vld [vmem:[%s1690 + $0x80] sm:$0xff]
    %v1708 = vld [vmem:[%s1690 + $0x88] sm:$0xff]
    %v1709 = vld [vmem:[%s1690 + $0x90] sm:$0xff]
    %v1710 = vld [vmem:[%s1690 + $0x98] sm:$0xff]
    %v1711 = vld [vmem:[%s1690 + $0xa0] sm:$0xff]
    %v1712 = vld [vmem:[%s1690 + $0xa8] sm:$0xff]
    %v1713 = vld [vmem:[%s1690 + $0xb0] sm:$0xff]
    %v1714 = vld [vmem:[%s1690 + $0xb8] sm:$0xff]
    %v1715 = vld [vmem:[%s1690 + $0xc0] sm:$0xff]
    %v1716 = vld [vmem:[%s1690 + $0xc8] sm:$0xff]
    %v1717 = vld [vmem:[%s1690 + $0xd0] sm:$0xff]
    %v1718 = vld [vmem:[%s1690 + $0xd8] sm:$0xff]
    %v1719 = vld [vmem:[%s1690 + $0xe0] sm:$0xff]
    %v1720 = vld [vmem:[%s1690 + $0xe8] sm:$0xff]
    %v1721 = vld [vmem:[%s1690 + $0xf0] sm:$0xff]
    %v1722 = vld [vmem:[%s1690 + $0xf8] sm:$0xff]
    %v1723 = vld [vmem:[%s1690 + $0x100] sm:$0xff]
    %v1724 = vld [vmem:[%s1690 + $0x108] sm:$0xff]
    %v1725 = vld [vmem:[%s1690 + $0x110] sm:$0xff]
    %v1726 = vld [vmem:[%s1690 + $0x118] sm:$0xff]
    %v1727 = vld [vmem:[%s1690 + $0x120] sm:$0xff]
    %v1728 = vld [vmem:[%s1690 + $0x128] sm:$0xff]
    %v1729 = vld [vmem:[%s1690 + $0x130] sm:$0xff]
    %v1730 = vld [vmem:[%s1690 + $0x138] sm:$0xff]
    %v1731 = vld [vmem:[%s1690 + $0x140] sm:$0xff]
    %v1732 = vld [vmem:[%s1690 + $0x148] sm:$0xff]
    %v1733 = vld [vmem:[%s1690 + $0x150] sm:$0xff]
    %v1734 = vld [vmem:[%s1690 + $0x158] sm:$0xff]
    %v1735 = vld [vmem:[%s1690 + $0x160] sm:$0xff]
    %v1736 = vld [vmem:[%s1690 + $0x168] sm:$0xff]
    %v1737 = vld [vmem:[%s1690 + $0x170] sm:$0xff]
    %v1738 = vld [vmem:[%s1690 + $0x178] sm:$0xff]
    %v1739 = vld [vmem:[%s1690 + $0x180] sm:$0xff]
    %v1740 = vld [vmem:[%s1690 + $0x188] sm:$0xff]
    %v1741 = vld [vmem:[%s1690 + $0x190] sm:$0xff]
    %v1742 = vld [vmem:[%s1690 + $0x198] sm:$0xff]
    %v1743 = vld [vmem:[%s1690 + $0x1a0] sm:$0xff]
    %v1744 = vld [vmem:[%s1690 + $0x1a8] sm:$0xff]
    %v1745 = vld [vmem:[%s1690 + $0x1b0] sm:$0xff]
    %v1746 = vld [vmem:[%s1690 + $0x1b8] sm:$0xff]
    %v1747 = vld [vmem:[%s1690 + $0x1c0] sm:$0xff]
    %v1748 = vld [vmem:[%s1690 + $0x1c8] sm:$0xff]
    %v1749 = vld [vmem:[%s1690 + $0x1d0] sm:$0xff]
    %v1750 = vld [vmem:[%s1690 + $0x1d8] sm:$0xff]
    %v1751 = vld [vmem:[%s1690 + $0x1e0] sm:$0xff]
    %v1752 = vld [vmem:[%s1690 + $0x1e8] sm:$0xff]
    %v1753 = vld [vmem:[%s1690 + $0x1f0] sm:$0xff]
    %v1754 = vld [vmem:[%s1690 + $0x1f8] sm:$0xff]
    %v1755 = vld [vmem:[#allocation7] sm:$0xff]
    %v1756 = vmul.f32 %v1626, %v1691
    %v1757 = vmul.f32 %v1627, %v1692
    %v1758 = vmul.f32 %v1628, %v1693
    %v1759 = vmul.f32 %v1629, %v1694
    %v1760 = vmul.f32 %v1630, %v1695
    %v1761 = vmul.f32 %v1631, %v1696
    %v1762 = vmul.f32 %v1632, %v1697
    %v1763 = vmul.f32 %v1633, %v1698
    %v1764 = vmul.f32 %v1634, %v1699
    %v1765 = vmul.f32 %v1635, %v1700
    %v1766 = vmul.f32 %v1636, %v1701
    %v1767 = vmul.f32 %v1637, %v1702
    %v1768 = vmul.f32 %v1638, %v1703
    %v1769 = vmul.f32 %v1639, %v1704
    %v1770 = vmul.f32 %v1640, %v1705
    %v1771 = vmul.f32 %v1641, %v1706
    %v1772 = vmul.f32 %v1642, %v1707
    %v1773 = vmul.f32 %v1643, %v1708
    %v1774 = vmul.f32 %v1644, %v1709
    %v1775 = vmul.f32 %v1645, %v1710
    %v1776 = vmul.f32 %v1646, %v1711
    %v1777 = vmul.f32 %v1647, %v1712
    %v1778 = vmul.f32 %v1648, %v1713
    %v1779 = vmul.f32 %v1649, %v1714
    %v1780 = vmul.f32 %v1650, %v1715
    %v1781 = vmul.f32 %v1651, %v1716
    %v1782 = vmul.f32 %v1652, %v1717
    %v1783 = vmul.f32 %v1653, %v1718
    %v1784 = vmul.f32 %v1654, %v1719
    %v1785 = vmul.f32 %v1655, %v1720
    %v1786 = vmul.f32 %v1656, %v1721
    %v1787 = vmul.f32 %v1657, %v1722
    %v1788 = vmul.f32 %v1658, %v1723
    %v1789 = vmul.f32 %v1659, %v1724
    %v1790 = vmul.f32 %v1660, %v1725
    %v1791 = vmul.f32 %v1661, %v1726
    %v1792 = vmul.f32 %v1662, %v1727
    %v1793 = vmul.f32 %v1663, %v1728
    %v1794 = vmul.f32 %v1664, %v1729
    %v1795 = vmul.f32 %v1665, %v1730
    %v1796 = vmul.f32 %v1666, %v1731
    %v1797 = vmul.f32 %v1667, %v1732
    %v1798 = vmul.f32 %v1668, %v1733
    %v1799 = vmul.f32 %v1669, %v1734
    %v1800 = vmul.f32 %v1670, %v1735
    %v1801 = vmul.f32 %v1671, %v1736
    %v1802 = vmul.f32 %v1672, %v1737
    %v1803 = vmul.f32 %v1673, %v1738
    %v1804 = vmul.f32 %v1674, %v1739
    %v1805 = vmul.f32 %v1675, %v1740
    %v1806 = vmul.f32 %v1676, %v1741
    %v1807 = vmul.f32 %v1677, %v1742
    %v1808 = vmul.f32 %v1678, %v1743
    %v1809 = vmul.f32 %v1679, %v1744
    %v1810 = vmul.f32 %v1680, %v1745
    %v1811 = vmul.f32 %v1681, %v1746
    %v1812 = vmul.f32 %v1682, %v1747
    %v1813 = vmul.f32 %v1683, %v1748
    %v1814 = vmul.f32 %v1684, %v1749
    %v1815 = vmul.f32 %v1685, %v1750
    %v1816 = vmul.f32 %v1686, %v1751
    %v1817 = vmul.f32 %v1687, %v1752
    %v1818 = vmul.f32 %v1688, %v1753
    %v1819 = vmul.f32 %v1689, %v1754
    %v1820 = vadd.f32 %v1756, %v1757
    %v1821 = vadd.f32 %v1820, %v1758
    %v1822 = vadd.f32 %v1821, %v1759
    %v1823 = vadd.f32 %v1822, %v1760
    %v1824 = vadd.f32 %v1823, %v1761
    %v1825 = vadd.f32 %v1824, %v1762
    %v1826 = vadd.f32 %v1825, %v1763
    %v1827 = vadd.f32 %v1826, %v1764
    %v1828 = vadd.f32 %v1827, %v1765
    %v1829 = vadd.f32 %v1828, %v1766
    %v1830 = vadd.f32 %v1829, %v1767
    %v1831 = vadd.f32 %v1830, %v1768
    %v1832 = vadd.f32 %v1831, %v1769
    %v1833 = vadd.f32 %v1832, %v1770
    %v1834 = vadd.f32 %v1833, %v1771
    %v1835 = vadd.f32 %v1834, %v1772
    %v1836 = vadd.f32 %v1835, %v1773
    %v1837 = vadd.f32 %v1836, %v1774
    %v1838 = vadd.f32 %v1837, %v1775
    %v1839 = vadd.f32 %v1838, %v1776
    %v1840 = vadd.f32 %v1839, %v1777
    %v1841 = vadd.f32 %v1840, %v1778
    %v1842 = vadd.f32 %v1841, %v1779
    %v1843 = vadd.f32 %v1842, %v1780
    %v1844 = vadd.f32 %v1843, %v1781
    %v1845 = vadd.f32 %v1844, %v1782
    %v1846 = vadd.f32 %v1845, %v1783
    %v1847 = vadd.f32 %v1846, %v1784
    %v1848 = vadd.f32 %v1847, %v1785
    %v1849 = vadd.f32 %v1848, %v1786
    %v1850 = vadd.f32 %v1849, %v1787
    %v1851 = vadd.f32 %v1850, %v1788
    %v1852 = vadd.f32 %v1851, %v1789
    %v1853 = vadd.f32 %v1852, %v1790
    %v1854 = vadd.f32 %v1853, %v1791
    %v1855 = vadd.f32 %v1854, %v1792
    %v1856 = vadd.f32 %v1855, %v1793
    %v1857 = vadd.f32 %v1856, %v1794
    %v1858 = vadd.f32 %v1857, %v1795
    %v1859 = vadd.f32 %v1858, %v1796
    %v1860 = vadd.f32 %v1859, %v1797
    %v1861 = vadd.f32 %v1860, %v1798
    %v1862 = vadd.f32 %v1861, %v1799
    %v1863 = vadd.f32 %v1862, %v1800
    %v1864 = vadd.f32 %v1863, %v1801
    %v1865 = vadd.f32 %v1864, %v1802
    %v1866 = vadd.f32 %v1865, %v1803
    %v1867 = vadd.f32 %v1866, %v1804
    %v1868 = vadd.f32 %v1867, %v1805
    %v1869 = vadd.f32 %v1868, %v1806
    %v1870 = vadd.f32 %v1869, %v1807
    %v1871 = vadd.f32 %v1870, %v1808
    %v1872 = vadd.f32 %v1871, %v1809
    %v1873 = vadd.f32 %v1872, %v1810
    %v1874 = vadd.f32 %v1873, %v1811
    %v1875 = vadd.f32 %v1874, %v1812
    %v1876 = vadd.f32 %v1875, %v1813
    %v1877 = vadd.f32 %v1876, %v1814
    %v1878 = vadd.f32 %v1877, %v1815
    %v1879 = vadd.f32 %v1878, %v1816
    %v1880 = vadd.f32 %v1879, %v1817
    %v1881 = vadd.f32 %v1880, %v1818
    %v1882 = vadd.f32 %v1881, %v1819
    %v1883 = vadd.f32 %v1755, %v1882
    %1884 = vst [vmem:[#allocation7] sm:$0xff] %v1883
    %v1885 = vld [vmem:[%s324] sm:$0xff]
    %v1886 = vadd.f32 %v1626, %v1691
    %v1887 = vadd.f32 %v1627, %v1692
    %v1888 = vadd.f32 %v1628, %v1693
    %v1889 = vadd.f32 %v1629, %v1694
    %v1890 = vadd.f32 %v1630, %v1695
    %v1891 = vadd.f32 %v1631, %v1696
    %v1892 = vadd.f32 %v1632, %v1697
    %v1893 = vadd.f32 %v1633, %v1698
    %v1894 = vadd.f32 %v1634, %v1699
    %v1895 = vadd.f32 %v1635, %v1700
    %v1896 = vadd.f32 %v1636, %v1701
    %v1897 = vadd.f32 %v1637, %v1702
    %v1898 = vadd.f32 %v1638, %v1703
    %v1899 = vadd.f32 %v1639, %v1704
    %v1900 = vadd.f32 %v1640, %v1705
    %v1901 = vadd.f32 %v1641, %v1706
    %v1902 = vadd.f32 %v1642, %v1707
    %v1903 = vadd.f32 %v1643, %v1708
    %v1904 = vadd.f32 %v1644, %v1709
    %v1905 = vadd.f32 %v1645, %v1710
    %v1906 = vadd.f32 %v1646, %v1711
    %v1907 = vadd.f32 %v1647, %v1712
    %v1908 = vadd.f32 %v1648, %v1713
    %v1909 = vadd.f32 %v1649, %v1714
    %v1910 = vadd.f32 %v1650, %v1715
    %v1911 = vadd.f32 %v1651, %v1716
    %v1912 = vadd.f32 %v1652, %v1717
    %v1913 = vadd.f32 %v1653, %v1718
    %v1914 = vadd.f32 %v1654, %v1719
    %v1915 = vadd.f32 %v1655, %v1720
    %v1916 = vadd.f32 %v1656, %v1721
    %v1917 = vadd.f32 %v1657, %v1722
    %v1918 = vadd.f32 %v1658, %v1723
    %v1919 = vadd.f32 %v1659, %v1724
    %v1920 = vadd.f32 %v1660, %v1725
    %v1921 = vadd.f32 %v1661, %v1726
    %v1922 = vadd.f32 %v1662, %v1727
    %v1923 = vadd.f32 %v1663, %v1728
    %v1924 = vadd.f32 %v1664, %v1729
    %v1925 = vadd.f32 %v1665, %v1730
    %v1926 = vadd.f32 %v1666, %v1731
    %v1927 = vadd.f32 %v1667, %v1732
    %v1928 = vadd.f32 %v1668, %v1733
    %v1929 = vadd.f32 %v1669, %v1734
    %v1930 = vadd.f32 %v1670, %v1735
    %v1931 = vadd.f32 %v1671, %v1736
    %v1932 = vadd.f32 %v1672, %v1737
    %v1933 = vadd.f32 %v1673, %v1738
    %v1934 = vadd.f32 %v1674, %v1739
    %v1935 = vadd.f32 %v1675, %v1740
    %v1936 = vadd.f32 %v1676, %v1741
    %v1937 = vadd.f32 %v1677, %v1742
    %v1938 = vadd.f32 %v1678, %v1743
    %v1939 = vadd.f32 %v1679, %v1744
    %v1940 = vadd.f32 %v1680, %v1745
    %v1941 = vadd.f32 %v1681, %v1746
    %v1942 = vadd.f32 %v1682, %v1747
    %v1943 = vadd.f32 %v1683, %v1748
    %v1944 = vadd.f32 %v1684, %v1749
    %v1945 = vadd.f32 %v1685, %v1750
    %v1946 = vadd.f32 %v1686, %v1751
    %v1947 = vadd.f32 %v1687, %v1752
    %v1948 = vadd.f32 %v1688, %v1753
    %v1949 = vadd.f32 %v1689, %v1754
    %v1950 = vadd.f32 %v1886, %v1887
    %v1951 = vadd.f32 %v1950, %v1888
    %v1952 = vadd.f32 %v1951, %v1889
    %v1953 = vadd.f32 %v1952, %v1890
    %v1954 = vadd.f32 %v1953, %v1891
    %v1955 = vadd.f32 %v1954, %v1892
    %v1956 = vadd.f32 %v1955, %v1893
    %v1957 = vadd.f32 %v1956, %v1894
    %v1958 = vadd.f32 %v1957, %v1895
    %v1959 = vadd.f32 %v1958, %v1896
    %v1960 = vadd.f32 %v1959, %v1897
    %v1961 = vadd.f32 %v1960, %v1898
    %v1962 = vadd.f32 %v1961, %v1899
    %v1963 = vadd.f32 %v1962, %v1900
    %v1964 = vadd.f32 %v1963, %v1901
    %v1965 = vadd.f32 %v1964, %v1902
    %v1966 = vadd.f32 %v1965, %v1903
    %v1967 = vadd.f32 %v1966, %v1904
    %v1968 = vadd.f32 %v1967, %v1905
    %v1969 = vadd.f32 %v1968, %v1906
    %v1970 = vadd.f32 %v1969, %v1907
    %v1971 = vadd.f32 %v1970, %v1908
    %v1972 = vadd.f32 %v1971, %v1909
    %v1973 = vadd.f32 %v1972, %v1910
    %v1974 = vadd.f32 %v1973, %v1911
    %v1975 = vadd.f32 %v1974, %v1912
    %v1976 = vadd.f32 %v1975, %v1913
    %v1977 = vadd.f32 %v1976, %v1914
    %v1978 = vadd.f32 %v1977, %v1915
    %v1979 = vadd.f32 %v1978, %v1916
    %v1980 = vadd.f32 %v1979, %v1917
    %v1981 = vadd.f32 %v1980, %v1918
    %v1982 = vadd.f32 %v1981, %v1919
    %v1983 = vadd.f32 %v1982, %v1920
    %v1984 = vadd.f32 %v1983, %v1921
    %v1985 = vadd.f32 %v1984, %v1922
    %v1986 = vadd.f32 %v1985, %v1923
    %v1987 = vadd.f32 %v1986, %v1924
    %v1988 = vadd.f32 %v1987, %v1925
    %v1989 = vadd.f32 %v1988, %v1926
    %v1990 = vadd.f32 %v1989, %v1927
    %v1991 = vadd.f32 %v1990, %v1928
    %v1992 = vadd.f32 %v1991, %v1929
    %v1993 = vadd.f32 %v1992, %v1930
    %v1994 = vadd.f32 %v1993, %v1931
    %v1995 = vadd.f32 %v1994, %v1932
    %v1996 = vadd.f32 %v1995, %v1933
    %v1997 = vadd.f32 %v1996, %v1934
    %v1998 = vadd.f32 %v1997, %v1935
    %v1999 = vadd.f32 %v1998, %v1936
    %v2000 = vadd.f32 %v1999, %v1937
    %v2001 = vadd.f32 %v2000, %v1938
    %v2002 = vadd.f32 %v2001, %v1939
    %v2003 = vadd.f32 %v2002, %v1940
    %v2004 = vadd.f32 %v2003, %v1941
    %v2005 = vadd.f32 %v2004, %v1942
    %v2006 = vadd.f32 %v2005, %v1943
    %v2007 = vadd.f32 %v2006, %v1944
    %v2008 = vadd.f32 %v2007, %v1945
    %v2009 = vadd.f32 %v2008, %v1946
    %v2010 = vadd.f32 %v2009, %v1947
    %v2011 = vadd.f32 %v2010, %v1948
    %v2012 = vadd.f32 %v2011, %v1949
    %v2013 = vadd.f32 %v1885, %v2012
    %2014 = vst [vmem:[%s324] sm:$0xff] %v2013
    %s2015 = scalar_lea.vmem [#allocation2], 2560
    %v2016 = vld [vmem:[%s2015] sm:$0xff]
    %v2017 = vld [vmem:[%s2015 + $0x8] sm:$0xff]
    %v2018 = vld [vmem:[%s2015 + $0x10] sm:$0xff]
    %v2019 = vld [vmem:[%s2015 + $0x18] sm:$0xff]
    %v2020 = vld [vmem:[%s2015 + $0x20] sm:$0xff]
    %v2021 = vld [vmem:[%s2015 + $0x28] sm:$0xff]
    %v2022 = vld [vmem:[%s2015 + $0x30] sm:$0xff]
    %v2023 = vld [vmem:[%s2015 + $0x38] sm:$0xff]
    %v2024 = vld [vmem:[%s2015 + $0x40] sm:$0xff]
    %v2025 = vld [vmem:[%s2015 + $0x48] sm:$0xff]
    %v2026 = vld [vmem:[%s2015 + $0x50] sm:$0xff]
    %v2027 = vld [vmem:[%s2015 + $0x58] sm:$0xff]
    %v2028 = vld [vmem:[%s2015 + $0x60] sm:$0xff]
    %v2029 = vld [vmem:[%s2015 + $0x68] sm:$0xff]
    %v2030 = vld [vmem:[%s2015 + $0x70] sm:$0xff]
    %v2031 = vld [vmem:[%s2015 + $0x78] sm:$0xff]
    %v2032 = vld [vmem:[%s2015 + $0x80] sm:$0xff]
    %v2033 = vld [vmem:[%s2015 + $0x88] sm:$0xff]
    %v2034 = vld [vmem:[%s2015 + $0x90] sm:$0xff]
    %v2035 = vld [vmem:[%s2015 + $0x98] sm:$0xff]
    %v2036 = vld [vmem:[%s2015 + $0xa0] sm:$0xff]
    %v2037 = vld [vmem:[%s2015 + $0xa8] sm:$0xff]
    %v2038 = vld [vmem:[%s2015 + $0xb0] sm:$0xff]
    %v2039 = vld [vmem:[%s2015 + $0xb8] sm:$0xff]
    %v2040 = vld [vmem:[%s2015 + $0xc0] sm:$0xff]
    %v2041 = vld [vmem:[%s2015 + $0xc8] sm:$0xff]
    %v2042 = vld [vmem:[%s2015 + $0xd0] sm:$0xff]
    %v2043 = vld [vmem:[%s2015 + $0xd8] sm:$0xff]
    %v2044 = vld [vmem:[%s2015 + $0xe0] sm:$0xff]
    %v2045 = vld [vmem:[%s2015 + $0xe8] sm:$0xff]
    %v2046 = vld [vmem:[%s2015 + $0xf0] sm:$0xff]
    %v2047 = vld [vmem:[%s2015 + $0xf8] sm:$0xff]
    %v2048 = vld [vmem:[%s2015 + $0x100] sm:$0xff]
    %v2049 = vld [vmem:[%s2015 + $0x108] sm:$0xff]
    %v2050 = vld [vmem:[%s2015 + $0x110] sm:$0xff]
    %v2051 = vld [vmem:[%s2015 + $0x118] sm:$0xff]
    %v2052 = vld [vmem:[%s2015 + $0x120] sm:$0xff]
    %v2053 = vld [vmem:[%s2015 + $0x128] sm:$0xff]
    %v2054 = vld [vmem:[%s2015 + $0x130] sm:$0xff]
    %v2055 = vld [vmem:[%s2015 + $0x138] sm:$0xff]
    %v2056 = vld [vmem:[%s2015 + $0x140] sm:$0xff]
    %v2057 = vld [vmem:[%s2015 + $0x148] sm:$0xff]
    %v2058 = vld [vmem:[%s2015 + $0x150] sm:$0xff]
    %v2059 = vld [vmem:[%s2015 + $0x158] sm:$0xff]
    %v2060 = vld [vmem:[%s2015 + $0x160] sm:$0xff]
    %v2061 = vld [vmem:[%s2015 + $0x168] sm:$0xff]
    %v2062 = vld [vmem:[%s2015 + $0x170] sm:$0xff]
    %v2063 = vld [vmem:[%s2015 + $0x178] sm:$0xff]
    %v2064 = vld [vmem:[%s2015 + $0x180] sm:$0xff]
    %v2065 = vld [vmem:[%s2015 + $0x188] sm:$0xff]
    %v2066 = vld [vmem:[%s2015 + $0x190] sm:$0xff]
    %v2067 = vld [vmem:[%s2015 + $0x198] sm:$0xff]
    %v2068 = vld [vmem:[%s2015 + $0x1a0] sm:$0xff]
    %v2069 = vld [vmem:[%s2015 + $0x1a8] sm:$0xff]
    %v2070 = vld [vmem:[%s2015 + $0x1b0] sm:$0xff]
    %v2071 = vld [vmem:[%s2015 + $0x1b8] sm:$0xff]
    %v2072 = vld [vmem:[%s2015 + $0x1c0] sm:$0xff]
    %v2073 = vld [vmem:[%s2015 + $0x1c8] sm:$0xff]
    %v2074 = vld [vmem:[%s2015 + $0x1d0] sm:$0xff]
    %v2075 = vld [vmem:[%s2015 + $0x1d8] sm:$0xff]
    %v2076 = vld [vmem:[%s2015 + $0x1e0] sm:$0xff]
    %v2077 = vld [vmem:[%s2015 + $0x1e8] sm:$0xff]
    %v2078 = vld [vmem:[%s2015 + $0x1f0] sm:$0xff]
    %v2079 = vld [vmem:[%s2015 + $0x1f8] sm:$0xff]
    %s2080 = scalar_lea.vmem [#allocation5], 2560
    %v2081 = vld [vmem:[%s2080] sm:$0xff]
    %v2082 = vld [vmem:[%s2080 + $0x8] sm:$0xff]
    %v2083 = vld [vmem:[%s2080 + $0x10] sm:$0xff]
    %v2084 = vld [vmem:[%s2080 + $0x18] sm:$0xff]
    %v2085 = vld [vmem:[%s2080 + $0x20] sm:$0xff]
    %v2086 = vld [vmem:[%s2080 + $0x28] sm:$0xff]
    %v2087 = vld [vmem:[%s2080 + $0x30] sm:$0xff]
    %v2088 = vld [vmem:[%s2080 + $0x38] sm:$0xff]
    %v2089 = vld [vmem:[%s2080 + $0x40] sm:$0xff]
    %v2090 = vld [vmem:[%s2080 + $0x48] sm:$0xff]
    %v2091 = vld [vmem:[%s2080 + $0x50] sm:$0xff]
    %v2092 = vld [vmem:[%s2080 + $0x58] sm:$0xff]
    %v2093 = vld [vmem:[%s2080 + $0x60] sm:$0xff]
    %v2094 = vld [vmem:[%s2080 + $0x68] sm:$0xff]
    %v2095 = vld [vmem:[%s2080 + $0x70] sm:$0xff]
    %v2096 = vld [vmem:[%s2080 + $0x78] sm:$0xff]
    %v2097 = vld [vmem:[%s2080 + $0x80] sm:$0xff]
    %v2098 = vld [vmem:[%s2080 + $0x88] sm:$0xff]
    %v2099 = vld [vmem:[%s2080 + $0x90] sm:$0xff]
    %v2100 = vld [vmem:[%s2080 + $0x98] sm:$0xff]
    %v2101 = vld [vmem:[%s2080 + $0xa0] sm:$0xff]
    %v2102 = vld [vmem:[%s2080 + $0xa8] sm:$0xff]
    %v2103 = vld [vmem:[%s2080 + $0xb0] sm:$0xff]
    %v2104 = vld [vmem:[%s2080 + $0xb8] sm:$0xff]
    %v2105 = vld [vmem:[%s2080 + $0xc0] sm:$0xff]
    %v2106 = vld [vmem:[%s2080 + $0xc8] sm:$0xff]
    %v2107 = vld [vmem:[%s2080 + $0xd0] sm:$0xff]
    %v2108 = vld [vmem:[%s2080 + $0xd8] sm:$0xff]
    %v2109 = vld [vmem:[%s2080 + $0xe0] sm:$0xff]
    %v2110 = vld [vmem:[%s2080 + $0xe8] sm:$0xff]
    %v2111 = vld [vmem:[%s2080 + $0xf0] sm:$0xff]
    %v2112 = vld [vmem:[%s2080 + $0xf8] sm:$0xff]
    %v2113 = vld [vmem:[%s2080 + $0x100] sm:$0xff]
    %v2114 = vld [vmem:[%s2080 + $0x108] sm:$0xff]
    %v2115 = vld [vmem:[%s2080 + $0x110] sm:$0xff]
    %v2116 = vld [vmem:[%s2080 + $0x118] sm:$0xff]
    %v2117 = vld [vmem:[%s2080 + $0x120] sm:$0xff]
    %v2118 = vld [vmem:[%s2080 + $0x128] sm:$0xff]
    %v2119 = vld [vmem:[%s2080 + $0x130] sm:$0xff]
    %v2120 = vld [vmem:[%s2080 + $0x138] sm:$0xff]
    %v2121 = vld [vmem:[%s2080 + $0x140] sm:$0xff]
    %v2122 = vld [vmem:[%s2080 + $0x148] sm:$0xff]
    %v2123 = vld [vmem:[%s2080 + $0x150] sm:$0xff]
    %v2124 = vld [vmem:[%s2080 + $0x158] sm:$0xff]
    %v2125 = vld [vmem:[%s2080 + $0x160] sm:$0xff]
    %v2126 = vld [vmem:[%s2080 + $0x168] sm:$0xff]
    %v2127 = vld [vmem:[%s2080 + $0x170] sm:$0xff]
    %v2128 = vld [vmem:[%s2080 + $0x178] sm:$0xff]
    %v2129 = vld [vmem:[%s2080 + $0x180] sm:$0xff]
    %v2130 = vld [vmem:[%s2080 + $0x188] sm:$0xff]
    %v2131 = vld [vmem:[%s2080 + $0x190] sm:$0xff]
    %v2132 = vld [vmem:[%s2080 + $0x198] sm:$0xff]
    %v2133 = vld [vmem:[%s2080 + $0x1a0] sm:$0xff]
    %v2134 = vld [vmem:[%s2080 + $0x1a8] sm:$0xff]
    %v2135 = vld [vmem:[%s2080 + $0x1b0] sm:$0xff]
    %v2136 = vld [vmem:[%s2080 + $0x1b8] sm:$0xff]
    %v2137 = vld [vmem:[%s2080 + $0x1c0] sm:$0xff]
    %v2138 = vld [vmem:[%s2080 + $0x1c8] sm:$0xff]
    %v2139 = vld [vmem:[%s2080 + $0x1d0] sm:$0xff]
    %v2140 = vld [vmem:[%s2080 + $0x1d8] sm:$0xff]
    %v2141 = vld [vmem:[%s2080 + $0x1e0] sm:$0xff]
    %v2142 = vld [vmem:[%s2080 + $0x1e8] sm:$0xff]
    %v2143 = vld [vmem:[%s2080 + $0x1f0] sm:$0xff]
    %v2144 = vld [vmem:[%s2080 + $0x1f8] sm:$0xff]
    %v2145 = vld [vmem:[#allocation7] sm:$0xff]
    %v2146 = vmul.f32 %v2016, %v2081
    %v2147 = vmul.f32 %v2017, %v2082
    %v2148 = vmul.f32 %v2018, %v2083
    %v2149 = vmul.f32 %v2019, %v2084
    %v2150 = vmul.f32 %v2020, %v2085
    %v2151 = vmul.f32 %v2021, %v2086
    %v2152 = vmul.f32 %v2022, %v2087
    %v2153 = vmul.f32 %v2023, %v2088
    %v2154 = vmul.f32 %v2024, %v2089
    %v2155 = vmul.f32 %v2025, %v2090
    %v2156 = vmul.f32 %v2026, %v2091
    %v2157 = vmul.f32 %v2027, %v2092
    %v2158 = vmul.f32 %v2028, %v2093
    %v2159 = vmul.f32 %v2029, %v2094
    %v2160 = vmul.f32 %v2030, %v2095
    %v2161 = vmul.f32 %v2031, %v2096
    %v2162 = vmul.f32 %v2032, %v2097
    %v2163 = vmul.f32 %v2033, %v2098
    %v2164 = vmul.f32 %v2034, %v2099
    %v2165 = vmul.f32 %v2035, %v2100
    %v2166 = vmul.f32 %v2036, %v2101
    %v2167 = vmul.f32 %v2037, %v2102
    %v2168 = vmul.f32 %v2038, %v2103
    %v2169 = vmul.f32 %v2039, %v2104
    %v2170 = vmul.f32 %v2040, %v2105
    %v2171 = vmul.f32 %v2041, %v2106
    %v2172 = vmul.f32 %v2042, %v2107
    %v2173 = vmul.f32 %v2043, %v2108
    %v2174 = vmul.f32 %v2044, %v2109
    %v2175 = vmul.f32 %v2045, %v2110
    %v2176 = vmul.f32 %v2046, %v2111
    %v2177 = vmul.f32 %v2047, %v2112
    %v2178 = vmul.f32 %v2048, %v2113
    %v2179 = vmul.f32 %v2049, %v2114
    %v2180 = vmul.f32 %v2050, %v2115
    %v2181 = vmul.f32 %v2051, %v2116
    %v2182 = vmul.f32 %v2052, %v2117
    %v2183 = vmul.f32 %v2053, %v2118
    %v2184 = vmul.f32 %v2054, %v2119
    %v2185 = vmul.f32 %v2055, %v2120
    %v2186 = vmul.f32 %v2056, %v2121
    %v2187 = vmul.f32 %v2057, %v2122
    %v2188 = vmul.f32 %v2058, %v2123
    %v2189 = vmul.f32 %v2059, %v2124
    %v2190 = vmul.f32 %v2060, %v2125
    %v2191 = vmul.f32 %v2061, %v2126
    %v2192 = vmul.f32 %v2062, %v2127
    %v2193 = vmul.f32 %v2063, %v2128
    %v2194 = vmul.f32 %v2064, %v2129
    %v2195 = vmul.f32 %v2065, %v2130
    %v2196 = vmul.f32 %v2066, %v2131
    %v2197 = vmul.f32 %v2067, %v2132
    %v2198 = vmul.f32 %v2068, %v2133
    %v2199 = vmul.f32 %v2069, %v2134
    %v2200 = vmul.f32 %v2070, %v2135
    %v2201 = vmul.f32 %v2071, %v2136
    %v2202 = vmul.f32 %v2072, %v2137
    %v2203 = vmul.f32 %v2073, %v2138
    %v2204 = vmul.f32 %v2074, %v2139
    %v2205 = vmul.f32 %v2075, %v2140
    %v2206 = vmul.f32 %v2076, %v2141
    %v2207 = vmul.f32 %v2077, %v2142
    %v2208 = vmul.f32 %v2078, %v2143
    %v2209 = vmul.f32 %v2079, %v2144
    %v2210 = vadd.f32 %v2146, %v2147
    %v2211 = vadd.f32 %v2210, %v2148
    %v2212 = vadd.f32 %v2211, %v2149
    %v2213 = vadd.f32 %v2212, %v2150
    %v2214 = vadd.f32 %v2213, %v2151
    %v2215 = vadd.f32 %v2214, %v2152
    %v2216 = vadd.f32 %v2215, %v2153
    %v2217 = vadd.f32 %v2216, %v2154
    %v2218 = vadd.f32 %v2217, %v2155
    %v2219 = vadd.f32 %v2218, %v2156
    %v2220 = vadd.f32 %v2219, %v2157
    %v2221 = vadd.f32 %v2220, %v2158
    %v2222 = vadd.f32 %v2221, %v2159
    %v2223 = vadd.f32 %v2222, %v2160
    %v2224 = vadd.f32 %v2223, %v2161
    %v2225 = vadd.f32 %v2224, %v2162
    %v2226 = vadd.f32 %v2225, %v2163
    %v2227 = vadd.f32 %v2226, %v2164
    %v2228 = vadd.f32 %v2227, %v2165
    %v2229 = vadd.f32 %v2228, %v2166
    %v2230 = vadd.f32 %v2229, %v2167
    %v2231 = vadd.f32 %v2230, %v2168
    %v2232 = vadd.f32 %v2231, %v2169
    %v2233 = vadd.f32 %v2232, %v2170
    %v2234 = vadd.f32 %v2233, %v2171
    %v2235 = vadd.f32 %v2234, %v2172
    %v2236 = vadd.f32 %v2235, %v2173
    %v2237 = vadd.f32 %v2236, %v2174
    %v2238 = vadd.f32 %v2237, %v2175
    %v2239 = vadd.f32 %v2238, %v2176
    %v2240 = vadd.f32 %v2239, %v2177
    %v2241 = vadd.f32 %v2240, %v2178
    %v2242 = vadd.f32 %v2241, %v2179
    %v2243 = vadd.f32 %v2242, %v2180
    %v2244 = vadd.f32 %v2243, %v2181
    %v2245 = vadd.f32 %v2244, %v2182
    %v2246 = vadd.f32 %v2245, %v2183
    %v2247 = vadd.f32 %v2246, %v2184
    %v2248 = vadd.f32 %v2247, %v2185
    %v2249 = vadd.f32 %v2248, %v2186
    %v2250 = vadd.f32 %v2249, %v2187
    %v2251 = vadd.f32 %v2250, %v2188
    %v2252 = vadd.f32 %v2251, %v2189
    %v2253 = vadd.f32 %v2252, %v2190
    %v2254 = vadd.f32 %v2253, %v2191
    %v2255 = vadd.f32 %v2254, %v2192
    %v2256 = vadd.f32 %v2255, %v2193
    %v2257 = vadd.f32 %v2256, %v2194
    %v2258 = vadd.f32 %v2257, %v2195
    %v2259 = vadd.f32 %v2258, %v2196
    %v2260 = vadd.f32 %v2259, %v2197
    %v2261 = vadd.f32 %v2260, %v2198
    %v2262 = vadd.f32 %v2261, %v2199
    %v2263 = vadd.f32 %v2262, %v2200
    %v2264 = vadd.f32 %v2263, %v2201
    %v2265 = vadd.f32 %v2264, %v2202
    %v2266 = vadd.f32 %v2265, %v2203
    %v2267 = vadd.f32 %v2266, %v2204
    %v2268 = vadd.f32 %v2267, %v2205
    %v2269 = vadd.f32 %v2268, %v2206
    %v2270 = vadd.f32 %v2269, %v2207
    %v2271 = vadd.f32 %v2270, %v2208
    %v2272 = vadd.f32 %v2271, %v2209
    %v2273 = vadd.f32 %v2145, %v2272
    %2274 = vst [vmem:[#allocation7] sm:$0xff] %v2273
    %v2275 = vld [vmem:[%s324] sm:$0xff]
    %v2276 = vadd.f32 %v2016, %v2081
    %v2277 = vadd.f32 %v2017, %v2082
    %v2278 = vadd.f32 %v2018, %v2083
    %v2279 = vadd.f32 %v2019, %v2084
    %v2280 = vadd.f32 %v2020, %v2085
    %v2281 = vadd.f32 %v2021, %v2086
    %v2282 = vadd.f32 %v2022, %v2087
    %v2283 = vadd.f32 %v2023, %v2088
    %v2284 = vadd.f32 %v2024, %v2089
    %v2285 = vadd.f32 %v2025, %v2090
    %v2286 = vadd.f32 %v2026, %v2091
    %v2287 = vadd.f32 %v2027, %v2092
    %v2288 = vadd.f32 %v2028, %v2093
    %v2289 = vadd.f32 %v2029, %v2094
    %v2290 = vadd.f32 %v2030, %v2095
    %v2291 = vadd.f32 %v2031, %v2096
    %v2292 = vadd.f32 %v2032, %v2097
    %v2293 = vadd.f32 %v2033, %v2098
    %v2294 = vadd.f32 %v2034, %v2099
    %v2295 = vadd.f32 %v2035, %v2100
    %v2296 = vadd.f32 %v2036, %v2101
    %v2297 = vadd.f32 %v2037, %v2102
    %v2298 = vadd.f32 %v2038, %v2103
    %v2299 = vadd.f32 %v2039, %v2104
    %v2300 = vadd.f32 %v2040, %v2105
    %v2301 = vadd.f32 %v2041, %v2106
    %v2302 = vadd.f32 %v2042, %v2107
    %v2303 = vadd.f32 %v2043, %v2108
    %v2304 = vadd.f32 %v2044, %v2109
    %v2305 = vadd.f32 %v2045, %v2110
    %v2306 = vadd.f32 %v2046, %v2111
    %v2307 = vadd.f32 %v2047, %v2112
    %v2308 = vadd.f32 %v2048, %v2113
    %v2309 = vadd.f32 %v2049, %v2114
    %v2310 = vadd.f32 %v2050, %v2115
    %v2311 = vadd.f32 %v2051, %v2116
    %v2312 = vadd.f32 %v2052, %v2117
    %v2313 = vadd.f32 %v2053, %v2118
    %v2314 = vadd.f32 %v2054, %v2119
    %v2315 = vadd.f32 %v2055, %v2120
    %v2316 = vadd.f32 %v2056, %v2121
    %v2317 = vadd.f32 %v2057, %v2122
    %v2318 = vadd.f32 %v2058, %v2123
    %v2319 = vadd.f32 %v2059, %v2124
    %v2320 = vadd.f32 %v2060, %v2125
    %v2321 = vadd.f32 %v2061, %v2126
    %v2322 = vadd.f32 %v2062, %v2127
    %v2323 = vadd.f32 %v2063, %v2128
    %v2324 = vadd.f32 %v2064, %v2129
    %v2325 = vadd.f32 %v2065, %v2130
    %v2326 = vadd.f32 %v2066, %v2131
    %v2327 = vadd.f32 %v2067, %v2132
    %v2328 = vadd.f32 %v2068, %v2133
    %v2329 = vadd.f32 %v2069, %v2134
    %v2330 = vadd.f32 %v2070, %v2135
    %v2331 = vadd.f32 %v2071, %v2136
    %v2332 = vadd.f32 %v2072, %v2137
    %v2333 = vadd.f32 %v2073, %v2138
    %v2334 = vadd.f32 %v2074, %v2139
    %v2335 = vadd.f32 %v2075, %v2140
    %v2336 = vadd.f32 %v2076, %v2141
    %v2337 = vadd.f32 %v2077, %v2142
    %v2338 = vadd.f32 %v2078, %v2143
    %v2339 = vadd.f32 %v2079, %v2144
    %v2340 = vadd.f32 %v2276, %v2277
    %v2341 = vadd.f32 %v2340, %v2278
    %v2342 = vadd.f32 %v2341, %v2279
    %v2343 = vadd.f32 %v2342, %v2280
    %v2344 = vadd.f32 %v2343, %v2281
    %v2345 = vadd.f32 %v2344, %v2282
    %v2346 = vadd.f32 %v2345, %v2283
    %v2347 = vadd.f32 %v2346, %v2284
    %v2348 = vadd.f32 %v2347, %v2285
    %v2349 = vadd.f32 %v2348, %v2286
    %v2350 = vadd.f32 %v2349, %v2287
    %v2351 = vadd.f32 %v2350, %v2288
    %v2352 = vadd.f32 %v2351, %v2289
    %v2353 = vadd.f32 %v2352, %v2290
    %v2354 = vadd.f32 %v2353, %v2291
    %v2355 = vadd.f32 %v2354, %v2292
    %v2356 = vadd.f32 %v2355, %v2293
    %v2357 = vadd.f32 %v2356, %v2294
    %v2358 = vadd.f32 %v2357, %v2295
    %v2359 = vadd.f32 %v2358, %v2296
    %v2360 = vadd.f32 %v2359, %v2297
    %v2361 = vadd.f32 %v2360, %v2298
    %v2362 = vadd.f32 %v2361, %v2299
    %v2363 = vadd.f32 %v2362, %v2300
    %v2364 = vadd.f32 %v2363, %v2301
    %v2365 = vadd.f32 %v2364, %v2302
    %v2366 = vadd.f32 %v2365, %v2303
    %v2367 = vadd.f32 %v2366, %v2304
    %v2368 = vadd.f32 %v2367, %v2305
    %v2369 = vadd.f32 %v2368, %v2306
    %v2370 = vadd.f32 %v2369, %v2307
    %v2371 = vadd.f32 %v2370, %v2308
    %v2372 = vadd.f32 %v2371, %v2309
    %v2373 = vadd.f32 %v2372, %v2310
    %v2374 = vadd.f32 %v2373, %v2311
    %v2375 = vadd.f32 %v2374, %v2312
    %v2376 = vadd.f32 %v2375, %v2313
    %v2377 = vadd.f32 %v2376, %v2314
    %v2378 = vadd.f32 %v2377, %v2315
    %v2379 = vadd.f32 %v2378, %v2316
    %v2380 = vadd.f32 %v2379, %v2317
    %v2381 = vadd.f32 %v2380, %v2318
    %v2382 = vadd.f32 %v2381, %v2319
    %v2383 = vadd.f32 %v2382, %v2320
    %v2384 = vadd.f32 %v2383, %v2321
    %v2385 = vadd.f32 %v2384, %v2322
    %v2386 = vadd.f32 %v2385, %v2323
    %v2387 = vadd.f32 %v2386, %v2324
    %v2388 = vadd.f32 %v2387, %v2325
    %v2389 = vadd.f32 %v2388, %v2326
    %v2390 = vadd.f32 %v2389, %v2327
    %v2391 = vadd.f32 %v2390, %v2328
    %v2392 = vadd.f32 %v2391, %v2329
    %v2393 = vadd.f32 %v2392, %v2330
    %v2394 = vadd.f32 %v2393, %v2331
    %v2395 = vadd.f32 %v2394, %v2332
    %v2396 = vadd.f32 %v2395, %v2333
    %v2397 = vadd.f32 %v2396, %v2334
    %v2398 = vadd.f32 %v2397, %v2335
    %v2399 = vadd.f32 %v2398, %v2336
    %v2400 = vadd.f32 %v2399, %v2337
    %v2401 = vadd.f32 %v2400, %v2338
    %v2402 = vadd.f32 %v2401, %v2339
    %v2403 = vadd.f32 %v2275, %v2402
    %2404 = vst [vmem:[%s324] sm:$0xff] %v2403
    %s2405 = scalar_lea.vmem [#allocation2], 3072
    %v2406 = vld [vmem:[%s2405] sm:$0xff]
    %v2407 = vld [vmem:[%s2405 + $0x8] sm:$0xff]
    %v2408 = vld [vmem:[%s2405 + $0x10] sm:$0xff]
    %v2409 = vld [vmem:[%s2405 + $0x18] sm:$0xff]
    %v2410 = vld [vmem:[%s2405 + $0x20] sm:$0xff]
    %v2411 = vld [vmem:[%s2405 + $0x28] sm:$0xff]
    %v2412 = vld [vmem:[%s2405 + $0x30] sm:$0xff]
    %v2413 = vld [vmem:[%s2405 + $0x38] sm:$0xff]
    %v2414 = vld [vmem:[%s2405 + $0x40] sm:$0xff]
    %v2415 = vld [vmem:[%s2405 + $0x48] sm:$0xff]
    %v2416 = vld [vmem:[%s2405 + $0x50] sm:$0xff]
    %v2417 = vld [vmem:[%s2405 + $0x58] sm:$0xff]
    %v2418 = vld [vmem:[%s2405 + $0x60] sm:$0xff]
    %v2419 = vld [vmem:[%s2405 + $0x68] sm:$0xff]
    %v2420 = vld [vmem:[%s2405 + $0x70] sm:$0xff]
    %v2421 = vld [vmem:[%s2405 + $0x78] sm:$0xff]
    %v2422 = vld [vmem:[%s2405 + $0x80] sm:$0xff]
    %v2423 = vld [vmem:[%s2405 + $0x88] sm:$0xff]
    %v2424 = vld [vmem:[%s2405 + $0x90] sm:$0xff]
    %v2425 = vld [vmem:[%s2405 + $0x98] sm:$0xff]
    %v2426 = vld [vmem:[%s2405 + $0xa0] sm:$0xff]
    %v2427 = vld [vmem:[%s2405 + $0xa8] sm:$0xff]
    %v2428 = vld [vmem:[%s2405 + $0xb0] sm:$0xff]
    %v2429 = vld [vmem:[%s2405 + $0xb8] sm:$0xff]
    %v2430 = vld [vmem:[%s2405 + $0xc0] sm:$0xff]
    %v2431 = vld [vmem:[%s2405 + $0xc8] sm:$0xff]
    %v2432 = vld [vmem:[%s2405 + $0xd0] sm:$0xff]
    %v2433 = vld [vmem:[%s2405 + $0xd8] sm:$0xff]
    %v2434 = vld [vmem:[%s2405 + $0xe0] sm:$0xff]
    %v2435 = vld [vmem:[%s2405 + $0xe8] sm:$0xff]
    %v2436 = vld [vmem:[%s2405 + $0xf0] sm:$0xff]
    %v2437 = vld [vmem:[%s2405 + $0xf8] sm:$0xff]
    %v2438 = vld [vmem:[%s2405 + $0x100] sm:$0xff]
    %v2439 = vld [vmem:[%s2405 + $0x108] sm:$0xff]
    %v2440 = vld [vmem:[%s2405 + $0x110] sm:$0xff]
    %v2441 = vld [vmem:[%s2405 + $0x118] sm:$0xff]
    %v2442 = vld [vmem:[%s2405 + $0x120] sm:$0xff]
    %v2443 = vld [vmem:[%s2405 + $0x128] sm:$0xff]
    %v2444 = vld [vmem:[%s2405 + $0x130] sm:$0xff]
    %v2445 = vld [vmem:[%s2405 + $0x138] sm:$0xff]
    %v2446 = vld [vmem:[%s2405 + $0x140] sm:$0xff]
    %v2447 = vld [vmem:[%s2405 + $0x148] sm:$0xff]
    %v2448 = vld [vmem:[%s2405 + $0x150] sm:$0xff]
    %v2449 = vld [vmem:[%s2405 + $0x158] sm:$0xff]
    %v2450 = vld [vmem:[%s2405 + $0x160] sm:$0xff]
    %v2451 = vld [vmem:[%s2405 + $0x168] sm:$0xff]
    %v2452 = vld [vmem:[%s2405 + $0x170] sm:$0xff]
    %v2453 = vld [vmem:[%s2405 + $0x178] sm:$0xff]
    %v2454 = vld [vmem:[%s2405 + $0x180] sm:$0xff]
    %v2455 = vld [vmem:[%s2405 + $0x188] sm:$0xff]
    %v2456 = vld [vmem:[%s2405 + $0x190] sm:$0xff]
    %v2457 = vld [vmem:[%s2405 + $0x198] sm:$0xff]
    %v2458 = vld [vmem:[%s2405 + $0x1a0] sm:$0xff]
    %v2459 = vld [vmem:[%s2405 + $0x1a8] sm:$0xff]
    %v2460 = vld [vmem:[%s2405 + $0x1b0] sm:$0xff]
    %v2461 = vld [vmem:[%s2405 + $0x1b8] sm:$0xff]
    %v2462 = vld [vmem:[%s2405 + $0x1c0] sm:$0xff]
    %v2463 = vld [vmem:[%s2405 + $0x1c8] sm:$0xff]
    %v2464 = vld [vmem:[%s2405 + $0x1d0] sm:$0xff]
    %v2465 = vld [vmem:[%s2405 + $0x1d8] sm:$0xff]
    %v2466 = vld [vmem:[%s2405 + $0x1e0] sm:$0xff]
    %v2467 = vld [vmem:[%s2405 + $0x1e8] sm:$0xff]
    %v2468 = vld [vmem:[%s2405 + $0x1f0] sm:$0xff]
    %v2469 = vld [vmem:[%s2405 + $0x1f8] sm:$0xff]
    %s2470 = scalar_lea.vmem [#allocation5], 3072
    %v2471 = vld [vmem:[%s2470] sm:$0xff]
    %v2472 = vld [vmem:[%s2470 + $0x8] sm:$0xff]
    %v2473 = vld [vmem:[%s2470 + $0x10] sm:$0xff]
    %v2474 = vld [vmem:[%s2470 + $0x18] sm:$0xff]
    %v2475 = vld [vmem:[%s2470 + $0x20] sm:$0xff]
    %v2476 = vld [vmem:[%s2470 + $0x28] sm:$0xff]
    %v2477 = vld [vmem:[%s2470 + $0x30] sm:$0xff]
    %v2478 = vld [vmem:[%s2470 + $0x38] sm:$0xff]
    %v2479 = vld [vmem:[%s2470 + $0x40] sm:$0xff]
    %v2480 = vld [vmem:[%s2470 + $0x48] sm:$0xff]
    %v2481 = vld [vmem:[%s2470 + $0x50] sm:$0xff]
    %v2482 = vld [vmem:[%s2470 + $0x58] sm:$0xff]
    %v2483 = vld [vmem:[%s2470 + $0x60] sm:$0xff]
    %v2484 = vld [vmem:[%s2470 + $0x68] sm:$0xff]
    %v2485 = vld [vmem:[%s2470 + $0x70] sm:$0xff]
    %v2486 = vld [vmem:[%s2470 + $0x78] sm:$0xff]
    %v2487 = vld [vmem:[%s2470 + $0x80] sm:$0xff]
    %v2488 = vld [vmem:[%s2470 + $0x88] sm:$0xff]
    %v2489 = vld [vmem:[%s2470 + $0x90] sm:$0xff]
    %v2490 = vld [vmem:[%s2470 + $0x98] sm:$0xff]
    %v2491 = vld [vmem:[%s2470 + $0xa0] sm:$0xff]
    %v2492 = vld [vmem:[%s2470 + $0xa8] sm:$0xff]
    %v2493 = vld [vmem:[%s2470 + $0xb0] sm:$0xff]
    %v2494 = vld [vmem:[%s2470 + $0xb8] sm:$0xff]
    %v2495 = vld [vmem:[%s2470 + $0xc0] sm:$0xff]
    %v2496 = vld [vmem:[%s2470 + $0xc8] sm:$0xff]
    %v2497 = vld [vmem:[%s2470 + $0xd0] sm:$0xff]
    %v2498 = vld [vmem:[%s2470 + $0xd8] sm:$0xff]
    %v2499 = vld [vmem:[%s2470 + $0xe0] sm:$0xff]
    %v2500 = vld [vmem:[%s2470 + $0xe8] sm:$0xff]
    %v2501 = vld [vmem:[%s2470 + $0xf0] sm:$0xff]
    %v2502 = vld [vmem:[%s2470 + $0xf8] sm:$0xff]
    %v2503 = vld [vmem:[%s2470 + $0x100] sm:$0xff]
    %v2504 = vld [vmem:[%s2470 + $0x108] sm:$0xff]
    %v2505 = vld [vmem:[%s2470 + $0x110] sm:$0xff]
    %v2506 = vld [vmem:[%s2470 + $0x118] sm:$0xff]
    %v2507 = vld [vmem:[%s2470 + $0x120] sm:$0xff]
    %v2508 = vld [vmem:[%s2470 + $0x128] sm:$0xff]
    %v2509 = vld [vmem:[%s2470 + $0x130] sm:$0xff]
    %v2510 = vld [vmem:[%s2470 + $0x138] sm:$0xff]
    %v2511 = vld [vmem:[%s2470 + $0x140] sm:$0xff]
    %v2512 = vld [vmem:[%s2470 + $0x148] sm:$0xff]
    %v2513 = vld [vmem:[%s2470 + $0x150] sm:$0xff]
    %v2514 = vld [vmem:[%s2470 + $0x158] sm:$0xff]
    %v2515 = vld [vmem:[%s2470 + $0x160] sm:$0xff]
    %v2516 = vld [vmem:[%s2470 + $0x168] sm:$0xff]
    %v2517 = vld [vmem:[%s2470 + $0x170] sm:$0xff]
    %v2518 = vld [vmem:[%s2470 + $0x178] sm:$0xff]
    %v2519 = vld [vmem:[%s2470 + $0x180] sm:$0xff]
    %v2520 = vld [vmem:[%s2470 + $0x188] sm:$0xff]
    %v2521 = vld [vmem:[%s2470 + $0x190] sm:$0xff]
    %v2522 = vld [vmem:[%s2470 + $0x198] sm:$0xff]
    %v2523 = vld [vmem:[%s2470 + $0x1a0] sm:$0xff]
    %v2524 = vld [vmem:[%s2470 + $0x1a8] sm:$0xff]
    %v2525 = vld [vmem:[%s2470 + $0x1b0] sm:$0xff]
    %v2526 = vld [vmem:[%s2470 + $0x1b8] sm:$0xff]
    %v2527 = vld [vmem:[%s2470 + $0x1c0] sm:$0xff]
    %v2528 = vld [vmem:[%s2470 + $0x1c8] sm:$0xff]
    %v2529 = vld [vmem:[%s2470 + $0x1d0] sm:$0xff]
    %v2530 = vld [vmem:[%s2470 + $0x1d8] sm:$0xff]
    %v2531 = vld [vmem:[%s2470 + $0x1e0] sm:$0xff]
    %v2532 = vld [vmem:[%s2470 + $0x1e8] sm:$0xff]
    %v2533 = vld [vmem:[%s2470 + $0x1f0] sm:$0xff]
    %v2534 = vld [vmem:[%s2470 + $0x1f8] sm:$0xff]
    %v2535 = vld [vmem:[#allocation7] sm:$0xff]
    %v2536 = vmul.f32 %v2406, %v2471
    %v2537 = vmul.f32 %v2407, %v2472
    %v2538 = vmul.f32 %v2408, %v2473
    %v2539 = vmul.f32 %v2409, %v2474
    %v2540 = vmul.f32 %v2410, %v2475
    %v2541 = vmul.f32 %v2411, %v2476
    %v2542 = vmul.f32 %v2412, %v2477
    %v2543 = vmul.f32 %v2413, %v2478
    %v2544 = vmul.f32 %v2414, %v2479
    %v2545 = vmul.f32 %v2415, %v2480
    %v2546 = vmul.f32 %v2416, %v2481
    %v2547 = vmul.f32 %v2417, %v2482
    %v2548 = vmul.f32 %v2418, %v2483
    %v2549 = vmul.f32 %v2419, %v2484
    %v2550 = vmul.f32 %v2420, %v2485
    %v2551 = vmul.f32 %v2421, %v2486
    %v2552 = vmul.f32 %v2422, %v2487
    %v2553 = vmul.f32 %v2423, %v2488
    %v2554 = vmul.f32 %v2424, %v2489
    %v2555 = vmul.f32 %v2425, %v2490
    %v2556 = vmul.f32 %v2426, %v2491
    %v2557 = vmul.f32 %v2427, %v2492
    %v2558 = vmul.f32 %v2428, %v2493
    %v2559 = vmul.f32 %v2429, %v2494
    %v2560 = vmul.f32 %v2430, %v2495
    %v2561 = vmul.f32 %v2431, %v2496
    %v2562 = vmul.f32 %v2432, %v2497
    %v2563 = vmul.f32 %v2433, %v2498
    %v2564 = vmul.f32 %v2434, %v2499
    %v2565 = vmul.f32 %v2435, %v2500
    %v2566 = vmul.f32 %v2436, %v2501
    %v2567 = vmul.f32 %v2437, %v2502
    %v2568 = vmul.f32 %v2438, %v2503
    %v2569 = vmul.f32 %v2439, %v2504
    %v2570 = vmul.f32 %v2440, %v2505
    %v2571 = vmul.f32 %v2441, %v2506
    %v2572 = vmul.f32 %v2442, %v2507
    %v2573 = vmul.f32 %v2443, %v2508
    %v2574 = vmul.f32 %v2444, %v2509
    %v2575 = vmul.f32 %v2445, %v2510
    %v2576 = vmul.f32 %v2446, %v2511
    %v2577 = vmul.f32 %v2447, %v2512
    %v2578 = vmul.f32 %v2448, %v2513
    %v2579 = vmul.f32 %v2449, %v2514
    %v2580 = vmul.f32 %v2450, %v2515
    %v2581 = vmul.f32 %v2451, %v2516
    %v2582 = vmul.f32 %v2452, %v2517
    %v2583 = vmul.f32 %v2453, %v2518
    %v2584 = vmul.f32 %v2454, %v2519
    %v2585 = vmul.f32 %v2455, %v2520
    %v2586 = vmul.f32 %v2456, %v2521
    %v2587 = vmul.f32 %v2457, %v2522
    %v2588 = vmul.f32 %v2458, %v2523
    %v2589 = vmul.f32 %v2459, %v2524
    %v2590 = vmul.f32 %v2460, %v2525
    %v2591 = vmul.f32 %v2461, %v2526
    %v2592 = vmul.f32 %v2462, %v2527
    %v2593 = vmul.f32 %v2463, %v2528
    %v2594 = vmul.f32 %v2464, %v2529
    %v2595 = vmul.f32 %v2465, %v2530
    %v2596 = vmul.f32 %v2466, %v2531
    %v2597 = vmul.f32 %v2467, %v2532
    %v2598 = vmul.f32 %v2468, %v2533
    %v2599 = vmul.f32 %v2469, %v2534
    %v2600 = vadd.f32 %v2536, %v2537
    %v2601 = vadd.f32 %v2600, %v2538
    %v2602 = vadd.f32 %v2601, %v2539
    %v2603 = vadd.f32 %v2602, %v2540
    %v2604 = vadd.f32 %v2603, %v2541
    %v2605 = vadd.f32 %v2604, %v2542
    %v2606 = vadd.f32 %v2605, %v2543
    %v2607 = vadd.f32 %v2606, %v2544
    %v2608 = vadd.f32 %v2607, %v2545
    %v2609 = vadd.f32 %v2608, %v2546
    %v2610 = vadd.f32 %v2609, %v2547
    %v2611 = vadd.f32 %v2610, %v2548
    %v2612 = vadd.f32 %v2611, %v2549
    %v2613 = vadd.f32 %v2612, %v2550
    %v2614 = vadd.f32 %v2613, %v2551
    %v2615 = vadd.f32 %v2614, %v2552
    %v2616 = vadd.f32 %v2615, %v2553
    %v2617 = vadd.f32 %v2616, %v2554
    %v2618 = vadd.f32 %v2617, %v2555
    %v2619 = vadd.f32 %v2618, %v2556
    %v2620 = vadd.f32 %v2619, %v2557
    %v2621 = vadd.f32 %v2620, %v2558
    %v2622 = vadd.f32 %v2621, %v2559
    %v2623 = vadd.f32 %v2622, %v2560
    %v2624 = vadd.f32 %v2623, %v2561
    %v2625 = vadd.f32 %v2624, %v2562
    %v2626 = vadd.f32 %v2625, %v2563
    %v2627 = vadd.f32 %v2626, %v2564
    %v2628 = vadd.f32 %v2627, %v2565
    %v2629 = vadd.f32 %v2628, %v2566
    %v2630 = vadd.f32 %v2629, %v2567
    %v2631 = vadd.f32 %v2630, %v2568
    %v2632 = vadd.f32 %v2631, %v2569
    %v2633 = vadd.f32 %v2632, %v2570
    %v2634 = vadd.f32 %v2633, %v2571
    %v2635 = vadd.f32 %v2634, %v2572
    %v2636 = vadd.f32 %v2635, %v2573
    %v2637 = vadd.f32 %v2636, %v2574
    %v2638 = vadd.f32 %v2637, %v2575
    %v2639 = vadd.f32 %v2638, %v2576
    %v2640 = vadd.f32 %v2639, %v2577
    %v2641 = vadd.f32 %v2640, %v2578
    %v2642 = vadd.f32 %v2641, %v2579
    %v2643 = vadd.f32 %v2642, %v2580
    %v2644 = vadd.f32 %v2643, %v2581
    %v2645 = vadd.f32 %v2644, %v2582
    %v2646 = vadd.f32 %v2645, %v2583
    %v2647 = vadd.f32 %v2646, %v2584
    %v2648 = vadd.f32 %v2647, %v2585
    %v2649 = vadd.f32 %v2648, %v2586
    %v2650 = vadd.f32 %v2649, %v2587
    %v2651 = vadd.f32 %v2650, %v2588
    %v2652 = vadd.f32 %v2651, %v2589
    %v2653 = vadd.f32 %v2652, %v2590
    %v2654 = vadd.f32 %v2653, %v2591
    %v2655 = vadd.f32 %v2654, %v2592
    %v2656 = vadd.f32 %v2655, %v2593
    %v2657 = vadd.f32 %v2656, %v2594
    %v2658 = vadd.f32 %v2657, %v2595
    %v2659 = vadd.f32 %v2658, %v2596
    %v2660 = vadd.f32 %v2659, %v2597
    %v2661 = vadd.f32 %v2660, %v2598
    %v2662 = vadd.f32 %v2661, %v2599
    %v2663 = vadd.f32 %v2535, %v2662
    %2664 = vst [vmem:[#allocation7] sm:$0xff] %v2663
    %v2665 = vld [vmem:[%s324] sm:$0xff]
    %v2666 = vadd.f32 %v2406, %v2471
    %v2667 = vadd.f32 %v2407, %v2472
    %v2668 = vadd.f32 %v2408, %v2473
    %v2669 = vadd.f32 %v2409, %v2474
    %v2670 = vadd.f32 %v2410, %v2475
    %v2671 = vadd.f32 %v2411, %v2476
    %v2672 = vadd.f32 %v2412, %v2477
    %v2673 = vadd.f32 %v2413, %v2478
    %v2674 = vadd.f32 %v2414, %v2479
    %v2675 = vadd.f32 %v2415, %v2480
    %v2676 = vadd.f32 %v2416, %v2481
    %v2677 = vadd.f32 %v2417, %v2482
    %v2678 = vadd.f32 %v2418, %v2483
    %v2679 = vadd.f32 %v2419, %v2484
    %v2680 = vadd.f32 %v2420, %v2485
    %v2681 = vadd.f32 %v2421, %v2486
    %v2682 = vadd.f32 %v2422, %v2487
    %v2683 = vadd.f32 %v2423, %v2488
    %v2684 = vadd.f32 %v2424, %v2489
    %v2685 = vadd.f32 %v2425, %v2490
    %v2686 = vadd.f32 %v2426, %v2491
    %v2687 = vadd.f32 %v2427, %v2492
    %v2688 = vadd.f32 %v2428, %v2493
    %v2689 = vadd.f32 %v2429, %v2494
    %v2690 = vadd.f32 %v2430, %v2495
    %v2691 = vadd.f32 %v2431, %v2496
    %v2692 = vadd.f32 %v2432, %v2497
    %v2693 = vadd.f32 %v2433, %v2498
    %v2694 = vadd.f32 %v2434, %v2499
    %v2695 = vadd.f32 %v2435, %v2500
    %v2696 = vadd.f32 %v2436, %v2501
    %v2697 = vadd.f32 %v2437, %v2502
    %v2698 = vadd.f32 %v2438, %v2503
    %v2699 = vadd.f32 %v2439, %v2504
    %v2700 = vadd.f32 %v2440, %v2505
    %v2701 = vadd.f32 %v2441, %v2506
    %v2702 = vadd.f32 %v2442, %v2507
    %v2703 = vadd.f32 %v2443, %v2508
    %v2704 = vadd.f32 %v2444, %v2509
    %v2705 = vadd.f32 %v2445, %v2510
    %v2706 = vadd.f32 %v2446, %v2511
    %v2707 = vadd.f32 %v2447, %v2512
    %v2708 = vadd.f32 %v2448, %v2513
    %v2709 = vadd.f32 %v2449, %v2514
    %v2710 = vadd.f32 %v2450, %v2515
    %v2711 = vadd.f32 %v2451, %v2516
    %v2712 = vadd.f32 %v2452, %v2517
    %v2713 = vadd.f32 %v2453, %v2518
    %v2714 = vadd.f32 %v2454, %v2519
    %v2715 = vadd.f32 %v2455, %v2520
    %v2716 = vadd.f32 %v2456, %v2521
    %v2717 = vadd.f32 %v2457, %v2522
    %v2718 = vadd.f32 %v2458, %v2523
    %v2719 = vadd.f32 %v2459, %v2524
    %v2720 = vadd.f32 %v2460, %v2525
    %v2721 = vadd.f32 %v2461, %v2526
    %v2722 = vadd.f32 %v2462, %v2527
    %v2723 = vadd.f32 %v2463, %v2528
    %v2724 = vadd.f32 %v2464, %v2529
    %v2725 = vadd.f32 %v2465, %v2530
    %v2726 = vadd.f32 %v2466, %v2531
    %v2727 = vadd.f32 %v2467, %v2532
    %v2728 = vadd.f32 %v2468, %v2533
    %v2729 = vadd.f32 %v2469, %v2534
    %v2730 = vadd.f32 %v2666, %v2667
    %v2731 = vadd.f32 %v2730, %v2668
    %v2732 = vadd.f32 %v2731, %v2669
    %v2733 = vadd.f32 %v2732, %v2670
    %v2734 = vadd.f32 %v2733, %v2671
    %v2735 = vadd.f32 %v2734, %v2672
    %v2736 = vadd.f32 %v2735, %v2673
    %v2737 = vadd.f32 %v2736, %v2674
    %v2738 = vadd.f32 %v2737, %v2675
    %v2739 = vadd.f32 %v2738, %v2676
    %v2740 = vadd.f32 %v2739, %v2677
    %v2741 = vadd.f32 %v2740, %v2678
    %v2742 = vadd.f32 %v2741, %v2679
    %v2743 = vadd.f32 %v2742, %v2680
    %v2744 = vadd.f32 %v2743, %v2681
    %v2745 = vadd.f32 %v2744, %v2682
    %v2746 = vadd.f32 %v2745, %v2683
    %v2747 = vadd.f32 %v2746, %v2684
    %v2748 = vadd.f32 %v2747, %v2685
    %v2749 = vadd.f32 %v2748, %v2686
    %v2750 = vadd.f32 %v2749, %v2687
    %v2751 = vadd.f32 %v2750, %v2688
    %v2752 = vadd.f32 %v2751, %v2689
    %v2753 = vadd.f32 %v2752, %v2690
    %v2754 = vadd.f32 %v2753, %v2691
    %v2755 = vadd.f32 %v2754, %v2692
    %v2756 = vadd.f32 %v2755, %v2693
    %v2757 = vadd.f32 %v2756, %v2694
    %v2758 = vadd.f32 %v2757, %v2695
    %v2759 = vadd.f32 %v2758, %v2696
    %v2760 = vadd.f32 %v2759, %v2697
    %v2761 = vadd.f32 %v2760, %v2698
    %v2762 = vadd.f32 %v2761, %v2699
    %v2763 = vadd.f32 %v2762, %v2700
    %v2764 = vadd.f32 %v2763, %v2701
    %v2765 = vadd.f32 %v2764, %v2702
    %v2766 = vadd.f32 %v2765, %v2703
    %v2767 = vadd.f32 %v2766, %v2704
    %v2768 = vadd.f32 %v2767, %v2705
    %v2769 = vadd.f32 %v2768, %v2706
    %v2770 = vadd.f32 %v2769, %v2707
    %v2771 = vadd.f32 %v2770, %v2708
    %v2772 = vadd.f32 %v2771, %v2709
    %v2773 = vadd.f32 %v2772, %v2710
    %v2774 = vadd.f32 %v2773, %v2711
    %v2775 = vadd.f32 %v2774, %v2712
    %v2776 = vadd.f32 %v2775, %v2713
    %v2777 = vadd.f32 %v2776, %v2714
    %v2778 = vadd.f32 %v2777, %v2715
    %v2779 = vadd.f32 %v2778, %v2716
    %v2780 = vadd.f32 %v2779, %v2717
    %v2781 = vadd.f32 %v2780, %v2718
    %v2782 = vadd.f32 %v2781, %v2719
    %v2783 = vadd.f32 %v2782, %v2720
    %v2784 = vadd.f32 %v2783, %v2721
    %v2785 = vadd.f32 %v2784, %v2722
    %v2786 = vadd.f32 %v2785, %v2723
    %v2787 = vadd.f32 %v2786, %v2724
    %v2788 = vadd.f32 %v2787, %v2725
    %v2789 = vadd.f32 %v2788, %v2726
    %v2790 = vadd.f32 %v2789, %v2727
    %v2791 = vadd.f32 %v2790, %v2728
    %v2792 = vadd.f32 %v2791, %v2729
    %v2793 = vadd.f32 %v2665, %v2792
    %2794 = vst [vmem:[%s324] sm:$0xff] %v2793
    %s2795 = scalar_lea.vmem [#allocation2], 3584
    %v2796 = vld [vmem:[%s2795] sm:$0xff]
    %v2797 = vld [vmem:[%s2795 + $0x8] sm:$0xff]
    %v2798 = vld [vmem:[%s2795 + $0x10] sm:$0xff]
    %v2799 = vld [vmem:[%s2795 + $0x18] sm:$0xff]
    %v2800 = vld [vmem:[%s2795 + $0x20] sm:$0xff]
    %v2801 = vld [vmem:[%s2795 + $0x28] sm:$0xff]
    %v2802 = vld [vmem:[%s2795 + $0x30] sm:$0xff]
    %v2803 = vld [vmem:[%s2795 + $0x38] sm:$0xff]
    %v2804 = vld [vmem:[%s2795 + $0x40] sm:$0xff]
    %v2805 = vld [vmem:[%s2795 + $0x48] sm:$0xff]
    %v2806 = vld [vmem:[%s2795 + $0x50] sm:$0xff]
    %v2807 = vld [vmem:[%s2795 + $0x58] sm:$0xff]
    %v2808 = vld [vmem:[%s2795 + $0x60] sm:$0xff]
    %v2809 = vld [vmem:[%s2795 + $0x68] sm:$0xff]
    %v2810 = vld [vmem:[%s2795 + $0x70] sm:$0xff]
    %v2811 = vld [vmem:[%s2795 + $0x78] sm:$0xff]
    %v2812 = vld [vmem:[%s2795 + $0x80] sm:$0xff]
    %v2813 = vld [vmem:[%s2795 + $0x88] sm:$0xff]
    %v2814 = vld [vmem:[%s2795 + $0x90] sm:$0xff]
    %v2815 = vld [vmem:[%s2795 + $0x98] sm:$0xff]
    %v2816 = vld [vmem:[%s2795 + $0xa0] sm:$0xff]
    %v2817 = vld [vmem:[%s2795 + $0xa8] sm:$0xff]
    %v2818 = vld [vmem:[%s2795 + $0xb0] sm:$0xff]
    %v2819 = vld [vmem:[%s2795 + $0xb8] sm:$0xff]
    %v2820 = vld [vmem:[%s2795 + $0xc0] sm:$0xff]
    %v2821 = vld [vmem:[%s2795 + $0xc8] sm:$0xff]
    %v2822 = vld [vmem:[%s2795 + $0xd0] sm:$0xff]
    %v2823 = vld [vmem:[%s2795 + $0xd8] sm:$0xff]
    %v2824 = vld [vmem:[%s2795 + $0xe0] sm:$0xff]
    %v2825 = vld [vmem:[%s2795 + $0xe8] sm:$0xff]
    %v2826 = vld [vmem:[%s2795 + $0xf0] sm:$0xff]
    %v2827 = vld [vmem:[%s2795 + $0xf8] sm:$0xff]
    %v2828 = vld [vmem:[%s2795 + $0x100] sm:$0xff]
    %v2829 = vld [vmem:[%s2795 + $0x108] sm:$0xff]
    %v2830 = vld [vmem:[%s2795 + $0x110] sm:$0xff]
    %v2831 = vld [vmem:[%s2795 + $0x118] sm:$0xff]
    %v2832 = vld [vmem:[%s2795 + $0x120] sm:$0xff]
    %v2833 = vld [vmem:[%s2795 + $0x128] sm:$0xff]
    %v2834 = vld [vmem:[%s2795 + $0x130] sm:$0xff]
    %v2835 = vld [vmem:[%s2795 + $0x138] sm:$0xff]
    %v2836 = vld [vmem:[%s2795 + $0x140] sm:$0xff]
    %v2837 = vld [vmem:[%s2795 + $0x148] sm:$0xff]
    %v2838 = vld [vmem:[%s2795 + $0x150] sm:$0xff]
    %v2839 = vld [vmem:[%s2795 + $0x158] sm:$0xff]
    %v2840 = vld [vmem:[%s2795 + $0x160] sm:$0xff]
    %v2841 = vld [vmem:[%s2795 + $0x168] sm:$0xff]
    %v2842 = vld [vmem:[%s2795 + $0x170] sm:$0xff]
    %v2843 = vld [vmem:[%s2795 + $0x178] sm:$0xff]
    %v2844 = vld [vmem:[%s2795 + $0x180] sm:$0xff]
    %v2845 = vld [vmem:[%s2795 + $0x188] sm:$0xff]
    %v2846 = vld [vmem:[%s2795 + $0x190] sm:$0xff]
    %v2847 = vld [vmem:[%s2795 + $0x198] sm:$0xff]
    %v2848 = vld [vmem:[%s2795 + $0x1a0] sm:$0xff]
    %v2849 = vld [vmem:[%s2795 + $0x1a8] sm:$0xff]
    %v2850 = vld [vmem:[%s2795 + $0x1b0] sm:$0xff]
    %v2851 = vld [vmem:[%s2795 + $0x1b8] sm:$0xff]
    %v2852 = vld [vmem:[%s2795 + $0x1c0] sm:$0xff]
    %v2853 = vld [vmem:[%s2795 + $0x1c8] sm:$0xff]
    %v2854 = vld [vmem:[%s2795 + $0x1d0] sm:$0xff]
    %v2855 = vld [vmem:[%s2795 + $0x1d8] sm:$0xff]
    %v2856 = vld [vmem:[%s2795 + $0x1e0] sm:$0xff]
    %v2857 = vld [vmem:[%s2795 + $0x1e8] sm:$0xff]
    %v2858 = vld [vmem:[%s2795 + $0x1f0] sm:$0xff]
    %v2859 = vld [vmem:[%s2795 + $0x1f8] sm:$0xff]
    %s2860 = scalar_lea.vmem [#allocation5], 3584
    %v2861 = vld [vmem:[%s2860] sm:$0xff]
    %v2862 = vld [vmem:[%s2860 + $0x8] sm:$0xff]
    %v2863 = vld [vmem:[%s2860 + $0x10] sm:$0xff]
    %v2864 = vld [vmem:[%s2860 + $0x18] sm:$0xff]
    %v2865 = vld [vmem:[%s2860 + $0x20] sm:$0xff]
    %v2866 = vld [vmem:[%s2860 + $0x28] sm:$0xff]
    %v2867 = vld [vmem:[%s2860 + $0x30] sm:$0xff]
    %v2868 = vld [vmem:[%s2860 + $0x38] sm:$0xff]
    %v2869 = vld [vmem:[%s2860 + $0x40] sm:$0xff]
    %v2870 = vld [vmem:[%s2860 + $0x48] sm:$0xff]
    %v2871 = vld [vmem:[%s2860 + $0x50] sm:$0xff]
    %v2872 = vld [vmem:[%s2860 + $0x58] sm:$0xff]
    %v2873 = vld [vmem:[%s2860 + $0x60] sm:$0xff]
    %v2874 = vld [vmem:[%s2860 + $0x68] sm:$0xff]
    %v2875 = vld [vmem:[%s2860 + $0x70] sm:$0xff]
    %v2876 = vld [vmem:[%s2860 + $0x78] sm:$0xff]
    %v2877 = vld [vmem:[%s2860 + $0x80] sm:$0xff]
    %v2878 = vld [vmem:[%s2860 + $0x88] sm:$0xff]
    %v2879 = vld [vmem:[%s2860 + $0x90] sm:$0xff]
    %v2880 = vld [vmem:[%s2860 + $0x98] sm:$0xff]
    %v2881 = vld [vmem:[%s2860 + $0xa0] sm:$0xff]
    %v2882 = vld [vmem:[%s2860 + $0xa8] sm:$0xff]
    %v2883 = vld [vmem:[%s2860 + $0xb0] sm:$0xff]
    %v2884 = vld [vmem:[%s2860 + $0xb8] sm:$0xff]
    %v2885 = vld [vmem:[%s2860 + $0xc0] sm:$0xff]
    %v2886 = vld [vmem:[%s2860 + $0xc8] sm:$0xff]
    %v2887 = vld [vmem:[%s2860 + $0xd0] sm:$0xff]
    %v2888 = vld [vmem:[%s2860 + $0xd8] sm:$0xff]
    %v2889 = vld [vmem:[%s2860 + $0xe0] sm:$0xff]
    %v2890 = vld [vmem:[%s2860 + $0xe8] sm:$0xff]
    %v2891 = vld [vmem:[%s2860 + $0xf0] sm:$0xff]
    %v2892 = vld [vmem:[%s2860 + $0xf8] sm:$0xff]
    %v2893 = vld [vmem:[%s2860 + $0x100] sm:$0xff]
    %v2894 = vld [vmem:[%s2860 + $0x108] sm:$0xff]
    %v2895 = vld [vmem:[%s2860 + $0x110] sm:$0xff]
    %v2896 = vld [vmem:[%s2860 + $0x118] sm:$0xff]
    %v2897 = vld [vmem:[%s2860 + $0x120] sm:$0xff]
    %v2898 = vld [vmem:[%s2860 + $0x128] sm:$0xff]
    %v2899 = vld [vmem:[%s2860 + $0x130] sm:$0xff]
    %v2900 = vld [vmem:[%s2860 + $0x138] sm:$0xff]
    %v2901 = vld [vmem:[%s2860 + $0x140] sm:$0xff]
    %v2902 = vld [vmem:[%s2860 + $0x148] sm:$0xff]
    %v2903 = vld [vmem:[%s2860 + $0x150] sm:$0xff]
    %v2904 = vld [vmem:[%s2860 + $0x158] sm:$0xff]
    %v2905 = vld [vmem:[%s2860 + $0x160] sm:$0xff]
    %v2906 = vld [vmem:[%s2860 + $0x168] sm:$0xff]
    %v2907 = vld [vmem:[%s2860 + $0x170] sm:$0xff]
    %v2908 = vld [vmem:[%s2860 + $0x178] sm:$0xff]
    %v2909 = vld [vmem:[%s2860 + $0x180] sm:$0xff]
    %v2910 = vld [vmem:[%s2860 + $0x188] sm:$0xff]
    %v2911 = vld [vmem:[%s2860 + $0x190] sm:$0xff]
    %v2912 = vld [vmem:[%s2860 + $0x198] sm:$0xff]
    %v2913 = vld [vmem:[%s2860 + $0x1a0] sm:$0xff]
    %v2914 = vld [vmem:[%s2860 + $0x1a8] sm:$0xff]
    %v2915 = vld [vmem:[%s2860 + $0x1b0] sm:$0xff]
    %v2916 = vld [vmem:[%s2860 + $0x1b8] sm:$0xff]
    %v2917 = vld [vmem:[%s2860 + $0x1c0] sm:$0xff]
    %v2918 = vld [vmem:[%s2860 + $0x1c8] sm:$0xff]
    %v2919 = vld [vmem:[%s2860 + $0x1d0] sm:$0xff]
    %v2920 = vld [vmem:[%s2860 + $0x1d8] sm:$0xff]
    %v2921 = vld [vmem:[%s2860 + $0x1e0] sm:$0xff]
    %v2922 = vld [vmem:[%s2860 + $0x1e8] sm:$0xff]
    %v2923 = vld [vmem:[%s2860 + $0x1f0] sm:$0xff]
    %v2924 = vld [vmem:[%s2860 + $0x1f8] sm:$0xff]
    %v2925 = vld [vmem:[#allocation7] sm:$0xff]
    %v2926 = vmul.f32 %v2796, %v2861
    %v2927 = vmul.f32 %v2797, %v2862
    %v2928 = vmul.f32 %v2798, %v2863
    %v2929 = vmul.f32 %v2799, %v2864
    %v2930 = vmul.f32 %v2800, %v2865
    %v2931 = vmul.f32 %v2801, %v2866
    %v2932 = vmul.f32 %v2802, %v2867
    %v2933 = vmul.f32 %v2803, %v2868
    %v2934 = vmul.f32 %v2804, %v2869
    %v2935 = vmul.f32 %v2805, %v2870
    %v2936 = vmul.f32 %v2806, %v2871
    %v2937 = vmul.f32 %v2807, %v2872
    %v2938 = vmul.f32 %v2808, %v2873
    %v2939 = vmul.f32 %v2809, %v2874
    %v2940 = vmul.f32 %v2810, %v2875
    %v2941 = vmul.f32 %v2811, %v2876
    %v2942 = vmul.f32 %v2812, %v2877
    %v2943 = vmul.f32 %v2813, %v2878
    %v2944 = vmul.f32 %v2814, %v2879
    %v2945 = vmul.f32 %v2815, %v2880
    %v2946 = vmul.f32 %v2816, %v2881
    %v2947 = vmul.f32 %v2817, %v2882
    %v2948 = vmul.f32 %v2818, %v2883
    %v2949 = vmul.f32 %v2819, %v2884
    %v2950 = vmul.f32 %v2820, %v2885
    %v2951 = vmul.f32 %v2821, %v2886
    %v2952 = vmul.f32 %v2822, %v2887
    %v2953 = vmul.f32 %v2823, %v2888
    %v2954 = vmul.f32 %v2824, %v2889
    %v2955 = vmul.f32 %v2825, %v2890
    %v2956 = vmul.f32 %v2826, %v2891
    %v2957 = vmul.f32 %v2827, %v2892
    %v2958 = vmul.f32 %v2828, %v2893
    %v2959 = vmul.f32 %v2829, %v2894
    %v2960 = vmul.f32 %v2830, %v2895
    %v2961 = vmul.f32 %v2831, %v2896
    %v2962 = vmul.f32 %v2832, %v2897
    %v2963 = vmul.f32 %v2833, %v2898
    %v2964 = vmul.f32 %v2834, %v2899
    %v2965 = vmul.f32 %v2835, %v2900
    %v2966 = vmul.f32 %v2836, %v2901
    %v2967 = vmul.f32 %v2837, %v2902
    %v2968 = vmul.f32 %v2838, %v2903
    %v2969 = vmul.f32 %v2839, %v2904
    %v2970 = vmul.f32 %v2840, %v2905
    %v2971 = vmul.f32 %v2841, %v2906
    %v2972 = vmul.f32 %v2842, %v2907
    %v2973 = vmul.f32 %v2843, %v2908
    %v2974 = vmul.f32 %v2844, %v2909
    %v2975 = vmul.f32 %v2845, %v2910
    %v2976 = vmul.f32 %v2846, %v2911
    %v2977 = vmul.f32 %v2847, %v2912
    %v2978 = vmul.f32 %v2848, %v2913
    %v2979 = vmul.f32 %v2849, %v2914
    %v2980 = vmul.f32 %v2850, %v2915
    %v2981 = vmul.f32 %v2851, %v2916
    %v2982 = vmul.f32 %v2852, %v2917
    %v2983 = vmul.f32 %v2853, %v2918
    %v2984 = vmul.f32 %v2854, %v2919
    %v2985 = vmul.f32 %v2855, %v2920
    %v2986 = vmul.f32 %v2856, %v2921
    %v2987 = vmul.f32 %v2857, %v2922
    %v2988 = vmul.f32 %v2858, %v2923
    %v2989 = vmul.f32 %v2859, %v2924
    %v2990 = vadd.f32 %v2926, %v2927
    %v2991 = vadd.f32 %v2990, %v2928
    %v2992 = vadd.f32 %v2991, %v2929
    %v2993 = vadd.f32 %v2992, %v2930
    %v2994 = vadd.f32 %v2993, %v2931
    %v2995 = vadd.f32 %v2994, %v2932
    %v2996 = vadd.f32 %v2995, %v2933
    %v2997 = vadd.f32 %v2996, %v2934
    %v2998 = vadd.f32 %v2997, %v2935
    %v2999 = vadd.f32 %v2998, %v2936
    %v3000 = vadd.f32 %v2999, %v2937
    %v3001 = vadd.f32 %v3000, %v2938
    %v3002 = vadd.f32 %v3001, %v2939
    %v3003 = vadd.f32 %v3002, %v2940
    %v3004 = vadd.f32 %v3003, %v2941
    %v3005 = vadd.f32 %v3004, %v2942
    %v3006 = vadd.f32 %v3005, %v2943
    %v3007 = vadd.f32 %v3006, %v2944
    %v3008 = vadd.f32 %v3007, %v2945
    %v3009 = vadd.f32 %v3008, %v2946
    %v3010 = vadd.f32 %v3009, %v2947
    %v3011 = vadd.f32 %v3010, %v2948
    %v3012 = vadd.f32 %v3011, %v2949
    %v3013 = vadd.f32 %v3012, %v2950
    %v3014 = vadd.f32 %v3013, %v2951
    %v3015 = vadd.f32 %v3014, %v2952
    %v3016 = vadd.f32 %v3015, %v2953
    %v3017 = vadd.f32 %v3016, %v2954
    %v3018 = vadd.f32 %v3017, %v2955
    %v3019 = vadd.f32 %v3018, %v2956
    %v3020 = vadd.f32 %v3019, %v2957
    %v3021 = vadd.f32 %v3020, %v2958
    %v3022 = vadd.f32 %v3021, %v2959
    %v3023 = vadd.f32 %v3022, %v2960
    %v3024 = vadd.f32 %v3023, %v2961
    %v3025 = vadd.f32 %v3024, %v2962
    %v3026 = vadd.f32 %v3025, %v2963
    %v3027 = vadd.f32 %v3026, %v2964
    %v3028 = vadd.f32 %v3027, %v2965
    %v3029 = vadd.f32 %v3028, %v2966
    %v3030 = vadd.f32 %v3029, %v2967
    %v3031 = vadd.f32 %v3030, %v2968
    %v3032 = vadd.f32 %v3031, %v2969
    %v3033 = vadd.f32 %v3032, %v2970
    %v3034 = vadd.f32 %v3033, %v2971
    %v3035 = vadd.f32 %v3034, %v2972
    %v3036 = vadd.f32 %v3035, %v2973
    %v3037 = vadd.f32 %v3036, %v2974
    %v3038 = vadd.f32 %v3037, %v2975
    %v3039 = vadd.f32 %v3038, %v2976
    %v3040 = vadd.f32 %v3039, %v2977
    %v3041 = vadd.f32 %v3040, %v2978
    %v3042 = vadd.f32 %v3041, %v2979
    %v3043 = vadd.f32 %v3042, %v2980
    %v3044 = vadd.f32 %v3043, %v2981
    %v3045 = vadd.f32 %v3044, %v2982
    %v3046 = vadd.f32 %v3045, %v2983
    %v3047 = vadd.f32 %v3046, %v2984
    %v3048 = vadd.f32 %v3047, %v2985
    %v3049 = vadd.f32 %v3048, %v2986
    %v3050 = vadd.f32 %v3049, %v2987
    %v3051 = vadd.f32 %v3050, %v2988
    %v3052 = vadd.f32 %v3051, %v2989
    %v3053 = vadd.f32 %v2925, %v3052
    %3054 = vst [vmem:[#allocation7] sm:$0xff] %v3053
    %v3055 = vld [vmem:[%s324] sm:$0xff]
    %v3056 = vadd.f32 %v2796, %v2861
    %v3057 = vadd.f32 %v2797, %v2862
    %v3058 = vadd.f32 %v2798, %v2863
    %v3059 = vadd.f32 %v2799, %v2864
    %v3060 = vadd.f32 %v2800, %v2865
    %v3061 = vadd.f32 %v2801, %v2866
    %v3062 = vadd.f32 %v2802, %v2867
    %v3063 = vadd.f32 %v2803, %v2868
    %v3064 = vadd.f32 %v2804, %v2869
    %v3065 = vadd.f32 %v2805, %v2870
    %v3066 = vadd.f32 %v2806, %v2871
    %v3067 = vadd.f32 %v2807, %v2872
    %v3068 = vadd.f32 %v2808, %v2873
    %v3069 = vadd.f32 %v2809, %v2874
    %v3070 = vadd.f32 %v2810, %v2875
    %v3071 = vadd.f32 %v2811, %v2876
    %v3072 = vadd.f32 %v2812, %v2877
    %v3073 = vadd.f32 %v2813, %v2878
    %v3074 = vadd.f32 %v2814, %v2879
    %v3075 = vadd.f32 %v2815, %v2880
    %v3076 = vadd.f32 %v2816, %v2881
    %v3077 = vadd.f32 %v2817, %v2882
    %v3078 = vadd.f32 %v2818, %v2883
    %v3079 = vadd.f32 %v2819, %v2884
    %v3080 = vadd.f32 %v2820, %v2885
    %v3081 = vadd.f32 %v2821, %v2886
    %v3082 = vadd.f32 %v2822, %v2887
    %v3083 = vadd.f32 %v2823, %v2888
    %v3084 = vadd.f32 %v2824, %v2889
    %v3085 = vadd.f32 %v2825, %v2890
    %v3086 = vadd.f32 %v2826, %v2891
    %v3087 = vadd.f32 %v2827, %v2892
    %v3088 = vadd.f32 %v2828, %v2893
    %v3089 = vadd.f32 %v2829, %v2894
    %v3090 = vadd.f32 %v2830, %v2895
    %v3091 = vadd.f32 %v2831, %v2896
    %v3092 = vadd.f32 %v2832, %v2897
    %v3093 = vadd.f32 %v2833, %v2898
    %v3094 = vadd.f32 %v2834, %v2899
    %v3095 = vadd.f32 %v2835, %v2900
    %v3096 = vadd.f32 %v2836, %v2901
    %v3097 = vadd.f32 %v2837, %v2902
    %v3098 = vadd.f32 %v2838, %v2903
    %v3099 = vadd.f32 %v2839, %v2904
    %v3100 = vadd.f32 %v2840, %v2905
    %v3101 = vadd.f32 %v2841, %v2906
    %v3102 = vadd.f32 %v2842, %v2907
    %v3103 = vadd.f32 %v2843, %v2908
    %v3104 = vadd.f32 %v2844, %v2909
    %v3105 = vadd.f32 %v2845, %v2910
    %v3106 = vadd.f32 %v2846, %v2911
    %v3107 = vadd.f32 %v2847, %v2912
    %v3108 = vadd.f32 %v2848, %v2913
    %v3109 = vadd.f32 %v2849, %v2914
    %v3110 = vadd.f32 %v2850, %v2915
    %v3111 = vadd.f32 %v2851, %v2916
    %v3112 = vadd.f32 %v2852, %v2917
    %v3113 = vadd.f32 %v2853, %v2918
    %v3114 = vadd.f32 %v2854, %v2919
    %v3115 = vadd.f32 %v2855, %v2920
    %v3116 = vadd.f32 %v2856, %v2921
    %v3117 = vadd.f32 %v2857, %v2922
    %v3118 = vadd.f32 %v2858, %v2923
    %v3119 = vadd.f32 %v2859, %v2924
    %v3120 = vadd.f32 %v3056, %v3057
    %v3121 = vadd.f32 %v3120, %v3058
    %v3122 = vadd.f32 %v3121, %v3059
    %v3123 = vadd.f32 %v3122, %v3060
    %v3124 = vadd.f32 %v3123, %v3061
    %v3125 = vadd.f32 %v3124, %v3062
    %v3126 = vadd.f32 %v3125, %v3063
    %v3127 = vadd.f32 %v3126, %v3064
    %v3128 = vadd.f32 %v3127, %v3065
    %v3129 = vadd.f32 %v3128, %v3066
    %v3130 = vadd.f32 %v3129, %v3067
    %v3131 = vadd.f32 %v3130, %v3068
    %v3132 = vadd.f32 %v3131, %v3069
    %v3133 = vadd.f32 %v3132, %v3070
    %v3134 = vadd.f32 %v3133, %v3071
    %v3135 = vadd.f32 %v3134, %v3072
    %v3136 = vadd.f32 %v3135, %v3073
    %v3137 = vadd.f32 %v3136, %v3074
    %v3138 = vadd.f32 %v3137, %v3075
    %v3139 = vadd.f32 %v3138, %v3076
    %v3140 = vadd.f32 %v3139, %v3077
    %v3141 = vadd.f32 %v3140, %v3078
    %v3142 = vadd.f32 %v3141, %v3079
    %v3143 = vadd.f32 %v3142, %v3080
    %v3144 = vadd.f32 %v3143, %v3081
    %v3145 = vadd.f32 %v3144, %v3082
    %v3146 = vadd.f32 %v3145, %v3083
    %v3147 = vadd.f32 %v3146, %v3084
    %v3148 = vadd.f32 %v3147, %v3085
    %v3149 = vadd.f32 %v3148, %v3086
    %v3150 = vadd.f32 %v3149, %v3087
    %v3151 = vadd.f32 %v3150, %v3088
    %v3152 = vadd.f32 %v3151, %v3089
    %v3153 = vadd.f32 %v3152, %v3090
    %v3154 = vadd.f32 %v3153, %v3091
    %v3155 = vadd.f32 %v3154, %v3092
    %v3156 = vadd.f32 %v3155, %v3093
    %v3157 = vadd.f32 %v3156, %v3094
    %v3158 = vadd.f32 %v3157, %v3095
    %v3159 = vadd.f32 %v3158, %v3096
    %v3160 = vadd.f32 %v3159, %v3097
    %v3161 = vadd.f32 %v3160, %v3098
    %v3162 = vadd.f32 %v3161, %v3099
    %v3163 = vadd.f32 %v3162, %v3100
    %v3164 = vadd.f32 %v3163, %v3101
    %v3165 = vadd.f32 %v3164, %v3102
    %v3166 = vadd.f32 %v3165, %v3103
    %v3167 = vadd.f32 %v3166, %v3104
    %v3168 = vadd.f32 %v3167, %v3105
    %v3169 = vadd.f32 %v3168, %v3106
    %v3170 = vadd.f32 %v3169, %v3107
    %v3171 = vadd.f32 %v3170, %v3108
    %v3172 = vadd.f32 %v3171, %v3109
    %v3173 = vadd.f32 %v3172, %v3110
    %v3174 = vadd.f32 %v3173, %v3111
    %v3175 = vadd.f32 %v3174, %v3112
    %v3176 = vadd.f32 %v3175, %v3113
    %v3177 = vadd.f32 %v3176, %v3114
    %v3178 = vadd.f32 %v3177, %v3115
    %v3179 = vadd.f32 %v3178, %v3116
    %v3180 = vadd.f32 %v3179, %v3117
    %v3181 = vadd.f32 %v3180, %v3118
    %v3182 = vadd.f32 %v3181, %v3119
    %v3183 = vadd.f32 %v3055, %v3182
    %3184 = vst [vmem:[%s324] sm:$0xff] %v3183
    // Predicated region
    $region22: #{tpu_custom_call.1} parent=1 // pred_check
      _
    $region23: #{tpu_custom_call.1} parent=1 // pred_check_branch
      %3186 = sbr.rel (0) target = $region25
    $region24: #{tpu_custom_call.1} parent=1 // pred_region
      %s3188 = ssub.s32 256, 256
      %3189 = vsyncadd [#allocation4], %s3188
      %s3190 = sshll.u32 [#allocation7], 4
      %s3191 = int_to_ptr.vmem [resolvable:$true] %s3190
      %3196 = dma.vmem_to_hbm [thread:$0]  %s3191, 256, %s2, [#allocation4], 128, 128, 8
    $region25: #{tpu_custom_call.1} parent=1 // pred_fallthru
      _
    // Predicated region
    $region26: #{tpu_custom_call.1} parent=1 // pred_check
      _
    $region27: #{tpu_custom_call.1} parent=1 // pred_check_branch
      %3198 = sbr.rel (0) target = $region29
    $region28: #{tpu_custom_call.1} parent=1 // pred_region
      %3199 = dma.done [#allocation4], 256
    $region29: #{tpu_custom_call.1} parent=1 // pred_fallthru
      _
    %3200 = vsyncpa [#allocation3], 1
    %3201 = vsyncpa [#allocation6], 1
    %3202 = vsyncpa [#allocation4], 1

</llo_original>
